<compile_context>
chip_gen: v7x
topology: tpu7x:2x2x1
jax: 0.10.0
libtpu: 0.0.40
codegen_flags: <defaults>
</compile_context>

<pallas_src>
import jax
import jax.numpy as jnp
from jax.experimental import pallas as pl
from jax.experimental.pallas import tpu as pltpu

# Small synthetic config
B, T, C, H = 2, 8, 32, 4          # batch, seq (n_ctx), n_embd, n_head
D = C // H                        # head dim
INNER = 4 * C                     # MLP inner dim (config.n_inner is None -> 4*n_embd)
LN_EPS = 1e-5
MASKED_BIAS = -10000.0


def _layer_norm(x, gamma, beta):
    mean = jnp.mean(x, axis=-1, keepdims=True)
    var = jnp.mean((x - mean) ** 2, axis=-1, keepdims=True)
    return (x - mean) * jax.lax.rsqrt(var + LN_EPS) * gamma + beta


def _gelu_new(x):
    # GPT-2 "gelu_new" (tanh approximation)
    return 0.5 * x * (1.0 + jnp.tanh(
        jnp.sqrt(2.0 / jnp.pi) * (x + 0.044715 * (x ** 3))))


def block_kernel(x_ref, ln1_g, ln1_b, w_attn, b_attn, w_aproj, b_aproj,
                 ln2_g, ln2_b, w_fc, b_fc, w_mproj, b_mproj, o_ref):
    # One batch element (full sequence) per grid step; batch dim squeezed by BlockSpec.
    x = x_ref[...]                                                   # (T, C) f32

    # ---- ln_1 (f32 statistics) ----
    h = _layer_norm(x, ln1_g[...], ln1_b[...])

    # ---- fused qkv projection (Conv1D): bf16 operands, f32 accumulation ----
    qkv = jnp.dot(h.astype(jnp.bfloat16), w_attn[...],
                  preferred_element_type=jnp.float32) + b_attn[...]  # (T, 3C) f32

    # split_heads once: (T, C) -> (H, T, D); transpose done in f32, cast after.
    def split_heads(xs):
        return jnp.transpose(xs.reshape(T, H, D), (1, 0, 2))
    q = split_heads(qkv[:, 0:C]).astype(jnp.bfloat16)                # (H, T, D)
    k = split_heads(qkv[:, C:2 * C]).astype(jnp.bfloat16)
    v = split_heads(qkv[:, 2 * C:3 * C]).astype(jnp.bfloat16)

    # Scores for all heads in one batched einsum; scale=False -> no 1/sqrt(D).
    s = jnp.einsum('htd,hsd->hts', q, k,
                   preferred_element_type=jnp.float32)               # (H, T, T) f32

    # Causal (tril) mask with a SCALAR masked_bias fill (no materialized fill tensor).
    row = jax.lax.broadcasted_iota(jnp.int32, (T, T), 0)
    col = jax.lax.broadcasted_iota(jnp.int32, (T, T), 1)
    s = jnp.where((row >= col)[None, :, :], s, jnp.float32(MASKED_BIAS))

    # Stable softmax in f32; EUP approximate reciprocal for the denominator.
    s = s - jnp.max(s, axis=-1, keepdims=True)
    p = jnp.exp(s)
    p = p * pl.reciprocal(jnp.sum(p, axis=-1, keepdims=True), approx=True)
    # attn_dropout: identity in eval mode

    ctx = jnp.einsum('hts,hsd->htd', p.astype(jnp.bfloat16), v,
                     preferred_element_type=jnp.float32)             # (H, T, D) f32

    # merge_heads once, then ONE K=C c_proj matmul (no per-head K=D accumulation).
    merged = jnp.transpose(ctx, (1, 0, 2)).reshape(T, C)             # (T, C) f32
    a = jnp.dot(merged.astype(jnp.bfloat16), w_aproj[...],
                preferred_element_type=jnp.float32) + b_aproj[...]
    # resid_dropout: identity in eval mode

    # ---- first residual (f32) ----
    hidden = x + a

    # ---- ln_2 + MLP (bf16 matmul operands, f32 elementwise) ----
    m = _layer_norm(hidden, ln2_g[...], ln2_b[...])
    m = jnp.dot(m.astype(jnp.bfloat16), w_fc[...],
                preferred_element_type=jnp.float32) + b_fc[...]
    m = _gelu_new(m)
    m = jnp.dot(m.astype(jnp.bfloat16), w_mproj[...],
                preferred_element_type=jnp.float32) + b_mproj[...]
    # mlp dropout: identity in eval mode

    # ---- second residual ----
    o_ref[...] = (hidden + m).astype(o_ref.dtype)


def gpt2_block(x, params):
    vec = lambda p: p.reshape(1, -1)        # keep 1-D params 2-D for VMEM
    bf = lambda w: w.astype(jnp.bfloat16)   # bf16 weights: MXU-native, half the DMA

    args = (
        x,
        vec(params["ln1_g"]), vec(params["ln1_b"]),
        bf(params["w_attn"]), vec(params["b_attn"]),
        bf(params["w_aproj"]), vec(params["b_aproj"]),
        vec(params["ln2_g"]), vec(params["ln2_b"]),
        bf(params["w_fc"]), vec(params["b_fc"]),
        bf(params["w_mproj"]), vec(params["b_mproj"]),
    )

    def build(single_buffer_weights):
        def const_spec(shape):
            kw = {}
            if single_buffer_weights:
                # Constant-index weights/biases: one VMEM copy, no double-buffering.
                kw["pipeline_mode"] = pl.Buffered(1)
            return pl.BlockSpec(shape, lambda b, _n=len(shape): (0,) * _n, **kw)

        # Activation / output tiles: one sequence per step, batch dim squeezed.
        io_spec = pl.BlockSpec((None, T, C), lambda b: (b, 0, 0))

        in_specs = [
            io_spec,                                        # hidden_states tile
            const_spec((1, C)), const_spec((1, C)),         # ln_1 gamma / beta
            const_spec((C, 3 * C)), const_spec((1, 3 * C)), # c_attn W / b
            const_spec((C, C)), const_spec((1, C)),         # attn c_proj W / b
            const_spec((1, C)), const_spec((1, C)),         # ln_2 gamma / beta
            const_spec((C, INNER)), const_spec((1, INNER)), # mlp c_fc W / b
            const_spec((INNER, C)), const_spec((1, C)),     # mlp c_proj W / b
        ]

        return pl.pallas_call(
            block_kernel,
            out_shape=jax.ShapeDtypeStruct((B, T, C), jnp.float32),
            grid_spec=pltpu.PrefetchScalarGridSpec(
                num_scalar_prefetch=0,
                grid=(B,),                  # pipelined row tiles (one sequence each)
                in_specs=in_specs,
                out_specs=io_spec,
            ),
            compiler_params=pltpu.CompilerParams(
                dimension_semantics=("parallel",),      # megacore split on v7x
                vmem_limit_bytes=48 * 1024 * 1024,      # headroom under v7x's 64 MiB
            ),
        )

    try:
        return jax.block_until_ready(build(True)(*args))
    except Exception:
        # Fallback if this jax build rejects pipeline_mode=pl.Buffered(1) on a
        # pallas_call BlockSpec: identical semantics, default buffering.
        return jax.block_until_ready(build(False)(*args))


def reference_block(x, params):
    """Pure-JAX f32 reference mirroring the PyTorch Block forward (eval mode)."""
    def ln(v, g, b):
        mu = jnp.mean(v, axis=-1, keepdims=True)
        var = jnp.mean((v - mu) ** 2, axis=-1, keepdims=True)
        return (v - mu) / jnp.sqrt(var + LN_EPS) * g + b

    h = ln(x, params["ln1_g"], params["ln1_b"])
    qkv = h @ params["w_attn"] + params["b_attn"]
    q, k, v = jnp.split(qkv, 3, axis=-1)
    q = q.reshape(B, T, H, D).transpose(0, 2, 1, 3)
    k = k.reshape(B, T, H, D).transpose(0, 2, 1, 3)
    v = v.reshape(B, T, H, D).transpose(0, 2, 1, 3)
    w = jnp.einsum("bhqd,bhkd->bhqk", q, k)
    causal = jnp.tril(jnp.ones((T, T), bool))
    w = jnp.where(causal[None, None], w, MASKED_BIAS)
    w = jax.nn.softmax(w, axis=-1)
    a = jnp.einsum("bhqk,bhkd->bhqd", w, v).transpose(0, 2, 1, 3).reshape(B, T, C)
    a = a @ params["w_aproj"] + params["b_aproj"]
    hidden = x + a
    m = ln(hidden, params["ln2_g"], params["ln2_b"])
    m = m @ params["w_fc"] + params["b_fc"]
    m = 0.5 * m * (1.0 + jnp.tanh(jnp.sqrt(2.0 / jnp.pi) * (m + 0.044715 * m ** 3)))
    m = m @ params["w_mproj"] + params["b_mproj"]
    return hidden + m


if __name__ == "__main__":
    key = jax.random.PRNGKey(0)
    keys = jax.random.split(key, 5)
    # Deterministic init matching the module: Conv1D weights ~ N(0, 0.02), biases = 0,
    # LayerNorm gamma = 1, beta = 0.
    params = {
        "ln1_g": jnp.ones((C,), jnp.float32),
        "ln1_b": jnp.zeros((C,), jnp.float32),
        "w_attn": 0.02 * jax.random.normal(keys[0], (C, 3 * C), jnp.float32),
        "b_attn": jnp.zeros((3 * C,), jnp.float32),
        "w_aproj": 0.02 * jax.random.normal(keys[1], (C, C), jnp.float32),
        "b_aproj": jnp.zeros((C,), jnp.float32),
        "ln2_g": jnp.ones((C,), jnp.float32),
        "ln2_b": jnp.zeros((C,), jnp.float32),
        "w_fc": 0.02 * jax.random.normal(keys[2], (C, INNER), jnp.float32),
        "b_fc": jnp.zeros((INNER,), jnp.float32),
        "w_mproj": 0.02 * jax.random.normal(keys[3], (INNER, C), jnp.float32),
        "b_mproj": jnp.zeros((C,), jnp.float32),
    }
    x = jax.random.normal(keys[4], (B, T, C), jnp.float32)

    out = gpt2_block(x, params)
    ref = reference_block(x, params)

    assert out.shape == (B, T, C), out.shape
    # Tolerance 5e-3 covers bf16 matmul operands (f32 accumulation) and the EUP
    # approximate reciprocal in the softmax; LN stats / softmax stats / residuals
    # are kept in f32 so the error stays well below this.
    max_err = float(jnp.max(jnp.abs(out - ref)))
    assert jnp.allclose(out, ref, atol=5e-3, rtol=5e-3), max_err
    # TODO(synk): dropout / use_cache("present") / layer_past / attention_mask /
    # cross- & knl-attention branches are not exercised by the default forward
    # (eval mode, no encoder inputs) and are omitted.
    print("KERNEL_OK")
</pallas_src>

<mosaic_0001>
module attributes {stable_mosaic.version = 11 : i64} {
  func.func @block_kernel(%arg0: i32, %arg1: memref<1x8x32xf32, #tpu.memory_space<vmem>>, %arg2: memref<1x32xf32, #tpu.memory_space<vmem>>, %arg3: memref<1x32xf32, #tpu.memory_space<vmem>>, %arg4: memref<32x96xbf16, #tpu.memory_space<vmem>>, %arg5: memref<1x96xf32, #tpu.memory_space<vmem>>, %arg6: memref<32x32xbf16, #tpu.memory_space<vmem>>, %arg7: memref<1x32xf32, #tpu.memory_space<vmem>>, %arg8: memref<1x32xf32, #tpu.memory_space<vmem>>, %arg9: memref<1x32xf32, #tpu.memory_space<vmem>>, %arg10: memref<32x128xbf16, #tpu.memory_space<vmem>>, %arg11: memref<1x128xf32, #tpu.memory_space<vmem>>, %arg12: memref<128x32xbf16, #tpu.memory_space<vmem>>, %arg13: memref<1x32xf32, #tpu.memory_space<vmem>>, %arg14: memref<1x8x32xf32, #tpu.memory_space<vmem>>) attributes {dimension_semantics = [#tpu.dimension_semantics<parallel>], iteration_bounds = array<i64: 2>, scalar_prefetch = 0 : i64, scratch_operands = 0 : i64, tpu.core_type = #tpu.core_type<tc>, window_params = [{transform_indices = @transform_0, window_bounds = array<i64: 1, 8, 32>}, {pipeline_mode = #tpu.pipeline_mode<synchronous>, transform_indices = @transform_1, window_bounds = array<i64: 1, 32>}, {pipeline_mode = #tpu.pipeline_mode<synchronous>, transform_indices = @transform_2, window_bounds = array<i64: 1, 32>}, {pipeline_mode = #tpu.pipeline_mode<synchronous>, transform_indices = @transform_3, window_bounds = array<i64: 32, 96>}, {pipeline_mode = #tpu.pipeline_mode<synchronous>, transform_indices = @transform_4, window_bounds = array<i64: 1, 96>}, {pipeline_mode = #tpu.pipeline_mode<synchronous>, transform_indices = @transform_5, window_bounds = array<i64: 32, 32>}, {pipeline_mode = #tpu.pipeline_mode<synchronous>, transform_indices = @transform_6, window_bounds = array<i64: 1, 32>}, {pipeline_mode = #tpu.pipeline_mode<synchronous>, transform_indices = @transform_7, window_bounds = array<i64: 1, 32>}, {pipeline_mode = #tpu.pipeline_mode<synchronous>, transform_indices = @transform_8, window_bounds = array<i64: 1, 32>}, {pipeline_mode = #tpu.pipeline_mode<synchronous>, transform_indices = @transform_9, window_bounds = array<i64: 32, 128>}, {pipeline_mode = #tpu.pipeline_mode<synchronous>, transform_indices = @transform_10, window_bounds = array<i64: 1, 128>}, {pipeline_mode = #tpu.pipeline_mode<synchronous>, transform_indices = @transform_11, window_bounds = array<i64: 128, 32>}, {pipeline_mode = #tpu.pipeline_mode<synchronous>, transform_indices = @transform_12, window_bounds = array<i64: 1, 32>}, {transform_indices = @transform_13, window_bounds = array<i64: 1, 8, 32>}]} {
    %c0 = arith.constant 0 : index
    %c0_0 = arith.constant 0 : index
    %c0_1 = arith.constant 0 : index
    %0 = vector.load %arg1[%c0, %c0_0, %c0_1] : memref<1x8x32xf32, #tpu.memory_space<vmem>>, vector<1x8x32xf32>
    %1 = vector.shape_cast %0 : vector<1x8x32xf32> to vector<8x32xf32>
    %c0_2 = arith.constant 0 : index
    %c0_3 = arith.constant 0 : index
    %2 = vector.load %arg2[%c0_2, %c0_3] : memref<1x32xf32, #tpu.memory_space<vmem>>, vector<1x32xf32>
    %c0_4 = arith.constant 0 : index
    %c0_5 = arith.constant 0 : index
    %3 = vector.load %arg3[%c0_4, %c0_5] : memref<1x32xf32, #tpu.memory_space<vmem>>, vector<1x32xf32>
    %cst = arith.constant dense<0.000000e+00> : vector<8xf32>
    %4 = vector.multi_reduction <add>, %1, %cst [1] : vector<8x32xf32> to vector<8xf32>
    %5 = vector.shape_cast %4 : vector<8xf32> to vector<8x1xf32>
    %cst_6 = arith.constant 3.200000e+01 : f32
    %6 = vector.broadcast %cst_6 : f32 to vector<8x1xf32>
    %7 = arith.divf %5, %6 : vector<8x1xf32>
    %8 = vector.broadcast %7 : vector<8x1xf32> to vector<8x32xf32>
    %9 = arith.subf %1, %8 : vector<8x32xf32>
    %10 = arith.mulf %9, %9 : vector<8x32xf32>
    %cst_7 = arith.constant dense<0.000000e+00> : vector<8xf32>
    %11 = vector.multi_reduction <add>, %10, %cst_7 [1] : vector<8x32xf32> to vector<8xf32>
    %12 = vector.shape_cast %11 : vector<8xf32> to vector<8x1xf32>
    %cst_8 = arith.constant 3.200000e+01 : f32
    %13 = vector.broadcast %cst_8 : f32 to vector<8x1xf32>
    %14 = arith.divf %12, %13 : vector<8x1xf32>
    %15 = vector.broadcast %7 : vector<8x1xf32> to vector<8x32xf32>
    %16 = arith.subf %1, %15 : vector<8x32xf32>
    %cst_9 = arith.constant 9.99999974E-6 : f32
    %17 = vector.broadcast %cst_9 : f32 to vector<8x1xf32>
    %18 = arith.addf %14, %17 : vector<8x1xf32>
    %19 = math.rsqrt %18 : vector<8x1xf32>
    %20 = vector.broadcast %19 : vector<8x1xf32> to vector<8x32xf32>
    %21 = arith.mulf %16, %20 : vector<8x32xf32>
    %22 = vector.broadcast %2 : vector<1x32xf32> to vector<8x32xf32>
    %23 = arith.mulf %21, %22 : vector<8x32xf32>
    %24 = vector.broadcast %3 : vector<1x32xf32> to vector<8x32xf32>
    %25 = arith.addf %23, %24 : vector<8x32xf32>
    %26 = arith.truncf %25 : vector<8x32xf32> to vector<8x32xbf16>
    %c0_10 = arith.constant 0 : index
    %c0_11 = arith.constant 0 : index
    %27 = vector.load %arg4[%c0_10, %c0_11] : memref<32x96xbf16, #tpu.memory_space<vmem>>, vector<32x96xbf16>
    %cst_12 = arith.constant dense<0.000000e+00> : vector<8x96xf32>
    %28 = tpu.matmul %26, %27, %cst_12 {dimension_numbers = #tpu.dot_dimension_numbers<[1], [0], [0], [1], [0, 0, 1, 1], [], []>} : vector<8x32xbf16>, vector<32x96xbf16>, vector<8x96xf32> -> vector<8x96xf32>
    %c0_13 = arith.constant 0 : index
    %c0_14 = arith.constant 0 : index
    %29 = vector.load %arg5[%c0_13, %c0_14] : memref<1x96xf32, #tpu.memory_space<vmem>>, vector<1x96xf32>
    %30 = vector.broadcast %29 : vector<1x96xf32> to vector<8x96xf32>
    %31 = arith.addf %28, %30 : vector<8x96xf32>
    %32 = vector.extract_strided_slice %31 {offsets = [0, 0], sizes = [8, 32], strides = [1, 1]} : vector<8x96xf32> to vector<8x32xf32>
    %33 = vector.shape_cast %32 : vector<8x32xf32> to vector<8x4x8xf32>
    %34 = tpu.transpose %33, [1, 0, 2] : vector<8x4x8xf32> -> vector<4x8x8xf32>
    %35 = arith.truncf %34 : vector<4x8x8xf32> to vector<4x8x8xbf16>
    %36 = vector.extract_strided_slice %31 {offsets = [0, 32], sizes = [8, 32], strides = [1, 1]} : vector<8x96xf32> to vector<8x32xf32>
    %37 = vector.shape_cast %36 : vector<8x32xf32> to vector<8x4x8xf32>
    %38 = tpu.transpose %37, [1, 0, 2] : vector<8x4x8xf32> -> vector<4x8x8xf32>
    %39 = arith.truncf %38 : vector<4x8x8xf32> to vector<4x8x8xbf16>
    %40 = vector.extract_strided_slice %31 {offsets = [0, 64], sizes = [8, 32], strides = [1, 1]} : vector<8x96xf32> to vector<8x32xf32>
    %41 = vector.shape_cast %40 : vector<8x32xf32> to vector<8x4x8xf32>
    %42 = tpu.transpose %41, [1, 0, 2] : vector<8x4x8xf32> -> vector<4x8x8xf32>
    %43 = arith.truncf %42 : vector<4x8x8xf32> to vector<4x8x8xbf16>
    "tpu.trace_start"() <{level = 10 : i32, message = "htd,hsd->hts"}> : () -> ()
    %cst_15 = arith.constant dense<0.000000e+00> : vector<4x8x8xf32>
    %44 = tpu.matmul %35, %39, %cst_15 {dimension_numbers = #tpu.dot_dimension_numbers<[2], [2], [1], [1], [0, 0, 0, 1, 1, 1], [0], [0]>} : vector<4x8x8xbf16>, vector<4x8x8xbf16>, vector<4x8x8xf32> -> vector<4x8x8xf32>
    "tpu.trace_stop"() : () -> ()
    %45 = tpu.iota {dimensions = array<i32: 0>} : vector<8x8xi32>
    %46 = tpu.iota {dimensions = array<i32: 1>} : vector<8x8xi32>
    %47 = arith.cmpi sge, %45, %46 : vector<8x8xi32>
    %48 = vector.shape_cast %47 : vector<8x8xi1> to vector<1x8x8xi1>
    %cst_16 = arith.constant -1.000000e+04 : f32
    %49 = vector.shape_cast %48 : vector<1x8x8xi1> to vector<1x8x8xi1>
    %50 = vector.broadcast %49 : vector<1x8x8xi1> to vector<4x8x8xi1>
    %51 = vector.broadcast %cst_16 : f32 to vector<4x8x8xf32>
    %52 = arith.select %50, %44, %51 : vector<4x8x8xi1>, vector<4x8x8xf32>
    %cst_17 = arith.constant dense<0xFF800000> : vector<4x8xf32>
    %53 = vector.multi_reduction <maximumf>, %52, %cst_17 [2] : vector<4x8x8xf32> to vector<4x8xf32>
    %54 = vector.shape_cast %53 : vector<4x8xf32> to vector<4x8x1xf32>
    %55 = vector.broadcast %54 : vector<4x8x1xf32> to vector<4x8x8xf32>
    %56 = arith.subf %52, %55 : vector<4x8x8xf32>
    %57 = math.exp %56 : vector<4x8x8xf32>
    %cst_18 = arith.constant dense<0.000000e+00> : vector<4x8xf32>
    %58 = vector.multi_reduction <add>, %57, %cst_18 [2] : vector<4x8x8xf32> to vector<4x8xf32>
    %59 = vector.shape_cast %58 : vector<4x8xf32> to vector<4x8x1xf32>
    %60 = tpu.reciprocal %59 {approx = true} : vector<4x8x1xf32> -> vector<4x8x1xf32>
    %61 = vector.broadcast %60 : vector<4x8x1xf32> to vector<4x8x8xf32>
    %62 = arith.mulf %57, %61 : vector<4x8x8xf32>
    %63 = arith.truncf %62 : vector<4x8x8xf32> to vector<4x8x8xbf16>
    "tpu.trace_start"() <{level = 10 : i32, message = "hts,hsd->htd"}> : () -> ()
    %cst_19 = arith.constant dense<0.000000e+00> : vector<4x8x8xf32>
    %64 = tpu.matmul %63, %43, %cst_19 {dimension_numbers = #tpu.dot_dimension_numbers<[2], [1], [1], [2], [0, 0, 0, 1, 1, 2], [0], [0]>} : vector<4x8x8xbf16>, vector<4x8x8xbf16>, vector<4x8x8xf32> -> vector<4x8x8xf32>
    "tpu.trace_stop"() : () -> ()
    %65 = tpu.transpose %64, [1, 0, 2] : vector<4x8x8xf32> -> vector<8x4x8xf32>
    %66 = vector.shape_cast %65 : vector<8x4x8xf32> to vector<8x32xf32>
    %67 = arith.truncf %66 : vector<8x32xf32> to vector<8x32xbf16>
    %c0_20 = arith.constant 0 : index
    %c0_21 = arith.constant 0 : index
    %68 = vector.load %arg6[%c0_20, %c0_21] : memref<32x32xbf16, #tpu.memory_space<vmem>>, vector<32x32xbf16>
    %cst_22 = arith.constant dense<0.000000e+00> : vector<8x32xf32>
    %69 = tpu.matmul %67, %68, %cst_22 {dimension_numbers = #tpu.dot_dimension_numbers<[1], [0], [0], [1], [0, 0, 1, 1], [], []>} : vector<8x32xbf16>, vector<32x32xbf16>, vector<8x32xf32> -> vector<8x32xf32>
    %c0_23 = arith.constant 0 : index
    %c0_24 = arith.constant 0 : index
    %70 = vector.load %arg7[%c0_23, %c0_24] : memref<1x32xf32, #tpu.memory_space<vmem>>, vector<1x32xf32>
    %71 = vector.broadcast %70 : vector<1x32xf32> to vector<8x32xf32>
    %72 = arith.addf %69, %71 : vector<8x32xf32>
    %73 = arith.addf %1, %72 : vector<8x32xf32>
    %c0_25 = arith.constant 0 : index
    %c0_26 = arith.constant 0 : index
    %74 = vector.load %arg8[%c0_25, %c0_26] : memref<1x32xf32, #tpu.memory_space<vmem>>, vector<1x32xf32>
    %c0_27 = arith.constant 0 : index
    %c0_28 = arith.constant 0 : index
    %75 = vector.load %arg9[%c0_27, %c0_28] : memref<1x32xf32, #tpu.memory_space<vmem>>, vector<1x32xf32>
    %cst_29 = arith.constant dense<0.000000e+00> : vector<8xf32>
    %76 = vector.multi_reduction <add>, %73, %cst_29 [1] : vector<8x32xf32> to vector<8xf32>
    %77 = vector.shape_cast %76 : vector<8xf32> to vector<8x1xf32>
    %cst_30 = arith.constant 3.200000e+01 : f32
    %78 = vector.broadcast %cst_30 : f32 to vector<8x1xf32>
    %79 = arith.divf %77, %78 : vector<8x1xf32>
    %80 = vector.broadcast %79 : vector<8x1xf32> to vector<8x32xf32>
    %81 = arith.subf %73, %80 : vector<8x32xf32>
    %82 = arith.mulf %81, %81 : vector<8x32xf32>
    %cst_31 = arith.constant dense<0.000000e+00> : vector<8xf32>
    %83 = vector.multi_reduction <add>, %82, %cst_31 [1] : vector<8x32xf32> to vector<8xf32>
    %84 = vector.shape_cast %83 : vector<8xf32> to vector<8x1xf32>
    %cst_32 = arith.constant 3.200000e+01 : f32
    %85 = vector.broadcast %cst_32 : f32 to vector<8x1xf32>
    %86 = arith.divf %84, %85 : vector<8x1xf32>
    %87 = vector.broadcast %79 : vector<8x1xf32> to vector<8x32xf32>
    %88 = arith.subf %73, %87 : vector<8x32xf32>
    %cst_33 = arith.constant 9.99999974E-6 : f32
    %89 = vector.broadcast %cst_33 : f32 to vector<8x1xf32>
    %90 = arith.addf %86, %89 : vector<8x1xf32>
    %91 = math.rsqrt %90 : vector<8x1xf32>
    %92 = vector.broadcast %91 : vector<8x1xf32> to vector<8x32xf32>
    %93 = arith.mulf %88, %92 : vector<8x32xf32>
    %94 = vector.broadcast %74 : vector<1x32xf32> to vector<8x32xf32>
    %95 = arith.mulf %93, %94 : vector<8x32xf32>
    %96 = vector.broadcast %75 : vector<1x32xf32> to vector<8x32xf32>
    %97 = arith.addf %95, %96 : vector<8x32xf32>
    %98 = arith.truncf %97 : vector<8x32xf32> to vector<8x32xbf16>
    %c0_34 = arith.constant 0 : index
    %c0_35 = arith.constant 0 : index
    %99 = vector.load %arg10[%c0_34, %c0_35] : memref<32x128xbf16, #tpu.memory_space<vmem>>, vector<32x128xbf16>
    %cst_36 = arith.constant dense<0.000000e+00> : vector<8x128xf32>
    %100 = tpu.matmul %98, %99, %cst_36 {dimension_numbers = #tpu.dot_dimension_numbers<[1], [0], [0], [1], [0, 0, 1, 1], [], []>} : vector<8x32xbf16>, vector<32x128xbf16>, vector<8x128xf32> -> vector<8x128xf32>
    %c0_37 = arith.constant 0 : index
    %c0_38 = arith.constant 0 : index
    %101 = vector.load %arg11[%c0_37, %c0_38] : memref<1x128xf32, #tpu.memory_space<vmem>>, vector<1x128xf32>
    %102 = vector.broadcast %101 : vector<1x128xf32> to vector<8x128xf32>
    %103 = arith.addf %100, %102 : vector<8x128xf32>
    %cst_39 = arith.constant 5.000000e-01 : f32
    %104 = vector.broadcast %cst_39 : f32 to vector<8x128xf32>
    %105 = arith.mulf %104, %103 : vector<8x128xf32>
    %cst_40 = arith.constant 0.636619746 : f32
    %106 = math.sqrt %cst_40 : f32
    %107 = arith.mulf %103, %103 : vector<8x128xf32>
    %108 = arith.mulf %103, %107 : vector<8x128xf32>
    %cst_41 = arith.constant 4.471500e-02 : f32
    %109 = vector.broadcast %cst_41 : f32 to vector<8x128xf32>
    %110 = arith.mulf %109, %108 : vector<8x128xf32>
    %111 = arith.addf %103, %110 : vector<8x128xf32>
    %112 = vector.broadcast %106 : f32 to vector<8x128xf32>
    %113 = arith.mulf %112, %111 : vector<8x128xf32>
    %114 = math.tanh %113 : vector<8x128xf32>
    %cst_42 = arith.constant 1.000000e+00 : f32
    %115 = vector.broadcast %cst_42 : f32 to vector<8x128xf32>
    %116 = arith.addf %115, %114 : vector<8x128xf32>
    %117 = arith.mulf %105, %116 : vector<8x128xf32>
    %118 = arith.truncf %117 : vector<8x128xf32> to vector<8x128xbf16>
    %c0_43 = arith.constant 0 : index
    %c0_44 = arith.constant 0 : index
    %119 = vector.load %arg12[%c0_43, %c0_44] : memref<128x32xbf16, #tpu.memory_space<vmem>>, vector<128x32xbf16>
    %cst_45 = arith.constant dense<0.000000e+00> : vector<8x32xf32>
    %120 = tpu.matmul %118, %119, %cst_45 {dimension_numbers = #tpu.dot_dimension_numbers<[1], [0], [0], [1], [0, 0, 1, 1], [], []>} : vector<8x128xbf16>, vector<128x32xbf16>, vector<8x32xf32> -> vector<8x32xf32>
    %c0_46 = arith.constant 0 : index
    %c0_47 = arith.constant 0 : index
    %121 = vector.load %arg13[%c0_46, %c0_47] : memref<1x32xf32, #tpu.memory_space<vmem>>, vector<1x32xf32>
    %122 = vector.broadcast %121 : vector<1x32xf32> to vector<8x32xf32>
    %123 = arith.addf %120, %122 : vector<8x32xf32>
    %124 = arith.addf %73, %123 : vector<8x32xf32>
    %c0_48 = arith.constant 0 : index
    %c0_49 = arith.constant 0 : index
    %c0_50 = arith.constant 0 : index
    %125 = vector.load %arg14[%c0_48, %c0_49, %c0_50] : memref<1x8x32xf32, #tpu.memory_space<vmem>>, vector<1x8x32xf32>
    %126 = vector.shape_cast %125 : vector<1x8x32xf32> to vector<8x32xf32>
    %127 = vector.shape_cast %124 : vector<8x32xf32> to vector<1x8x32xf32>
    tpu.vector_store %arg14[%c0_48, %c0_49, %c0_50], %127 {strides = array<i32>} : memref<1x8x32xf32, #tpu.memory_space<vmem>>, vector<1x8x32xf32>,
    return
  }
  func.func @transform_0(%arg0: i32) -> (i32, i32, i32) {
    %c0_i32 = arith.constant 0 : i32
    %c0_i32_0 = arith.constant 0 : i32
    %c0_i32_1 = arith.constant 0 : i32
    return %arg0, %c0_i32, %c0_i32_0 : i32, i32, i32
  }
  func.func @transform_1(%arg0: i32) -> (i32, i32) {
    %c0_i32 = arith.constant 0 : i32
    %c0_i32_0 = arith.constant 0 : i32
    %c0_i32_1 = arith.constant 0 : i32
    return %c0_i32, %c0_i32_0 : i32, i32
  }
  func.func @transform_2(%arg0: i32) -> (i32, i32) {
    %c0_i32 = arith.constant 0 : i32
    %c0_i32_0 = arith.constant 0 : i32
    %c0_i32_1 = arith.constant 0 : i32
    return %c0_i32, %c0_i32_0 : i32, i32
  }
  func.func @transform_3(%arg0: i32) -> (i32, i32) {
    %c0_i32 = arith.constant 0 : i32
    %c0_i32_0 = arith.constant 0 : i32
    %c0_i32_1 = arith.constant 0 : i32
    return %c0_i32, %c0_i32_0 : i32, i32
  }
  func.func @transform_4(%arg0: i32) -> (i32, i32) {
    %c0_i32 = arith.constant 0 : i32
    %c0_i32_0 = arith.constant 0 : i32
    %c0_i32_1 = arith.constant 0 : i32
    return %c0_i32, %c0_i32_0 : i32, i32
  }
  func.func @transform_5(%arg0: i32) -> (i32, i32) {
    %c0_i32 = arith.constant 0 : i32
    %c0_i32_0 = arith.constant 0 : i32
    %c0_i32_1 = arith.constant 0 : i32
    return %c0_i32, %c0_i32_0 : i32, i32
  }
  func.func @transform_6(%arg0: i32) -> (i32, i32) {
    %c0_i32 = arith.constant 0 : i32
    %c0_i32_0 = arith.constant 0 : i32
    %c0_i32_1 = arith.constant 0 : i32
    return %c0_i32, %c0_i32_0 : i32, i32
  }
  func.func @transform_7(%arg0: i32) -> (i32, i32) {
    %c0_i32 = arith.constant 0 : i32
    %c0_i32_0 = arith.constant 0 : i32
    %c0_i32_1 = arith.constant 0 : i32
    return %c0_i32, %c0_i32_0 : i32, i32
  }
  func.func @transform_8(%arg0: i32) -> (i32, i32) {
    %c0_i32 = arith.constant 0 : i32
    %c0_i32_0 = arith.constant 0 : i32
    %c0_i32_1 = arith.constant 0 : i32
    return %c0_i32, %c0_i32_0 : i32, i32
  }
  func.func @transform_9(%arg0: i32) -> (i32, i32) {
    %c0_i32 = arith.constant 0 : i32
    %c0_i32_0 = arith.constant 0 : i32
    %c0_i32_1 = arith.constant 0 : i32
    return %c0_i32, %c0_i32_0 : i32, i32
  }
  func.func @transform_10(%arg0: i32) -> (i32, i32) {
    %c0_i32 = arith.constant 0 : i32
    %c0_i32_0 = arith.constant 0 : i32
    %c0_i32_1 = arith.constant 0 : i32
    return %c0_i32, %c0_i32_0 : i32, i32
  }
  func.func @transform_11(%arg0: i32) -> (i32, i32) {
    %c0_i32 = arith.constant 0 : i32
    %c0_i32_0 = arith.constant 0 : i32
    %c0_i32_1 = arith.constant 0 : i32
    return %c0_i32, %c0_i32_0 : i32, i32
  }
  func.func @transform_12(%arg0: i32) -> (i32, i32) {
    %c0_i32 = arith.constant 0 : i32
    %c0_i32_0 = arith.constant 0 : i32
    %c0_i32_1 = arith.constant 0 : i32
    return %c0_i32, %c0_i32_0 : i32, i32
  }
  func.func @transform_13(%arg0: i32) -> (i32, i32, i32) {
    %c0_i32 = arith.constant 0 : i32
    %c0_i32_0 = arith.constant 0 : i32
    %c0_i32_1 = arith.constant 0 : i32
    return %arg0, %c0_i32, %c0_i32_0 : i32, i32, i32
  }
}

module attributes {stable_mosaic.version = 11 : i64} {
  func.func @block_kernel(%arg0: i32, %arg1: memref<1x8x32xf32, #tpu.memory_space<vmem>>, %arg2: memref<1x32xf32, #tpu.memory_space<vmem>>, %arg3: memref<1x32xf32, #tpu.memory_space<vmem>>, %arg4: memref<32x96xbf16, #tpu.memory_space<vmem>>, %arg5: memref<1x96xf32, #tpu.memory_space<vmem>>, %arg6: memref<32x32xbf16, #tpu.memory_space<vmem>>, %arg7: memref<1x32xf32, #tpu.memory_space<vmem>>, %arg8: memref<1x32xf32, #tpu.memory_space<vmem>>, %arg9: memref<1x32xf32, #tpu.memory_space<vmem>>, %arg10: memref<32x128xbf16, #tpu.memory_space<vmem>>, %arg11: memref<1x128xf32, #tpu.memory_space<vmem>>, %arg12: memref<128x32xbf16, #tpu.memory_space<vmem>>, %arg13: memref<1x32xf32, #tpu.memory_space<vmem>>, %arg14: memref<1x8x32xf32, #tpu.memory_space<vmem>>) attributes {dimension_semantics = [#tpu.dimension_semantics<parallel>], iteration_bounds = array<i64: 2>, scalar_prefetch = 0 : i64, scratch_operands = 0 : i64, tpu.core_type = #tpu.core_type<tc>, window_params = [{transform_indices = @transform_0, window_bounds = array<i64: 1, 8, 32>}, {pipeline_mode = #tpu.pipeline_mode<synchronous>, transform_indices = @transform_1, window_bounds = array<i64: 1, 32>}, {pipeline_mode = #tpu.pipeline_mode<synchronous>, transform_indices = @transform_2, window_bounds = array<i64: 1, 32>}, {pipeline_mode = #tpu.pipeline_mode<synchronous>, transform_indices = @transform_3, window_bounds = array<i64: 32, 96>}, {pipeline_mode = #tpu.pipeline_mode<synchronous>, transform_indices = @transform_4, window_bounds = array<i64: 1, 96>}, {pipeline_mode = #tpu.pipeline_mode<synchronous>, transform_indices = @transform_5, window_bounds = array<i64: 32, 32>}, {pipeline_mode = #tpu.pipeline_mode<synchronous>, transform_indices = @transform_6, window_bounds = array<i64: 1, 32>}, {pipeline_mode = #tpu.pipeline_mode<synchronous>, transform_indices = @transform_7, window_bounds = array<i64: 1, 32>}, {pipeline_mode = #tpu.pipeline_mode<synchronous>, transform_indices = @transform_8, window_bounds = array<i64: 1, 32>}, {pipeline_mode = #tpu.pipeline_mode<synchronous>, transform_indices = @transform_9, window_bounds = array<i64: 32, 128>}, {pipeline_mode = #tpu.pipeline_mode<synchronous>, transform_indices = @transform_10, window_bounds = array<i64: 1, 128>}, {pipeline_mode = #tpu.pipeline_mode<synchronous>, transform_indices = @transform_11, window_bounds = array<i64: 128, 32>}, {pipeline_mode = #tpu.pipeline_mode<synchronous>, transform_indices = @transform_12, window_bounds = array<i64: 1, 32>}, {transform_indices = @transform_13, window_bounds = array<i64: 1, 8, 32>}]} {
    %c0 = arith.constant 0 : index
    %c0_0 = arith.constant 0 : index
    %c0_1 = arith.constant 0 : index
    %0 = vector.load %arg1[%c0, %c0_0, %c0_1] : memref<1x8x32xf32, #tpu.memory_space<vmem>>, vector<1x8x32xf32>
    %1 = vector.shape_cast %0 : vector<1x8x32xf32> to vector<8x32xf32>
    %c0_2 = arith.constant 0 : index
    %c0_3 = arith.constant 0 : index
    %2 = vector.load %arg2[%c0_2, %c0_3] : memref<1x32xf32, #tpu.memory_space<vmem>>, vector<1x32xf32>
    %c0_4 = arith.constant 0 : index
    %c0_5 = arith.constant 0 : index
    %3 = vector.load %arg3[%c0_4, %c0_5] : memref<1x32xf32, #tpu.memory_space<vmem>>, vector<1x32xf32>
    %cst = arith.constant dense<0.000000e+00> : vector<8xf32>
    %4 = vector.multi_reduction <add>, %1, %cst [1] : vector<8x32xf32> to vector<8xf32>
    %5 = vector.shape_cast %4 : vector<8xf32> to vector<8x1xf32>
    %cst_6 = arith.constant 3.200000e+01 : f32
    %6 = vector.broadcast %cst_6 : f32 to vector<8x1xf32>
    %7 = arith.divf %5, %6 : vector<8x1xf32>
    %8 = vector.broadcast %7 : vector<8x1xf32> to vector<8x32xf32>
    %9 = arith.subf %1, %8 : vector<8x32xf32>
    %10 = arith.mulf %9, %9 : vector<8x32xf32>
    %cst_7 = arith.constant dense<0.000000e+00> : vector<8xf32>
    %11 = vector.multi_reduction <add>, %10, %cst_7 [1] : vector<8x32xf32> to vector<8xf32>
    %12 = vector.shape_cast %11 : vector<8xf32> to vector<8x1xf32>
    %cst_8 = arith.constant 3.200000e+01 : f32
    %13 = vector.broadcast %cst_8 : f32 to vector<8x1xf32>
    %14 = arith.divf %12, %13 : vector<8x1xf32>
    %15 = vector.broadcast %7 : vector<8x1xf32> to vector<8x32xf32>
    %16 = arith.subf %1, %15 : vector<8x32xf32>
    %cst_9 = arith.constant 9.99999974E-6 : f32
    %17 = vector.broadcast %cst_9 : f32 to vector<8x1xf32>
    %18 = arith.addf %14, %17 : vector<8x1xf32>
    %19 = math.rsqrt %18 : vector<8x1xf32>
    %20 = vector.broadcast %19 : vector<8x1xf32> to vector<8x32xf32>
    %21 = arith.mulf %16, %20 : vector<8x32xf32>
    %22 = vector.broadcast %2 : vector<1x32xf32> to vector<8x32xf32>
    %23 = arith.mulf %21, %22 : vector<8x32xf32>
    %24 = vector.broadcast %3 : vector<1x32xf32> to vector<8x32xf32>
    %25 = arith.addf %23, %24 : vector<8x32xf32>
    %26 = arith.truncf %25 : vector<8x32xf32> to vector<8x32xbf16>
    %c0_10 = arith.constant 0 : index
    %c0_11 = arith.constant 0 : index
    %27 = vector.load %arg4[%c0_10, %c0_11] : memref<32x96xbf16, #tpu.memory_space<vmem>>, vector<32x96xbf16>
    %cst_12 = arith.constant dense<0.000000e+00> : vector<8x96xf32>
    %28 = tpu.matmul %26, %27, %cst_12 {dimension_numbers = #tpu.dot_dimension_numbers<[1], [0], [0], [1], [0, 0, 1, 1], [], []>} : vector<8x32xbf16>, vector<32x96xbf16>, vector<8x96xf32> -> vector<8x96xf32>
    %c0_13 = arith.constant 0 : index
    %c0_14 = arith.constant 0 : index
    %29 = vector.load %arg5[%c0_13, %c0_14] : memref<1x96xf32, #tpu.memory_space<vmem>>, vector<1x96xf32>
    %30 = vector.broadcast %29 : vector<1x96xf32> to vector<8x96xf32>
    %31 = arith.addf %28, %30 : vector<8x96xf32>
    %32 = vector.extract_strided_slice %31 {offsets = [0, 0], sizes = [8, 32], strides = [1, 1]} : vector<8x96xf32> to vector<8x32xf32>
    %33 = vector.shape_cast %32 : vector<8x32xf32> to vector<8x4x8xf32>
    %34 = tpu.transpose %33, [1, 0, 2] : vector<8x4x8xf32> -> vector<4x8x8xf32>
    %35 = arith.truncf %34 : vector<4x8x8xf32> to vector<4x8x8xbf16>
    %36 = vector.extract_strided_slice %31 {offsets = [0, 32], sizes = [8, 32], strides = [1, 1]} : vector<8x96xf32> to vector<8x32xf32>
    %37 = vector.shape_cast %36 : vector<8x32xf32> to vector<8x4x8xf32>
    %38 = tpu.transpose %37, [1, 0, 2] : vector<8x4x8xf32> -> vector<4x8x8xf32>
    %39 = arith.truncf %38 : vector<4x8x8xf32> to vector<4x8x8xbf16>
    %40 = vector.extract_strided_slice %31 {offsets = [0, 64], sizes = [8, 32], strides = [1, 1]} : vector<8x96xf32> to vector<8x32xf32>
    %41 = vector.shape_cast %40 : vector<8x32xf32> to vector<8x4x8xf32>
    %42 = tpu.transpose %41, [1, 0, 2] : vector<8x4x8xf32> -> vector<4x8x8xf32>
    %43 = arith.truncf %42 : vector<4x8x8xf32> to vector<4x8x8xbf16>
    "tpu.trace_start"() <{level = 10 : i32, message = "htd,hsd->hts"}> : () -> ()
    %cst_15 = arith.constant dense<0.000000e+00> : vector<4x8x8xf32>
    %44 = tpu.matmul %35, %39, %cst_15 {dimension_numbers = #tpu.dot_dimension_numbers<[2], [2], [1], [1], [0, 0, 0, 1, 1, 1], [0], [0]>} : vector<4x8x8xbf16>, vector<4x8x8xbf16>, vector<4x8x8xf32> -> vector<4x8x8xf32>
    "tpu.trace_stop"() : () -> ()
    %45 = tpu.iota {dimensions = array<i32: 0>} : vector<8x8xi32>
    %46 = tpu.iota {dimensions = array<i32: 1>} : vector<8x8xi32>
    %47 = arith.cmpi sge, %45, %46 : vector<8x8xi32>
    %48 = vector.shape_cast %47 : vector<8x8xi1> to vector<1x8x8xi1>
    %cst_16 = arith.constant -1.000000e+04 : f32
    %49 = vector.shape_cast %48 : vector<1x8x8xi1> to vector<1x8x8xi1>
    %50 = vector.broadcast %49 : vector<1x8x8xi1> to vector<4x8x8xi1>
    %51 = vector.broadcast %cst_16 : f32 to vector<4x8x8xf32>
    %52 = arith.select %50, %44, %51 : vector<4x8x8xi1>, vector<4x8x8xf32>
    %cst_17 = arith.constant dense<0xFF800000> : vector<4x8xf32>
    %53 = vector.multi_reduction <maximumf>, %52, %cst_17 [2] : vector<4x8x8xf32> to vector<4x8xf32>
    %54 = vector.shape_cast %53 : vector<4x8xf32> to vector<4x8x1xf32>
    %55 = vector.broadcast %54 : vector<4x8x1xf32> to vector<4x8x8xf32>
    %56 = arith.subf %52, %55 : vector<4x8x8xf32>
    %57 = math.exp %56 : vector<4x8x8xf32>
    %cst_18 = arith.constant dense<0.000000e+00> : vector<4x8xf32>
    %58 = vector.multi_reduction <add>, %57, %cst_18 [2] : vector<4x8x8xf32> to vector<4x8xf32>
    %59 = vector.shape_cast %58 : vector<4x8xf32> to vector<4x8x1xf32>
    %60 = tpu.reciprocal %59 {approx = true} : vector<4x8x1xf32> -> vector<4x8x1xf32>
    %61 = vector.broadcast %60 : vector<4x8x1xf32> to vector<4x8x8xf32>
    %62 = arith.mulf %57, %61 : vector<4x8x8xf32>
    %63 = arith.truncf %62 : vector<4x8x8xf32> to vector<4x8x8xbf16>
    "tpu.trace_start"() <{level = 10 : i32, message = "hts,hsd->htd"}> : () -> ()
    %cst_19 = arith.constant dense<0.000000e+00> : vector<4x8x8xf32>
    %64 = tpu.matmul %63, %43, %cst_19 {dimension_numbers = #tpu.dot_dimension_numbers<[2], [1], [1], [2], [0, 0, 0, 1, 1, 2], [0], [0]>} : vector<4x8x8xbf16>, vector<4x8x8xbf16>, vector<4x8x8xf32> -> vector<4x8x8xf32>
    "tpu.trace_stop"() : () -> ()
    %65 = tpu.transpose %64, [1, 0, 2] : vector<4x8x8xf32> -> vector<8x4x8xf32>
    %66 = vector.shape_cast %65 : vector<8x4x8xf32> to vector<8x32xf32>
    %67 = arith.truncf %66 : vector<8x32xf32> to vector<8x32xbf16>
    %c0_20 = arith.constant 0 : index
    %c0_21 = arith.constant 0 : index
    %68 = vector.load %arg6[%c0_20, %c0_21] : memref<32x32xbf16, #tpu.memory_space<vmem>>, vector<32x32xbf16>
    %cst_22 = arith.constant dense<0.000000e+00> : vector<8x32xf32>
    %69 = tpu.matmul %67, %68, %cst_22 {dimension_numbers = #tpu.dot_dimension_numbers<[1], [0], [0], [1], [0, 0, 1, 1], [], []>} : vector<8x32xbf16>, vector<32x32xbf16>, vector<8x32xf32> -> vector<8x32xf32>
    %c0_23 = arith.constant 0 : index
    %c0_24 = arith.constant 0 : index
    %70 = vector.load %arg7[%c0_23, %c0_24] : memref<1x32xf32, #tpu.memory_space<vmem>>, vector<1x32xf32>
    %71 = vector.broadcast %70 : vector<1x32xf32> to vector<8x32xf32>
    %72 = arith.addf %69, %71 : vector<8x32xf32>
    %73 = arith.addf %1, %72 : vector<8x32xf32>
    %c0_25 = arith.constant 0 : index
    %c0_26 = arith.constant 0 : index
    %74 = vector.load %arg8[%c0_25, %c0_26] : memref<1x32xf32, #tpu.memory_space<vmem>>, vector<1x32xf32>
    %c0_27 = arith.constant 0 : index
    %c0_28 = arith.constant 0 : index
    %75 = vector.load %arg9[%c0_27, %c0_28] : memref<1x32xf32, #tpu.memory_space<vmem>>, vector<1x32xf32>
    %cst_29 = arith.constant dense<0.000000e+00> : vector<8xf32>
    %76 = vector.multi_reduction <add>, %73, %cst_29 [1] : vector<8x32xf32> to vector<8xf32>
    %77 = vector.shape_cast %76 : vector<8xf32> to vector<8x1xf32>
    %cst_30 = arith.constant 3.200000e+01 : f32
    %78 = vector.broadcast %cst_30 : f32 to vector<8x1xf32>
    %79 = arith.divf %77, %78 : vector<8x1xf32>
    %80 = vector.broadcast %79 : vector<8x1xf32> to vector<8x32xf32>
    %81 = arith.subf %73, %80 : vector<8x32xf32>
    %82 = arith.mulf %81, %81 : vector<8x32xf32>
    %cst_31 = arith.constant dense<0.000000e+00> : vector<8xf32>
    %83 = vector.multi_reduction <add>, %82, %cst_31 [1] : vector<8x32xf32> to vector<8xf32>
    %84 = vector.shape_cast %83 : vector<8xf32> to vector<8x1xf32>
    %cst_32 = arith.constant 3.200000e+01 : f32
    %85 = vector.broadcast %cst_32 : f32 to vector<8x1xf32>
    %86 = arith.divf %84, %85 : vector<8x1xf32>
    %87 = vector.broadcast %79 : vector<8x1xf32> to vector<8x32xf32>
    %88 = arith.subf %73, %87 : vector<8x32xf32>
    %cst_33 = arith.constant 9.99999974E-6 : f32
    %89 = vector.broadcast %cst_33 : f32 to vector<8x1xf32>
    %90 = arith.addf %86, %89 : vector<8x1xf32>
    %91 = math.rsqrt %90 : vector<8x1xf32>
    %92 = vector.broadcast %91 : vector<8x1xf32> to vector<8x32xf32>
    %93 = arith.mulf %88, %92 : vector<8x32xf32>
    %94 = vector.broadcast %74 : vector<1x32xf32> to vector<8x32xf32>
    %95 = arith.mulf %93, %94 : vector<8x32xf32>
    %96 = vector.broadcast %75 : vector<1x32xf32> to vector<8x32xf32>
    %97 = arith.addf %95, %96 : vector<8x32xf32>
    %98 = arith.truncf %97 : vector<8x32xf32> to vector<8x32xbf16>
    %c0_34 = arith.constant 0 : index
    %c0_35 = arith.constant 0 : index
    %99 = vector.load %arg10[%c0_34, %c0_35] : memref<32x128xbf16, #tpu.memory_space<vmem>>, vector<32x128xbf16>
    %cst_36 = arith.constant dense<0.000000e+00> : vector<8x128xf32>
    %100 = tpu.matmul %98, %99, %cst_36 {dimension_numbers = #tpu.dot_dimension_numbers<[1], [0], [0], [1], [0, 0, 1, 1], [], []>} : vector<8x32xbf16>, vector<32x128xbf16>, vector<8x128xf32> -> vector<8x128xf32>
    %c0_37 = arith.constant 0 : index
    %c0_38 = arith.constant 0 : index
    %101 = vector.load %arg11[%c0_37, %c0_38] : memref<1x128xf32, #tpu.memory_space<vmem>>, vector<1x128xf32>
    %102 = vector.broadcast %101 : vector<1x128xf32> to vector<8x128xf32>
    %103 = arith.addf %100, %102 : vector<8x128xf32>
    %cst_39 = arith.constant 5.000000e-01 : f32
    %104 = vector.broadcast %cst_39 : f32 to vector<8x128xf32>
    %105 = arith.mulf %104, %103 : vector<8x128xf32>
    %cst_40 = arith.constant 0.636619746 : f32
    %106 = math.sqrt %cst_40 : f32
    %107 = arith.mulf %103, %103 : vector<8x128xf32>
    %108 = arith.mulf %103, %107 : vector<8x128xf32>
    %cst_41 = arith.constant 4.471500e-02 : f32
    %109 = vector.broadcast %cst_41 : f32 to vector<8x128xf32>
    %110 = arith.mulf %109, %108 : vector<8x128xf32>
    %111 = arith.addf %103, %110 : vector<8x128xf32>
    %112 = vector.broadcast %106 : f32 to vector<8x128xf32>
    %113 = arith.mulf %112, %111 : vector<8x128xf32>
    %114 = math.tanh %113 : vector<8x128xf32>
    %cst_42 = arith.constant 1.000000e+00 : f32
    %115 = vector.broadcast %cst_42 : f32 to vector<8x128xf32>
    %116 = arith.addf %115, %114 : vector<8x128xf32>
    %117 = arith.mulf %105, %116 : vector<8x128xf32>
    %118 = arith.truncf %117 : vector<8x128xf32> to vector<8x128xbf16>
    %c0_43 = arith.constant 0 : index
    %c0_44 = arith.constant 0 : index
    %119 = vector.load %arg12[%c0_43, %c0_44] : memref<128x32xbf16, #tpu.memory_space<vmem>>, vector<128x32xbf16>
    %cst_45 = arith.constant dense<0.000000e+00> : vector<8x32xf32>
    %120 = tpu.matmul %118, %119, %cst_45 {dimension_numbers = #tpu.dot_dimension_numbers<[1], [0], [0], [1], [0, 0, 1, 1], [], []>} : vector<8x128xbf16>, vector<128x32xbf16>, vector<8x32xf32> -> vector<8x32xf32>
    %c0_46 = arith.constant 0 : index
    %c0_47 = arith.constant 0 : index
    %121 = vector.load %arg13[%c0_46, %c0_47] : memref<1x32xf32, #tpu.memory_space<vmem>>, vector<1x32xf32>
    %122 = vector.broadcast %121 : vector<1x32xf32> to vector<8x32xf32>
    %123 = arith.addf %120, %122 : vector<8x32xf32>
    %124 = arith.addf %73, %123 : vector<8x32xf32>
    %c0_48 = arith.constant 0 : index
    %c0_49 = arith.constant 0 : index
    %c0_50 = arith.constant 0 : index
    %125 = vector.load %arg14[%c0_48, %c0_49, %c0_50] : memref<1x8x32xf32, #tpu.memory_space<vmem>>, vector<1x8x32xf32>
    %126 = vector.shape_cast %125 : vector<1x8x32xf32> to vector<8x32xf32>
    %127 = vector.shape_cast %124 : vector<8x32xf32> to vector<1x8x32xf32>
    tpu.vector_store %arg14[%c0_48, %c0_49, %c0_50], %127 {strides = array<i32>} : memref<1x8x32xf32, #tpu.memory_space<vmem>>, vector<1x8x32xf32>,
    return
  }
  func.func @transform_0(%arg0: i32) -> (i32, i32, i32) {
    %c0_i32 = arith.constant 0 : i32
    %c0_i32_0 = arith.constant 0 : i32
    %c0_i32_1 = arith.constant 0 : i32
    return %arg0, %c0_i32, %c0_i32_0 : i32, i32, i32
  }
  func.func @transform_1(%arg0: i32) -> (i32, i32) {
    %c0_i32 = arith.constant 0 : i32
    %c0_i32_0 = arith.constant 0 : i32
    %c0_i32_1 = arith.constant 0 : i32
    return %c0_i32, %c0_i32_0 : i32, i32
  }
  func.func @transform_2(%arg0: i32) -> (i32, i32) {
    %c0_i32 = arith.constant 0 : i32
    %c0_i32_0 = arith.constant 0 : i32
    %c0_i32_1 = arith.constant 0 : i32
    return %c0_i32, %c0_i32_0 : i32, i32
  }
  func.func @transform_3(%arg0: i32) -> (i32, i32) {
    %c0_i32 = arith.constant 0 : i32
    %c0_i32_0 = arith.constant 0 : i32
    %c0_i32_1 = arith.constant 0 : i32
    return %c0_i32, %c0_i32_0 : i32, i32
  }
  func.func @transform_4(%arg0: i32) -> (i32, i32) {
    %c0_i32 = arith.constant 0 : i32
    %c0_i32_0 = arith.constant 0 : i32
    %c0_i32_1 = arith.constant 0 : i32
    return %c0_i32, %c0_i32_0 : i32, i32
  }
  func.func @transform_5(%arg0: i32) -> (i32, i32) {
    %c0_i32 = arith.constant 0 : i32
    %c0_i32_0 = arith.constant 0 : i32
    %c0_i32_1 = arith.constant 0 : i32
    return %c0_i32, %c0_i32_0 : i32, i32
  }
  func.func @transform_6(%arg0: i32) -> (i32, i32) {
    %c0_i32 = arith.constant 0 : i32
    %c0_i32_0 = arith.constant 0 : i32
    %c0_i32_1 = arith.constant 0 : i32
    return %c0_i32, %c0_i32_0 : i32, i32
  }
  func.func @transform_7(%arg0: i32) -> (i32, i32) {
    %c0_i32 = arith.constant 0 : i32
    %c0_i32_0 = arith.constant 0 : i32
    %c0_i32_1 = arith.constant 0 : i32
    return %c0_i32, %c0_i32_0 : i32, i32
  }
  func.func @transform_8(%arg0: i32) -> (i32, i32) {
    %c0_i32 = arith.constant 0 : i32
    %c0_i32_0 = arith.constant 0 : i32
    %c0_i32_1 = arith.constant 0 : i32
    return %c0_i32, %c0_i32_0 : i32, i32
  }
  func.func @transform_9(%arg0: i32) -> (i32, i32) {
    %c0_i32 = arith.constant 0 : i32
    %c0_i32_0 = arith.constant 0 : i32
    %c0_i32_1 = arith.constant 0 : i32
    return %c0_i32, %c0_i32_0 : i32, i32
  }
  func.func @transform_10(%arg0: i32) -> (i32, i32) {
    %c0_i32 = arith.constant 0 : i32
    %c0_i32_0 = arith.constant 0 : i32
    %c0_i32_1 = arith.constant 0 : i32
    return %c0_i32, %c0_i32_0 : i32, i32
  }
  func.func @transform_11(%arg0: i32) -> (i32, i32) {
    %c0_i32 = arith.constant 0 : i32
    %c0_i32_0 = arith.constant 0 : i32
    %c0_i32_1 = arith.constant 0 : i32
    return %c0_i32, %c0_i32_0 : i32, i32
  }
  func.func @transform_12(%arg0: i32) -> (i32, i32) {
    %c0_i32 = arith.constant 0 : i32
    %c0_i32_0 = arith.constant 0 : i32
    %c0_i32_1 = arith.constant 0 : i32
    return %c0_i32, %c0_i32_0 : i32, i32
  }
  func.func @transform_13(%arg0: i32) -> (i32, i32, i32) {
    %c0_i32 = arith.constant 0 : i32
    %c0_i32_0 = arith.constant 0 : i32
    %c0_i32_1 = arith.constant 0 : i32
    return %arg0, %c0_i32, %c0_i32_0 : i32, i32, i32
  }
}

</mosaic_0001>

<llo_original>
// kernel: tpu_custom_call.1
$region0: #{tpu_custom_call.1}
  #allocation0 [shape = 'u32[]', space=smem, size = 0x4, offset = 0x4, fixed_abs, tag = 'smem constant byte address 0x4 - core index']
  #allocation1 [shape = 'u32[144,128]{1,0:T(1,128)}', space=vmem, size = 0x12000, scoped, tag = 'internal scratch']
  %s0 = inlined_call_operand.vmem [shape: f32[2,8,32], index: 0, kind: input, shape index: {}]
  %s1 = inlined_call_operand.vmem [shape: f32[1,32], index: 1, kind: input, shape index: {}]
  %s2 = inlined_call_operand.vmem [shape: f32[1,32], index: 2, kind: input, shape index: {}]
  %s3 = inlined_call_operand.vmem [shape: bf16[32,96], index: 3, kind: input, shape index: {}]
  %s4 = inlined_call_operand.vmem [shape: f32[1,96], index: 4, kind: input, shape index: {}]
  %s5 = inlined_call_operand.vmem [shape: bf16[32,32], index: 5, kind: input, shape index: {}]
  %s6 = inlined_call_operand.vmem [shape: f32[1,32], index: 6, kind: input, shape index: {}]
  %s7 = inlined_call_operand.vmem [shape: f32[1,32], index: 7, kind: input, shape index: {}]
  %s8 = inlined_call_operand.vmem [shape: f32[1,32], index: 8, kind: input, shape index: {}]
  %s9 = inlined_call_operand.vmem [shape: bf16[32,128], index: 9, kind: input, shape index: {}]
  %s10 = inlined_call_operand.vmem [shape: f32[1,128], index: 10, kind: input, shape index: {}]
  %s11 = inlined_call_operand.vmem [shape: bf16[128,32], index: 11, kind: input, shape index: {}]
  %s12 = inlined_call_operand.vmem [shape: f32[1,32], index: 12, kind: input, shape index: {}]
  %s13 = inlined_call_operand.hbm [shape: f32[2,8,32], index: 13, kind: output, shape index: {}]
  %s14 = sld [smem:[#allocation0]]
  $region85: #{tpu_custom_call.1} parent=0
    _
  %s16 = ssub.s32 1, %s14
  %s17 = scalar_select 0, %s16, %s14
  $region1: #{tpu_custom_call.1} parent=0
    #allocation2 [shape = 'u8[8192]{0}', space=vmem, size = 0x2000, scoped, tag = 'output window, operand 0']
    #allocation3 [shape = 's32[2]{0}', space=sflag, size = 0x8, scoped, tag = 'scoped memory for tpu_custom_call.1']
    %18 = vsyncpa [#allocation3], 0
    %s19 = scalar_lea.sflag [#allocation3], 1
    %20 = vsyncpa %s19, 0
    loop: start=0, step=1, limit=4
    $region2: #{tpu_custom_call.1} parent=1 // loop_pre_header
      _
    $region3: #{tpu_custom_call.1} parent=1 // loop_header
      %s22 = sphi 0, %s26
      %p23 = scmp.ge.s32.totalorder %s22, 4
      %s32 = sphi 0, %s34
      %s35 = sphi 0, %s32
      %s36 = sphi 0, %s35
      %s52 = sphi 0, %s36
      %s56 = sphi 0, %s56
      %s58 = sphi 0, %s56
      %s59 = sphi 0, %s58
      %s73 = sphi 0, %s59
      %s77 = sphi 0, %s77
      %s79 = sphi 0, %s77
      %s80 = sphi 0, %s79
      %s94 = sphi 0, %s80
      %s98 = sphi 0, %s98
      %s100 = sphi 0, %s98
      %s101 = sphi 0, %s100
      %s115 = sphi 0, %s101
      %s119 = sphi 0, %s119
      %s121 = sphi 0, %s119
      %s122 = sphi 0, %s121
      %s136 = sphi 0, %s122
      %s140 = sphi 0, %s140
      %s142 = sphi 0, %s140
      %s143 = sphi 0, %s142
      %s157 = sphi 0, %s143
      %s161 = sphi 0, %s161
      %s163 = sphi 0, %s161
      %s164 = sphi 0, %s163
      %s178 = sphi 0, %s164
      %s182 = sphi 0, %s182
      %s184 = sphi 0, %s182
      %s185 = sphi 0, %s184
      %s199 = sphi 0, %s185
      %s203 = sphi 0, %s203
      %s205 = sphi 0, %s203
      %s206 = sphi 0, %s205
      %s220 = sphi 0, %s206
      %s224 = sphi 0, %s224
      %s226 = sphi 0, %s224
      %s227 = sphi 0, %s226
      %s241 = sphi 0, %s227
      %s245 = sphi 0, %s245
      %s247 = sphi 0, %s245
      %s248 = sphi 0, %s247
      %s262 = sphi 0, %s248
      %s266 = sphi 0, %s266
      %s268 = sphi 0, %s266
      %s269 = sphi 0, %s268
      %s283 = sphi 0, %s269
      %s287 = sphi 0, %s287
      %s289 = sphi 0, %s287
      %s290 = sphi 0, %s289
      %s304 = sphi 0, %s290
      %s310 = sphi 0, %s312
      %s313 = sphi 0, %s310
      %s314 = sphi 0, %s313
      %s330 = sphi 0, %s314
    $region4: #{tpu_custom_call.1} parent=1 // loop_header_branch
      %25 = sbr.rel (%p23) target = $region8
    $region5: #{tpu_custom_call.1} parent=1 // loop_body
      %s27 = ssub.s32 %s22, 1
      %s28 = ssub.s32 %s22, 2
      %s29 = sadd.s32 %s22, 1
      %s30 = ssub.s32 %s22, %s29
      %p31 = scmp.eq.s32.totalorder %s30, 0
      %s33 = sadd.s32 %s32, 1
      %s34 = scalar_select %p31, %s32, %s33
      %p37 = pneg %p31
      %p38 = scmp.eq.s32.totalorder %s22, 1
      %p39 = por %p37, %p38
      %p40 = scmp.ne.s32.totalorder %s32, %s35
      %p41 = scmp.eq.s32.totalorder %s22, 0
      %p42 = por %p40, %p41
      %p43 = scmp.ne.s32.totalorder %s32, %s35
      %p44 = scmp.eq.s32.totalorder %s27, 1
      %p45 = por %p43, %p44
      %p46 = scmp.ne.s32.totalorder %s35, %s36
      %p47 = scmp.eq.s32.totalorder %s27, 0
      %p48 = por %p46, %p47
      %p49 = scmp.ne.s32.totalorder %s35, %s36
      %p50 = scmp.eq.s32.totalorder %s28, 1
      %p51 = por %p49, %p50
      %p53 = scmp.ne.s32.totalorder %s36, %s52
      %p54 = scmp.eq.s32.totalorder %s28, 0
      %p55 = por %p53, %p54
      %s57 = sadd.s32 %s56, 1
      %p60 = scmp.eq.s32.totalorder %s22, 1
      %p61 = scmp.ne.s32.totalorder %s56, %s58
      %p62 = scmp.eq.s32.totalorder %s22, 0
      %p63 = por %p61, %p62
      %p64 = scmp.ne.s32.totalorder %s56, %s58
      %p65 = scmp.eq.s32.totalorder %s27, 1
      %p66 = por %p64, %p65
      %p67 = scmp.ne.s32.totalorder %s58, %s59
      %p68 = scmp.eq.s32.totalorder %s27, 0
      %p69 = por %p67, %p68
      %p70 = scmp.ne.s32.totalorder %s58, %s59
      %p71 = scmp.eq.s32.totalorder %s28, 1
      %p72 = por %p70, %p71
      %p74 = scmp.ne.s32.totalorder %s59, %s73
      %p75 = scmp.eq.s32.totalorder %s28, 0
      %p76 = por %p74, %p75
      %s78 = sadd.s32 %s77, 1
      %p81 = scmp.eq.s32.totalorder %s22, 1
      %p82 = scmp.ne.s32.totalorder %s77, %s79
      %p83 = scmp.eq.s32.totalorder %s22, 0
      %p84 = por %p82, %p83
      %p85 = scmp.ne.s32.totalorder %s77, %s79
      %p86 = scmp.eq.s32.totalorder %s27, 1
      %p87 = por %p85, %p86
      %p88 = scmp.ne.s32.totalorder %s79, %s80
      %p89 = scmp.eq.s32.totalorder %s27, 0
      %p90 = por %p88, %p89
      %p91 = scmp.ne.s32.totalorder %s79, %s80
      %p92 = scmp.eq.s32.totalorder %s28, 1
      %p93 = por %p91, %p92
      %p95 = scmp.ne.s32.totalorder %s80, %s94
      %p96 = scmp.eq.s32.totalorder %s28, 0
      %p97 = por %p95, %p96
      %s99 = sadd.s32 %s98, 1
      %p102 = scmp.eq.s32.totalorder %s22, 1
      %p103 = scmp.ne.s32.totalorder %s98, %s100
      %p104 = scmp.eq.s32.totalorder %s22, 0
      %p105 = por %p103, %p104
      %p106 = scmp.ne.s32.totalorder %s98, %s100
      %p107 = scmp.eq.s32.totalorder %s27, 1
      %p108 = por %p106, %p107
      %p109 = scmp.ne.s32.totalorder %s100, %s101
      %p110 = scmp.eq.s32.totalorder %s27, 0
      %p111 = por %p109, %p110
      %p112 = scmp.ne.s32.totalorder %s100, %s101
      %p113 = scmp.eq.s32.totalorder %s28, 1
      %p114 = por %p112, %p113
      %p116 = scmp.ne.s32.totalorder %s101, %s115
      %p117 = scmp.eq.s32.totalorder %s28, 0
      %p118 = por %p116, %p117
      %s120 = sadd.s32 %s119, 1
      %p123 = scmp.eq.s32.totalorder %s22, 1
      %p124 = scmp.ne.s32.totalorder %s119, %s121
      %p125 = scmp.eq.s32.totalorder %s22, 0
      %p126 = por %p124, %p125
      %p127 = scmp.ne.s32.totalorder %s119, %s121
      %p128 = scmp.eq.s32.totalorder %s27, 1
      %p129 = por %p127, %p128
      %p130 = scmp.ne.s32.totalorder %s121, %s122
      %p131 = scmp.eq.s32.totalorder %s27, 0
      %p132 = por %p130, %p131
      %p133 = scmp.ne.s32.totalorder %s121, %s122
      %p134 = scmp.eq.s32.totalorder %s28, 1
      %p135 = por %p133, %p134
      %p137 = scmp.ne.s32.totalorder %s122, %s136
      %p138 = scmp.eq.s32.totalorder %s28, 0
      %p139 = por %p137, %p138
      %s141 = sadd.s32 %s140, 1
      %p144 = scmp.eq.s32.totalorder %s22, 1
      %p145 = scmp.ne.s32.totalorder %s140, %s142
      %p146 = scmp.eq.s32.totalorder %s22, 0
      %p147 = por %p145, %p146
      %p148 = scmp.ne.s32.totalorder %s140, %s142
      %p149 = scmp.eq.s32.totalorder %s27, 1
      %p150 = por %p148, %p149
      %p151 = scmp.ne.s32.totalorder %s142, %s143
      %p152 = scmp.eq.s32.totalorder %s27, 0
      %p153 = por %p151, %p152
      %p154 = scmp.ne.s32.totalorder %s142, %s143
      %p155 = scmp.eq.s32.totalorder %s28, 1
      %p156 = por %p154, %p155
      %p158 = scmp.ne.s32.totalorder %s143, %s157
      %p159 = scmp.eq.s32.totalorder %s28, 0
      %p160 = por %p158, %p159
      %s162 = sadd.s32 %s161, 1
      %p165 = scmp.eq.s32.totalorder %s22, 1
      %p166 = scmp.ne.s32.totalorder %s161, %s163
      %p167 = scmp.eq.s32.totalorder %s22, 0
      %p168 = por %p166, %p167
      %p169 = scmp.ne.s32.totalorder %s161, %s163
      %p170 = scmp.eq.s32.totalorder %s27, 1
      %p171 = por %p169, %p170
      %p172 = scmp.ne.s32.totalorder %s163, %s164
      %p173 = scmp.eq.s32.totalorder %s27, 0
      %p174 = por %p172, %p173
      %p175 = scmp.ne.s32.totalorder %s163, %s164
      %p176 = scmp.eq.s32.totalorder %s28, 1
      %p177 = por %p175, %p176
      %p179 = scmp.ne.s32.totalorder %s164, %s178
      %p180 = scmp.eq.s32.totalorder %s28, 0
      %p181 = por %p179, %p180
      %s183 = sadd.s32 %s182, 1
      %p186 = scmp.eq.s32.totalorder %s22, 1
      %p187 = scmp.ne.s32.totalorder %s182, %s184
      %p188 = scmp.eq.s32.totalorder %s22, 0
      %p189 = por %p187, %p188
      %p190 = scmp.ne.s32.totalorder %s182, %s184
      %p191 = scmp.eq.s32.totalorder %s27, 1
      %p192 = por %p190, %p191
      %p193 = scmp.ne.s32.totalorder %s184, %s185
      %p194 = scmp.eq.s32.totalorder %s27, 0
      %p195 = por %p193, %p194
      %p196 = scmp.ne.s32.totalorder %s184, %s185
      %p197 = scmp.eq.s32.totalorder %s28, 1
      %p198 = por %p196, %p197
      %p200 = scmp.ne.s32.totalorder %s185, %s199
      %p201 = scmp.eq.s32.totalorder %s28, 0
      %p202 = por %p200, %p201
      %s204 = sadd.s32 %s203, 1
      %p207 = scmp.eq.s32.totalorder %s22, 1
      %p208 = scmp.ne.s32.totalorder %s203, %s205
      %p209 = scmp.eq.s32.totalorder %s22, 0
      %p210 = por %p208, %p209
      %p211 = scmp.ne.s32.totalorder %s203, %s205
      %p212 = scmp.eq.s32.totalorder %s27, 1
      %p213 = por %p211, %p212
      %p214 = scmp.ne.s32.totalorder %s205, %s206
      %p215 = scmp.eq.s32.totalorder %s27, 0
      %p216 = por %p214, %p215
      %p217 = scmp.ne.s32.totalorder %s205, %s206
      %p218 = scmp.eq.s32.totalorder %s28, 1
      %p219 = por %p217, %p218
      %p221 = scmp.ne.s32.totalorder %s206, %s220
      %p222 = scmp.eq.s32.totalorder %s28, 0
      %p223 = por %p221, %p222
      %s225 = sadd.s32 %s224, 1
      %p228 = scmp.eq.s32.totalorder %s22, 1
      %p229 = scmp.ne.s32.totalorder %s224, %s226
      %p230 = scmp.eq.s32.totalorder %s22, 0
      %p231 = por %p229, %p230
      %p232 = scmp.ne.s32.totalorder %s224, %s226
      %p233 = scmp.eq.s32.totalorder %s27, 1
      %p234 = por %p232, %p233
      %p235 = scmp.ne.s32.totalorder %s226, %s227
      %p236 = scmp.eq.s32.totalorder %s27, 0
      %p237 = por %p235, %p236
      %p238 = scmp.ne.s32.totalorder %s226, %s227
      %p239 = scmp.eq.s32.totalorder %s28, 1
      %p240 = por %p238, %p239
      %p242 = scmp.ne.s32.totalorder %s227, %s241
      %p243 = scmp.eq.s32.totalorder %s28, 0
      %p244 = por %p242, %p243
      %s246 = sadd.s32 %s245, 1
      %p249 = scmp.eq.s32.totalorder %s22, 1
      %p250 = scmp.ne.s32.totalorder %s245, %s247
      %p251 = scmp.eq.s32.totalorder %s22, 0
      %p252 = por %p250, %p251
      %p253 = scmp.ne.s32.totalorder %s245, %s247
      %p254 = scmp.eq.s32.totalorder %s27, 1
      %p255 = por %p253, %p254
      %p256 = scmp.ne.s32.totalorder %s247, %s248
      %p257 = scmp.eq.s32.totalorder %s27, 0
      %p258 = por %p256, %p257
      %p259 = scmp.ne.s32.totalorder %s247, %s248
      %p260 = scmp.eq.s32.totalorder %s28, 1
      %p261 = por %p259, %p260
      %p263 = scmp.ne.s32.totalorder %s248, %s262
      %p264 = scmp.eq.s32.totalorder %s28, 0
      %p265 = por %p263, %p264
      %s267 = sadd.s32 %s266, 1
      %p270 = scmp.eq.s32.totalorder %s22, 1
      %p271 = scmp.ne.s32.totalorder %s266, %s268
      %p272 = scmp.eq.s32.totalorder %s22, 0
      %p273 = por %p271, %p272
      %p274 = scmp.ne.s32.totalorder %s266, %s268
      %p275 = scmp.eq.s32.totalorder %s27, 1
      %p276 = por %p274, %p275
      %p277 = scmp.ne.s32.totalorder %s268, %s269
      %p278 = scmp.eq.s32.totalorder %s27, 0
      %p279 = por %p277, %p278
      %p280 = scmp.ne.s32.totalorder %s268, %s269
      %p281 = scmp.eq.s32.totalorder %s28, 1
      %p282 = por %p280, %p281
      %p284 = scmp.ne.s32.totalorder %s269, %s283
      %p285 = scmp.eq.s32.totalorder %s28, 0
      %p286 = por %p284, %p285
      %s288 = sadd.s32 %s287, 1
      %p291 = scmp.eq.s32.totalorder %s22, 1
      %p292 = scmp.ne.s32.totalorder %s287, %s289
      %p293 = scmp.eq.s32.totalorder %s22, 0
      %p294 = por %p292, %p293
      %p295 = scmp.ne.s32.totalorder %s287, %s289
      %p296 = scmp.eq.s32.totalorder %s27, 1
      %p297 = por %p295, %p296
      %p298 = scmp.ne.s32.totalorder %s289, %s290
      %p299 = scmp.eq.s32.totalorder %s27, 0
      %p300 = por %p298, %p299
      %p301 = scmp.ne.s32.totalorder %s289, %s290
      %p302 = scmp.eq.s32.totalorder %s28, 1
      %p303 = por %p301, %p302
      %p305 = scmp.ne.s32.totalorder %s290, %s304
      %p306 = scmp.eq.s32.totalorder %s28, 0
      %p307 = por %p305, %p306
      %s308 = ssub.s32 %s22, %s29
      %p309 = scmp.eq.s32.totalorder %s308, 0
      %s311 = sadd.s32 %s310, 1
      %s312 = scalar_select %p309, %s310, %s311
      %p315 = pneg %p309
      %p316 = scmp.eq.s32.totalorder %s22, 1
      %p317 = por %p315, %p316
      %p318 = scmp.ne.s32.totalorder %s310, %s313
      %p319 = scmp.eq.s32.totalorder %s22, 0
      %p320 = por %p318, %p319
      %p321 = scmp.ne.s32.totalorder %s310, %s313
      %p322 = scmp.eq.s32.totalorder %s27, 1
      %p323 = por %p321, %p322
      %p324 = scmp.ne.s32.totalorder %s313, %s314
      %p325 = scmp.eq.s32.totalorder %s27, 0
      %p326 = por %p324, %p325
      %p327 = scmp.ne.s32.totalorder %s313, %s314
      %p328 = scmp.eq.s32.totalorder %s28, 1
      %p329 = por %p327, %p328
      %p331 = scmp.ne.s32.totalorder %s314, %s330
      %p332 = scmp.eq.s32.totalorder %s28, 0
      %p333 = por %p331, %p332
      %p334 = scmp.le.s32.totalorder 1, %s22
      %p335 = scmp.lt.s32.totalorder %s22, 3
      %p336 = pnand %p334, %p335
      %p337 = pneg %p336
      // Predicated region
      $region9: #{tpu_custom_call.1} parent=5 // pred_check
        _
      $region10: #{tpu_custom_call.1} parent=5 // pred_check_branch
        %339 = sbr.rel (%p336) target = $region12
      $region11: #{tpu_custom_call.1} parent=5 // pred_region
        %s340 = ssub.s32 %s22, 1
        // Predicated region
        $region13: #{tpu_custom_call.1} parent=11 // pred_check
          %p341 = pneg %p69
        $region14: #{tpu_custom_call.1} parent=11 // pred_check_branch
          %343 = sbr.rel (%p341) target = $region16
        $region15: #{tpu_custom_call.1} parent=11 // pred_region
          _
        $region16: #{tpu_custom_call.1} parent=11 // pred_fallthru
          _
        // Predicated region
        $region17: #{tpu_custom_call.1} parent=11 // pred_check
          %p344 = pneg %p90
        $region18: #{tpu_custom_call.1} parent=11 // pred_check_branch
          %346 = sbr.rel (%p344) target = $region20
        $region19: #{tpu_custom_call.1} parent=11 // pred_region
          _
        $region20: #{tpu_custom_call.1} parent=11 // pred_fallthru
          _
        // Predicated region
        $region21: #{tpu_custom_call.1} parent=11 // pred_check
          %p347 = pneg %p111
        $region22: #{tpu_custom_call.1} parent=11 // pred_check_branch
          %349 = sbr.rel (%p347) target = $region24
        $region23: #{tpu_custom_call.1} parent=11 // pred_region
          _
        $region24: #{tpu_custom_call.1} parent=11 // pred_fallthru
          _
        // Predicated region
        $region25: #{tpu_custom_call.1} parent=11 // pred_check
          %p350 = pneg %p132
        $region26: #{tpu_custom_call.1} parent=11 // pred_check_branch
          %352 = sbr.rel (%p350) target = $region28
        $region27: #{tpu_custom_call.1} parent=11 // pred_region
          _
        $region28: #{tpu_custom_call.1} parent=11 // pred_fallthru
          _
        // Predicated region
        $region29: #{tpu_custom_call.1} parent=11 // pred_check
          %p353 = pneg %p153
        $region30: #{tpu_custom_call.1} parent=11 // pred_check_branch
          %355 = sbr.rel (%p353) target = $region32
        $region31: #{tpu_custom_call.1} parent=11 // pred_region
          _
        $region32: #{tpu_custom_call.1} parent=11 // pred_fallthru
          _
        // Predicated region
        $region33: #{tpu_custom_call.1} parent=11 // pred_check
          %p356 = pneg %p174
        $region34: #{tpu_custom_call.1} parent=11 // pred_check_branch
          %358 = sbr.rel (%p356) target = $region36
        $region35: #{tpu_custom_call.1} parent=11 // pred_region
          _
        $region36: #{tpu_custom_call.1} parent=11 // pred_fallthru
          _
        // Predicated region
        $region37: #{tpu_custom_call.1} parent=11 // pred_check
          %p359 = pneg %p195
        $region38: #{tpu_custom_call.1} parent=11 // pred_check_branch
          %361 = sbr.rel (%p359) target = $region40
        $region39: #{tpu_custom_call.1} parent=11 // pred_region
          _
        $region40: #{tpu_custom_call.1} parent=11 // pred_fallthru
          _
        // Predicated region
        $region41: #{tpu_custom_call.1} parent=11 // pred_check
          %p362 = pneg %p216
        $region42: #{tpu_custom_call.1} parent=11 // pred_check_branch
          %364 = sbr.rel (%p362) target = $region44
        $region43: #{tpu_custom_call.1} parent=11 // pred_region
          _
        $region44: #{tpu_custom_call.1} parent=11 // pred_fallthru
          _
        // Predicated region
        $region45: #{tpu_custom_call.1} parent=11 // pred_check
          %p365 = pneg %p237
        $region46: #{tpu_custom_call.1} parent=11 // pred_check_branch
          %367 = sbr.rel (%p365) target = $region48
        $region47: #{tpu_custom_call.1} parent=11 // pred_region
          _
        $region48: #{tpu_custom_call.1} parent=11 // pred_fallthru
          _
        // Predicated region
        $region49: #{tpu_custom_call.1} parent=11 // pred_check
          %p368 = pneg %p258
        $region50: #{tpu_custom_call.1} parent=11 // pred_check_branch
          %370 = sbr.rel (%p368) target = $region52
        $region51: #{tpu_custom_call.1} parent=11 // pred_region
          _
        $region52: #{tpu_custom_call.1} parent=11 // pred_fallthru
          _
        // Predicated region
        $region53: #{tpu_custom_call.1} parent=11 // pred_check
          %p371 = pneg %p279
        $region54: #{tpu_custom_call.1} parent=11 // pred_check_branch
          %373 = sbr.rel (%p371) target = $region56
        $region55: #{tpu_custom_call.1} parent=11 // pred_region
          _
        $region56: #{tpu_custom_call.1} parent=11 // pred_fallthru
          _
        // Predicated region
        $region57: #{tpu_custom_call.1} parent=11 // pred_check
          %p374 = pneg %p300
        $region58: #{tpu_custom_call.1} parent=11 // pred_check_branch
          %376 = sbr.rel (%p374) target = $region60
        $region59: #{tpu_custom_call.1} parent=11 // pred_region
          _
        $region60: #{tpu_custom_call.1} parent=11 // pred_fallthru
          _
      $region12: #{tpu_custom_call.1} parent=5 // pred_fallthru
        _
      %p377 = scmp.lt.s32.totalorder %s22, 2
      // Predicated region
      $region61: #{tpu_custom_call.1} parent=5 // pred_check
        %p378 = pneg %p377
      $region62: #{tpu_custom_call.1} parent=5 // pred_check_branch
        %380 = sbr.rel (%p378) target = $region64
      $region63: #{tpu_custom_call.1} parent=5 // pred_region
        // Predicated region
        $region65: #{tpu_custom_call.1} parent=63 // pred_check
          %p381 = pneg %p42
        $region66: #{tpu_custom_call.1} parent=63 // pred_check_branch
          %383 = sbr.rel (%p381) target = $region68
        $region67: #{tpu_custom_call.1} parent=63 // pred_region
          %p384 = scmp.lt.s32.totalorder %s22, 1
          %s385 = scalar_select %p384, %s22, 1
          %s386 = smul.addr %s385, 8
          %s387 = scalar_lea.vmem %s0, %s386
        $region68: #{tpu_custom_call.1} parent=63 // pred_fallthru
          _
      $region64: #{tpu_custom_call.1} parent=5 // pred_fallthru
        _
      %p388 = scmp.le.s32.totalorder 1, %s22
      %p389 = scmp.lt.s32.totalorder %s22, 3
      %p390 = pnand %p388, %p389
      %p391 = pneg %p390
      // Predicated region
      $region69: #{tpu_custom_call.1} parent=5 // pred_check
        _
      $region70: #{tpu_custom_call.1} parent=5 // pred_check_branch
        %393 = sbr.rel (%p390) target = $region72
      $region71: #{tpu_custom_call.1} parent=5 // pred_region
        %s394 = ssub.s32 %s22, 1
        %p395 = scmp.lt.s32.totalorder %s27, 1
        %s396 = scalar_select %p395, %s27, 1
        %s397 = smul.addr %s396, 8
        %s398 = scalar_lea.vmem %s0, %s397
        %p399 = pneg %p48
        %p400 = pneg %p45
        %p401 = pneg %p69
        %p402 = pneg %p66
        %p403 = pneg %p90
        %p404 = pneg %p87
        %p405 = pneg %p111
        %p406 = pneg %p108
        %p407 = pneg %p132
        %p408 = pneg %p129
        %p409 = pneg %p153
        %p410 = pneg %p150
        %p411 = pneg %p174
        %p412 = pneg %p171
        %p413 = pneg %p195
        %p414 = pneg %p192
        %p415 = pneg %p216
        %p416 = pneg %p213
        %p417 = pneg %p237
        %p418 = pneg %p234
        %p419 = pneg %p258
        %p420 = pneg %p255
        %p421 = pneg %p279
        %p422 = pneg %p276
        %p423 = pneg %p300
        %p424 = pneg %p297
        %p425 = pneg %p326
        %p426 = pneg %p323
        %s427 = sand.u32 %s313, 1
        %s428 = scalar_lea.sflag [#allocation3], %s427
        %s429 = sand.u32 %s313, 1
        %s430 = smul.addr %s429, 8
        %s431 = scalar_lea.vmem [#allocation2], %s430
        %p432 = scmp.lt.s32.totalorder %s27, 1
        %s433 = scalar_select %p432, %s27, 1
        %s434 = smul.addr %s433, 8
        %s435 = scalar_lea.vmem %s0, %s434
        %v437 = vld [vmem:[%s435] sm:$0xff]
        %v438 = vld [vmem:[%s1] sm:$0x1]
        %v439 = vld [vmem:[%s2] sm:$0x1]
        %vm440 = vcmask 261120
        %v441 = vsel %vm440, %v437, 0.0
        %442 = vadd.xlane.f32.xlu0 %v441
        %v443 = vpop.xlane.xlu0 %442
        %v444 = vrcp.pop 32.0
        %v445 = vmul.f32 %v443, %v444
        %v446 = vsub.f32 %v437, %v445
        %v447 = vmul.f32 %v446, %v446
        %v448 = vsel %vm440, %v447, 0.0
        %449 = vadd.xlane.f32.xlu0 %v448
        %v450 = vpop.xlane.xlu0 %449
        %v451 = vmul.f32 %v450, %v444
        %v452 = vadd.f32 %v451, 1e-05
        %v453 = vrsqrt.pop %v452
        %v454 = vmul.f32 %v446, %v453
        %v456 = vlaneseq
        %v457 = vshrl.u32 %v456, 7
        %v458 = vsub.s32 0, %v457
        %v459 = vrot.slane %v438, %v458
        %v461 = vmul.f32 %v454, %v459
        %v463 = vlaneseq
        %v464 = vshrl.u32 %v463, 7
        %v465 = vsub.s32 0, %v464
        %v466 = vrot.slane %v439, %v465
        %v468 = vadd.f32 %v461, %v466
        %v469 = vpack.c.bf16 %v468, %v468
        %v470 = vld [vmem:[%s3] sm:$0xf]
        %v471 = vld [vmem:[%s3 + $0x4] sm:$0xf]
        %v472 = vld [vmem:[%s3 + $0x8] sm:$0xf]
        %v473 = vld [vmem:[%s3 + $0xc] sm:$0xf]
        %v474 = vld [vmem:[%s4] sm:$0x1]
        %v476 = vlaneseq
        %v477 = vshrl.u32 %v476, 7
        %v478 = vsub.s32 0, %v477
        %v479 = vrot.slane %v474, %v478
        %v485 = vunpack.c.l.b16 %v470
        %v486 = vunpack.c.l.b16 %v471
        %v487 = vunpack.c.l.b16 %v472
        %v488 = vunpack.c.l.b16 %v473
        %v489 = vpack.c.b16 %v486, %v485
        %v490 = vpack.c.b16 %v488, %v487
        %v494 = vsel %vm440, %v469, 0
        %496 = vmatprep.subr.bf16.mxu0 0
        %497 = vmatpush1.bf16.msra.mxu0 %v489
        %498 = vmatprep.subr.bf16.mxu0 0
        %499 = vmatpush1.bf16.msra.mxu0 %v490
        %500 = vmatprep.subr.bf16.mxu0 0
        %501 = vmatpush1.bf16.msra.mxu0 0
        %502 = vmatprep.subr.bf16.mxu0 0
        %503 = vmatpush1.bf16.msra.mxu0 0
        %504 = vmatprep.subr.bf16.mxu0 0
        %505 = vmatpush1.bf16.msra.mxu0 0
        %506 = vmatprep.subr.bf16.mxu0 0
        %507 = vmatpush1.bf16.msra.mxu0 0
        %508 = vmatprep.subr.bf16.mxu0 0
        %509 = vmatpush1.bf16.msra.mxu0 0
        %510 = vmatprep.subr.bf16.mxu0 0
        %511 = vmatpush1.bf16.msra.mxu0 0
        %512 = vmatprep.subr.bf16.mxu0 0
        %513 = vmatpush1.bf16.msra.mxu0 0
        %514 = vmatprep.subr.bf16.mxu0 0
        %515 = vmatpush1.bf16.msra.mxu0 0
        %516 = vmatprep.subr.bf16.mxu0 0
        %517 = vmatpush1.bf16.msra.mxu0 0
        %518 = vmatprep.subr.bf16.mxu0 0
        %519 = vmatpush1.bf16.msra.mxu0 0
        %520 = vmatprep.subr.bf16.mxu0 0
        %521 = vmatpush1.bf16.msra.mxu0 0
        %522 = vmatprep.subr.bf16.mxu0 0
        %523 = vmatpush1.bf16.msra.mxu0 0
        %524 = vmatprep.subr.bf16.mxu0 0
        %525 = vmatpush1.bf16.msra.mxu0 0
        %526 = vmatprep.subr.bf16.mxu0 0
        %527 = vmatpush1.bf16.msra.mxu0 0
        %528 = vmatprep.mubr.bf16.mxu0 0
        %529 = vmatmul.mubr.bf16.gmra.mrb[0].mxu0 %v494
        %v530 = vpop.f32.mrb[0].mxu0
        %v531 = vadd.f32 %v479, %v530
        %v532 = vpop.f32.mrb[0].mxu0
        %v533 = vpop.f32.mrb[0].mxu0
        %v534 = vpop.f32.mrb[0].mxu0
        %535 = vdwg.mxu0
        %537 = vrot.lane.b32.xlu0 %v531, 120
        %v538 = vpop.permute.xlu0 %537
        %540 = vrot.lane.b32.xlu0 %v531, 112
        %v541 = vpop.permute.xlu0 %540
        %543 = vrot.lane.b32.xlu0 %v531, 104
        %v544 = vpop.permute.xlu0 %543
        %v546 = vcombine.low %v531, %v541
        %v547 = vcombine.high %v531, %v541
        %v549 = vunpack.c.l.s4 1983009808
        %v550 = vunpack.c.0.s8 %v549
        %v551 = vlaneseq
        %v552 = vshrl.u32 %v551, 7
        %v553 = vsub.s32 %v550, %v552
        %v554 = vrot.slane %v546, %v553
        %v556 = vunpack.c.l.s4 1983009808
        %v557 = vunpack.c.0.s8 %v556
        %v558 = vlaneseq
        %v559 = vshrl.u32 %v558, 7
        %v560 = vsub.s32 %v557, %v559
        %v561 = vrot.slane %v547, %v560
        %v562 = vcombine.low %v538, %v544
        %v563 = vcombine.high %v538, %v544
        %v565 = vunpack.c.l.s4 1983009808
        %v566 = vunpack.c.0.s8 %v565
        %v567 = vlaneseq
        %v568 = vshrl.u32 %v567, 7
        %v569 = vsub.s32 %v566, %v568
        %v570 = vrot.slane %v562, %v569
        %v572 = vunpack.c.l.s4 1983009808
        %v573 = vunpack.c.0.s8 %v572
        %v574 = vlaneseq
        %v575 = vshrl.u32 %v574, 7
        %v576 = vsub.s32 %v573, %v575
        %v577 = vrot.slane %v563, %v576
        %v578 = vcombine.low %v554, %v570
        %v579 = vcombine.high %v554, %v570
        %v581 = vunpack.c.l.s4 1934713408
        %v582 = vunpack.c.0.s8 %v581
        %v583 = vlaneseq
        %v584 = vshrl.u32 %v583, 7
        %v585 = vsub.s32 %v582, %v584
        %v586 = vrot.slane %v578, %v585
        %v588 = vunpack.c.l.s4 1934713408
        %v589 = vunpack.c.0.s8 %v588
        %v590 = vlaneseq
        %v591 = vshrl.u32 %v590, 7
        %v592 = vsub.s32 %v589, %v591
        %v593 = vrot.slane %v579, %v592
        %v594 = vcombine.low %v561, %v577
        %v595 = vcombine.high %v561, %v577
        %v597 = vunpack.c.l.s4 1934713408
        %v598 = vunpack.c.0.s8 %v597
        %v599 = vlaneseq
        %v600 = vshrl.u32 %v599, 7
        %v601 = vsub.s32 %v598, %v600
        %v602 = vrot.slane %v594, %v601
        %v604 = vunpack.c.l.s4 1934713408
        %v605 = vunpack.c.0.s8 %v604
        %v606 = vlaneseq
        %v607 = vshrl.u32 %v606, 7
        %v608 = vsub.s32 %v605, %v607
        %v609 = vrot.slane %v595, %v608
        %v610 = vcombine.high %v586, 0.0
        %v611 = vcombine.high %v593, 0.0
        %v612 = vcombine.high %v602, 0.0
        %v613 = vcombine.high %v609, 0.0
        %v614 = vcombine.low %v586, %v593
        %v616 = vunpack.c.l.s4 1983009808
        %v617 = vunpack.c.0.s8 %v616
        %v618 = vlaneseq
        %v619 = vshrl.u32 %v618, 7
        %v620 = vsub.s32 %v617, %v619
        %v621 = vrot.slane %v614, %v620
        %v622 = vcombine.low %v610, %v611
        %v624 = vunpack.c.l.s4 1983009808
        %v625 = vunpack.c.0.s8 %v624
        %v626 = vlaneseq
        %v627 = vshrl.u32 %v626, 7
        %v628 = vsub.s32 %v625, %v627
        %v629 = vrot.slane %v622, %v628
        %v630 = vcombine.low %v602, %v609
        %v632 = vunpack.c.l.s4 1983009808
        %v633 = vunpack.c.0.s8 %v632
        %v634 = vlaneseq
        %v635 = vshrl.u32 %v634, 7
        %v636 = vsub.s32 %v633, %v635
        %v637 = vrot.slane %v630, %v636
        %v638 = vcombine.low %v612, %v613
        %v640 = vunpack.c.l.s4 1983009808
        %v641 = vunpack.c.0.s8 %v640
        %v642 = vlaneseq
        %v643 = vshrl.u32 %v642, 7
        %v644 = vsub.s32 %v641, %v643
        %v645 = vrot.slane %v638, %v644
        %v646 = vcombine.low %v621, %v629
        %v647 = vcombine.high %v621, %v629
        %v649 = vunpack.c.l.s4 1934713408
        %v650 = vunpack.c.0.s8 %v649
        %v651 = vlaneseq
        %v652 = vshrl.u32 %v651, 7
        %v653 = vsub.s32 %v650, %v652
        %v654 = vrot.slane %v646, %v653
        %v656 = vunpack.c.l.s4 1934713408
        %v657 = vunpack.c.0.s8 %v656
        %v658 = vlaneseq
        %v659 = vshrl.u32 %v658, 7
        %v660 = vsub.s32 %v657, %v659
        %v661 = vrot.slane %v647, %v660
        %v662 = vcombine.low %v637, %v645
        %v663 = vcombine.high %v637, %v645
        %v665 = vunpack.c.l.s4 1934713408
        %v666 = vunpack.c.0.s8 %v665
        %v667 = vlaneseq
        %v668 = vshrl.u32 %v667, 7
        %v669 = vsub.s32 %v666, %v668
        %v670 = vrot.slane %v662, %v669
        %v672 = vunpack.c.l.s4 1934713408
        %v673 = vunpack.c.0.s8 %v672
        %v674 = vlaneseq
        %v675 = vshrl.u32 %v674, 7
        %v676 = vsub.s32 %v673, %v675
        %v677 = vrot.slane %v663, %v676
        %v678 = vcombine.low %v654, %v670
        %v679 = vcombine.high %v654, %v670
        %v680 = vcombine.low %v661, %v677
        %v681 = vcombine.high %v661, %v677
        %v682 = vpack.c.bf16 %v678, %v678
        %v683 = vpack.c.bf16 %v679, %v679
        %v684 = vpack.c.bf16 %v680, %v680
        %v685 = vpack.c.bf16 %v681, %v681
        %686 = vrot.lane.b32.xlu0 %v531, 96
        %v687 = vpop.permute.xlu0 %686
        %688 = vrot.lane.b32.xlu0 %v538, 96
        %v689 = vpop.permute.xlu0 %688
        %690 = vrot.lane.b32.xlu0 %v541, 96
        %v691 = vpop.permute.xlu0 %690
        %692 = vrot.lane.b32.xlu0 %v544, 96
        %v693 = vpop.permute.xlu0 %692
        %v698 = vcombine.low %v687, %v691
        %v699 = vcombine.high %v687, %v691
        %v701 = vunpack.c.l.s4 1983009808
        %v702 = vunpack.c.0.s8 %v701
        %v703 = vlaneseq
        %v704 = vshrl.u32 %v703, 7
        %v705 = vsub.s32 %v702, %v704
        %v706 = vrot.slane %v698, %v705
        %v708 = vunpack.c.l.s4 1983009808
        %v709 = vunpack.c.0.s8 %v708
        %v710 = vlaneseq
        %v711 = vshrl.u32 %v710, 7
        %v712 = vsub.s32 %v709, %v711
        %v713 = vrot.slane %v699, %v712
        %v714 = vcombine.low %v689, %v693
        %v715 = vcombine.high %v689, %v693
        %v717 = vunpack.c.l.s4 1983009808
        %v718 = vunpack.c.0.s8 %v717
        %v719 = vlaneseq
        %v720 = vshrl.u32 %v719, 7
        %v721 = vsub.s32 %v718, %v720
        %v722 = vrot.slane %v714, %v721
        %v724 = vunpack.c.l.s4 1983009808
        %v725 = vunpack.c.0.s8 %v724
        %v726 = vlaneseq
        %v727 = vshrl.u32 %v726, 7
        %v728 = vsub.s32 %v725, %v727
        %v729 = vrot.slane %v715, %v728
        %v730 = vcombine.low %v706, %v722
        %v731 = vcombine.high %v706, %v722
        %v733 = vunpack.c.l.s4 1934713408
        %v734 = vunpack.c.0.s8 %v733
        %v735 = vlaneseq
        %v736 = vshrl.u32 %v735, 7
        %v737 = vsub.s32 %v734, %v736
        %v738 = vrot.slane %v730, %v737
        %v740 = vunpack.c.l.s4 1934713408
        %v741 = vunpack.c.0.s8 %v740
        %v742 = vlaneseq
        %v743 = vshrl.u32 %v742, 7
        %v744 = vsub.s32 %v741, %v743
        %v745 = vrot.slane %v731, %v744
        %v746 = vcombine.low %v713, %v729
        %v747 = vcombine.high %v713, %v729
        %v749 = vunpack.c.l.s4 1934713408
        %v750 = vunpack.c.0.s8 %v749
        %v751 = vlaneseq
        %v752 = vshrl.u32 %v751, 7
        %v753 = vsub.s32 %v750, %v752
        %v754 = vrot.slane %v746, %v753
        %v756 = vunpack.c.l.s4 1934713408
        %v757 = vunpack.c.0.s8 %v756
        %v758 = vlaneseq
        %v759 = vshrl.u32 %v758, 7
        %v760 = vsub.s32 %v757, %v759
        %v761 = vrot.slane %v747, %v760
        %v762 = vcombine.high %v738, 0.0
        %v763 = vcombine.high %v745, 0.0
        %v764 = vcombine.high %v754, 0.0
        %v765 = vcombine.high %v761, 0.0
        %v766 = vcombine.low %v738, %v745
        %v768 = vunpack.c.l.s4 1983009808
        %v769 = vunpack.c.0.s8 %v768
        %v770 = vlaneseq
        %v771 = vshrl.u32 %v770, 7
        %v772 = vsub.s32 %v769, %v771
        %v773 = vrot.slane %v766, %v772
        %v774 = vcombine.low %v762, %v763
        %v776 = vunpack.c.l.s4 1983009808
        %v777 = vunpack.c.0.s8 %v776
        %v778 = vlaneseq
        %v779 = vshrl.u32 %v778, 7
        %v780 = vsub.s32 %v777, %v779
        %v781 = vrot.slane %v774, %v780
        %v782 = vcombine.low %v754, %v761
        %v784 = vunpack.c.l.s4 1983009808
        %v785 = vunpack.c.0.s8 %v784
        %v786 = vlaneseq
        %v787 = vshrl.u32 %v786, 7
        %v788 = vsub.s32 %v785, %v787
        %v789 = vrot.slane %v782, %v788
        %v790 = vcombine.low %v764, %v765
        %v792 = vunpack.c.l.s4 1983009808
        %v793 = vunpack.c.0.s8 %v792
        %v794 = vlaneseq
        %v795 = vshrl.u32 %v794, 7
        %v796 = vsub.s32 %v793, %v795
        %v797 = vrot.slane %v790, %v796
        %v798 = vcombine.low %v773, %v781
        %v799 = vcombine.high %v773, %v781
        %v801 = vunpack.c.l.s4 1934713408
        %v802 = vunpack.c.0.s8 %v801
        %v803 = vlaneseq
        %v804 = vshrl.u32 %v803, 7
        %v805 = vsub.s32 %v802, %v804
        %v806 = vrot.slane %v798, %v805
        %v808 = vunpack.c.l.s4 1934713408
        %v809 = vunpack.c.0.s8 %v808
        %v810 = vlaneseq
        %v811 = vshrl.u32 %v810, 7
        %v812 = vsub.s32 %v809, %v811
        %v813 = vrot.slane %v799, %v812
        %v814 = vcombine.low %v789, %v797
        %v815 = vcombine.high %v789, %v797
        %v817 = vunpack.c.l.s4 1934713408
        %v818 = vunpack.c.0.s8 %v817
        %v819 = vlaneseq
        %v820 = vshrl.u32 %v819, 7
        %v821 = vsub.s32 %v818, %v820
        %v822 = vrot.slane %v814, %v821
        %v824 = vunpack.c.l.s4 1934713408
        %v825 = vunpack.c.0.s8 %v824
        %v826 = vlaneseq
        %v827 = vshrl.u32 %v826, 7
        %v828 = vsub.s32 %v825, %v827
        %v829 = vrot.slane %v815, %v828
        %v830 = vcombine.low %v806, %v822
        %v831 = vcombine.high %v806, %v822
        %v832 = vcombine.low %v813, %v829
        %v833 = vcombine.high %v813, %v829
        %v834 = vpack.c.bf16 %v830, %v830
        %v835 = vpack.c.bf16 %v831, %v831
        %v836 = vpack.c.bf16 %v832, %v832
        %v837 = vpack.c.bf16 %v833, %v833
        %838 = vrot.lane.b32.xlu0 %v531, 64
        %v839 = vpop.permute.xlu0 %838
        %840 = vrot.lane.b32.xlu0 %v538, 64
        %v841 = vpop.permute.xlu0 %840
        %842 = vrot.lane.b32.xlu0 %v541, 64
        %v843 = vpop.permute.xlu0 %842
        %844 = vrot.lane.b32.xlu0 %v544, 64
        %v845 = vpop.permute.xlu0 %844
        %v850 = vcombine.low %v839, %v843
        %v851 = vcombine.high %v839, %v843
        %v853 = vunpack.c.l.s4 1983009808
        %v854 = vunpack.c.0.s8 %v853
        %v855 = vlaneseq
        %v856 = vshrl.u32 %v855, 7
        %v857 = vsub.s32 %v854, %v856
        %v858 = vrot.slane %v850, %v857
        %v860 = vunpack.c.l.s4 1983009808
        %v861 = vunpack.c.0.s8 %v860
        %v862 = vlaneseq
        %v863 = vshrl.u32 %v862, 7
        %v864 = vsub.s32 %v861, %v863
        %v865 = vrot.slane %v851, %v864
        %v866 = vcombine.low %v841, %v845
        %v867 = vcombine.high %v841, %v845
        %v869 = vunpack.c.l.s4 1983009808
        %v870 = vunpack.c.0.s8 %v869
        %v871 = vlaneseq
        %v872 = vshrl.u32 %v871, 7
        %v873 = vsub.s32 %v870, %v872
        %v874 = vrot.slane %v866, %v873
        %v876 = vunpack.c.l.s4 1983009808
        %v877 = vunpack.c.0.s8 %v876
        %v878 = vlaneseq
        %v879 = vshrl.u32 %v878, 7
        %v880 = vsub.s32 %v877, %v879
        %v881 = vrot.slane %v867, %v880
        %v882 = vcombine.low %v858, %v874
        %v883 = vcombine.high %v858, %v874
        %v885 = vunpack.c.l.s4 1934713408
        %v886 = vunpack.c.0.s8 %v885
        %v887 = vlaneseq
        %v888 = vshrl.u32 %v887, 7
        %v889 = vsub.s32 %v886, %v888
        %v890 = vrot.slane %v882, %v889
        %v892 = vunpack.c.l.s4 1934713408
        %v893 = vunpack.c.0.s8 %v892
        %v894 = vlaneseq
        %v895 = vshrl.u32 %v894, 7
        %v896 = vsub.s32 %v893, %v895
        %v897 = vrot.slane %v883, %v896
        %v898 = vcombine.low %v865, %v881
        %v899 = vcombine.high %v865, %v881
        %v901 = vunpack.c.l.s4 1934713408
        %v902 = vunpack.c.0.s8 %v901
        %v903 = vlaneseq
        %v904 = vshrl.u32 %v903, 7
        %v905 = vsub.s32 %v902, %v904
        %v906 = vrot.slane %v898, %v905
        %v908 = vunpack.c.l.s4 1934713408
        %v909 = vunpack.c.0.s8 %v908
        %v910 = vlaneseq
        %v911 = vshrl.u32 %v910, 7
        %v912 = vsub.s32 %v909, %v911
        %v913 = vrot.slane %v899, %v912
        %v914 = vcombine.high %v890, 0.0
        %v915 = vcombine.high %v897, 0.0
        %v916 = vcombine.high %v906, 0.0
        %v917 = vcombine.high %v913, 0.0
        %v918 = vcombine.low %v890, %v897
        %v920 = vunpack.c.l.s4 1983009808
        %v921 = vunpack.c.0.s8 %v920
        %v922 = vlaneseq
        %v923 = vshrl.u32 %v922, 7
        %v924 = vsub.s32 %v921, %v923
        %v925 = vrot.slane %v918, %v924
        %v926 = vcombine.low %v914, %v915
        %v928 = vunpack.c.l.s4 1983009808
        %v929 = vunpack.c.0.s8 %v928
        %v930 = vlaneseq
        %v931 = vshrl.u32 %v930, 7
        %v932 = vsub.s32 %v929, %v931
        %v933 = vrot.slane %v926, %v932
        %v934 = vcombine.low %v906, %v913
        %v936 = vunpack.c.l.s4 1983009808
        %v937 = vunpack.c.0.s8 %v936
        %v938 = vlaneseq
        %v939 = vshrl.u32 %v938, 7
        %v940 = vsub.s32 %v937, %v939
        %v941 = vrot.slane %v934, %v940
        %v942 = vcombine.low %v916, %v917
        %v944 = vunpack.c.l.s4 1983009808
        %v945 = vunpack.c.0.s8 %v944
        %v946 = vlaneseq
        %v947 = vshrl.u32 %v946, 7
        %v948 = vsub.s32 %v945, %v947
        %v949 = vrot.slane %v942, %v948
        %v950 = vcombine.low %v925, %v933
        %v951 = vcombine.high %v925, %v933
        %v953 = vunpack.c.l.s4 1934713408
        %v954 = vunpack.c.0.s8 %v953
        %v955 = vlaneseq
        %v956 = vshrl.u32 %v955, 7
        %v957 = vsub.s32 %v954, %v956
        %v958 = vrot.slane %v950, %v957
        %v960 = vunpack.c.l.s4 1934713408
        %v961 = vunpack.c.0.s8 %v960
        %v962 = vlaneseq
        %v963 = vshrl.u32 %v962, 7
        %v964 = vsub.s32 %v961, %v963
        %v965 = vrot.slane %v951, %v964
        %v966 = vcombine.low %v941, %v949
        %v967 = vcombine.high %v941, %v949
        %v969 = vunpack.c.l.s4 1934713408
        %v970 = vunpack.c.0.s8 %v969
        %v971 = vlaneseq
        %v972 = vshrl.u32 %v971, 7
        %v973 = vsub.s32 %v970, %v972
        %v974 = vrot.slane %v966, %v973
        %v976 = vunpack.c.l.s4 1934713408
        %v977 = vunpack.c.0.s8 %v976
        %v978 = vlaneseq
        %v979 = vshrl.u32 %v978, 7
        %v980 = vsub.s32 %v977, %v979
        %v981 = vrot.slane %v967, %v980
        %v982 = vcombine.low %v958, %v974
        %v983 = vcombine.high %v958, %v974
        %v984 = vcombine.low %v965, %v981
        %v985 = vcombine.high %v965, %v981
        %v986 = vpack.c.bf16 %v982, %v982
        %v987 = vpack.c.bf16 %v983, %v983
        %v988 = vpack.c.bf16 %v984, %v984
        %v989 = vpack.c.bf16 %v985, %v985
        %vm990 = vcmask 64512
        %v992 = vsel %vm990, %v682, 0
        %v995 = vsel %vm990, %v834, 0
        %997 = vmatprep.subr.bf16.mxu0 0
        %998 = vmatpush1.bf16.xpose.msra.mxu0 %v995
        %999 = vmatprep.subr.bf16.mxu0 0
        %1000 = vmatpush1.bf16.xpose.msra.mxu0 0
        %1001 = vmatprep.subr.bf16.mxu0 0
        %1002 = vmatpush1.bf16.xpose.msra.mxu0 0
        %1003 = vmatprep.subr.bf16.mxu0 0
        %1004 = vmatpush1.bf16.xpose.msra.mxu0 0
        %1005 = vmatprep.subr.bf16.mxu0 0
        %1006 = vmatpush1.bf16.xpose.msra.mxu0 0
        %1007 = vmatprep.subr.bf16.mxu0 0
        %1008 = vmatpush1.bf16.xpose.msra.mxu0 0
        %1009 = vmatprep.subr.bf16.mxu0 0
        %1010 = vmatpush1.bf16.xpose.msra.mxu0 0
        %1011 = vmatprep.subr.bf16.mxu0 0
        %1012 = vmatpush1.bf16.xpose.msra.mxu0 0
        %1013 = vmatprep.subr.bf16.mxu0 0
        %1014 = vmatpush1.bf16.xpose.msra.mxu0 0
        %1015 = vmatprep.subr.bf16.mxu0 0
        %1016 = vmatpush1.bf16.xpose.msra.mxu0 0
        %1017 = vmatprep.subr.bf16.mxu0 0
        %1018 = vmatpush1.bf16.xpose.msra.mxu0 0
        %1019 = vmatprep.subr.bf16.mxu0 0
        %1020 = vmatpush1.bf16.xpose.msra.mxu0 0
        %1021 = vmatprep.subr.bf16.mxu0 0
        %1022 = vmatpush1.bf16.xpose.msra.mxu0 0
        %1023 = vmatprep.subr.bf16.mxu0 0
        %1024 = vmatpush1.bf16.xpose.msra.mxu0 0
        %1025 = vmatprep.subr.bf16.mxu0 0
        %1026 = vmatpush1.bf16.xpose.msra.mxu0 0
        %1027 = vmatprep.subr.bf16.mxu0 0
        %1028 = vmatpush1.bf16.xpose.msra.mxu0 0
        %1029 = vmatprep.mubr.bf16.mxu0 0
        %1030 = vmatmul.mubr.bf16.gmra.mrb[0].mxu0 %v992
        %v1031 = vpop.f32.mrb[0].mxu0
        %v1032 = vadd.f32 0.0, %v1031
        %v1033 = vpop.f32.mrb[0].mxu0
        %v1034 = vpop.f32.mrb[0].mxu0
        %v1035 = vpop.f32.mrb[0].mxu0
        %1036 = vdwg.mxu0
        %v1038 = vsel %vm990, %v683, 0
        %v1041 = vsel %vm990, %v835, 0
        %1043 = vmatprep.subr.bf16.mxu0 0
        %1044 = vmatpush1.bf16.xpose.msra.mxu0 %v1041
        %1045 = vmatprep.subr.bf16.mxu0 0
        %1046 = vmatpush1.bf16.xpose.msra.mxu0 0
        %1047 = vmatprep.subr.bf16.mxu0 0
        %1048 = vmatpush1.bf16.xpose.msra.mxu0 0
        %1049 = vmatprep.subr.bf16.mxu0 0
        %1050 = vmatpush1.bf16.xpose.msra.mxu0 0
        %1051 = vmatprep.subr.bf16.mxu0 0
        %1052 = vmatpush1.bf16.xpose.msra.mxu0 0
        %1053 = vmatprep.subr.bf16.mxu0 0
        %1054 = vmatpush1.bf16.xpose.msra.mxu0 0
        %1055 = vmatprep.subr.bf16.mxu0 0
        %1056 = vmatpush1.bf16.xpose.msra.mxu0 0
        %1057 = vmatprep.subr.bf16.mxu0 0
        %1058 = vmatpush1.bf16.xpose.msra.mxu0 0
        %1059 = vmatprep.subr.bf16.mxu0 0
        %1060 = vmatpush1.bf16.xpose.msra.mxu0 0
        %1061 = vmatprep.subr.bf16.mxu0 0
        %1062 = vmatpush1.bf16.xpose.msra.mxu0 0
        %1063 = vmatprep.subr.bf16.mxu0 0
        %1064 = vmatpush1.bf16.xpose.msra.mxu0 0
        %1065 = vmatprep.subr.bf16.mxu0 0
        %1066 = vmatpush1.bf16.xpose.msra.mxu0 0
        %1067 = vmatprep.subr.bf16.mxu0 0
        %1068 = vmatpush1.bf16.xpose.msra.mxu0 0
        %1069 = vmatprep.subr.bf16.mxu0 0
        %1070 = vmatpush1.bf16.xpose.msra.mxu0 0
        %1071 = vmatprep.subr.bf16.mxu0 0
        %1072 = vmatpush1.bf16.xpose.msra.mxu0 0
        %1073 = vmatprep.subr.bf16.mxu0 0
        %1074 = vmatpush1.bf16.xpose.msra.mxu0 0
        %1075 = vmatprep.mubr.bf16.mxu0 0
        %1076 = vmatmul.mubr.bf16.gmra.mrb[0].mxu0 %v1038
        %v1077 = vpop.f32.mrb[0].mxu0
        %v1078 = vadd.f32 0.0, %v1077
        %v1079 = vpop.f32.mrb[0].mxu0
        %v1080 = vpop.f32.mrb[0].mxu0
        %v1081 = vpop.f32.mrb[0].mxu0
        %1082 = vdwg.mxu0
        %v1084 = vsel %vm990, %v684, 0
        %v1087 = vsel %vm990, %v836, 0
        %1089 = vmatprep.subr.bf16.mxu0 0
        %1090 = vmatpush1.bf16.xpose.msra.mxu0 %v1087
        %1091 = vmatprep.subr.bf16.mxu0 0
        %1092 = vmatpush1.bf16.xpose.msra.mxu0 0
        %1093 = vmatprep.subr.bf16.mxu0 0
        %1094 = vmatpush1.bf16.xpose.msra.mxu0 0
        %1095 = vmatprep.subr.bf16.mxu0 0
        %1096 = vmatpush1.bf16.xpose.msra.mxu0 0
        %1097 = vmatprep.subr.bf16.mxu0 0
        %1098 = vmatpush1.bf16.xpose.msra.mxu0 0
        %1099 = vmatprep.subr.bf16.mxu0 0
        %1100 = vmatpush1.bf16.xpose.msra.mxu0 0
        %1101 = vmatprep.subr.bf16.mxu0 0
        %1102 = vmatpush1.bf16.xpose.msra.mxu0 0
        %1103 = vmatprep.subr.bf16.mxu0 0
        %1104 = vmatpush1.bf16.xpose.msra.mxu0 0
        %1105 = vmatprep.subr.bf16.mxu0 0
        %1106 = vmatpush1.bf16.xpose.msra.mxu0 0
        %1107 = vmatprep.subr.bf16.mxu0 0
        %1108 = vmatpush1.bf16.xpose.msra.mxu0 0
        %1109 = vmatprep.subr.bf16.mxu0 0
        %1110 = vmatpush1.bf16.xpose.msra.mxu0 0
        %1111 = vmatprep.subr.bf16.mxu0 0
        %1112 = vmatpush1.bf16.xpose.msra.mxu0 0
        %1113 = vmatprep.subr.bf16.mxu0 0
        %1114 = vmatpush1.bf16.xpose.msra.mxu0 0
        %1115 = vmatprep.subr.bf16.mxu0 0
        %1116 = vmatpush1.bf16.xpose.msra.mxu0 0
        %1117 = vmatprep.subr.bf16.mxu0 0
        %1118 = vmatpush1.bf16.xpose.msra.mxu0 0
        %1119 = vmatprep.subr.bf16.mxu0 0
        %1120 = vmatpush1.bf16.xpose.msra.mxu0 0
        %1121 = vmatprep.mubr.bf16.mxu0 0
        %1122 = vmatmul.mubr.bf16.gmra.mrb[0].mxu0 %v1084
        %v1123 = vpop.f32.mrb[0].mxu0
        %v1124 = vadd.f32 0.0, %v1123
        %v1125 = vpop.f32.mrb[0].mxu0
        %v1126 = vpop.f32.mrb[0].mxu0
        %v1127 = vpop.f32.mrb[0].mxu0
        %1128 = vdwg.mxu0
        %v1130 = vsel %vm990, %v685, 0
        %v1133 = vsel %vm990, %v837, 0
        %1135 = vmatprep.subr.bf16.mxu0 0
        %1136 = vmatpush1.bf16.xpose.msra.mxu0 %v1133
        %1137 = vmatprep.subr.bf16.mxu0 0
        %1138 = vmatpush1.bf16.xpose.msra.mxu0 0
        %1139 = vmatprep.subr.bf16.mxu0 0
        %1140 = vmatpush1.bf16.xpose.msra.mxu0 0
        %1141 = vmatprep.subr.bf16.mxu0 0
        %1142 = vmatpush1.bf16.xpose.msra.mxu0 0
        %1143 = vmatprep.subr.bf16.mxu0 0
        %1144 = vmatpush1.bf16.xpose.msra.mxu0 0
        %1145 = vmatprep.subr.bf16.mxu0 0
        %1146 = vmatpush1.bf16.xpose.msra.mxu0 0
        %1147 = vmatprep.subr.bf16.mxu0 0
        %1148 = vmatpush1.bf16.xpose.msra.mxu0 0
        %1149 = vmatprep.subr.bf16.mxu0 0
        %1150 = vmatpush1.bf16.xpose.msra.mxu0 0
        %1151 = vmatprep.subr.bf16.mxu0 0
        %1152 = vmatpush1.bf16.xpose.msra.mxu0 0
        %1153 = vmatprep.subr.bf16.mxu0 0
        %1154 = vmatpush1.bf16.xpose.msra.mxu0 0
        %1155 = vmatprep.subr.bf16.mxu0 0
        %1156 = vmatpush1.bf16.xpose.msra.mxu0 0
        %1157 = vmatprep.subr.bf16.mxu0 0
        %1158 = vmatpush1.bf16.xpose.msra.mxu0 0
        %1159 = vmatprep.subr.bf16.mxu0 0
        %1160 = vmatpush1.bf16.xpose.msra.mxu0 0
        %1161 = vmatprep.subr.bf16.mxu0 0
        %1162 = vmatpush1.bf16.xpose.msra.mxu0 0
        %1163 = vmatprep.subr.bf16.mxu0 0
        %1164 = vmatpush1.bf16.xpose.msra.mxu0 0
        %1165 = vmatprep.subr.bf16.mxu0 0
        %1166 = vmatpush1.bf16.xpose.msra.mxu0 0
        %1167 = vmatprep.mubr.bf16.mxu0 0
        %1168 = vmatmul.mubr.bf16.gmra.mrb[0].mxu0 %v1130
        %v1169 = vpop.f32.mrb[0].mxu0
        %v1170 = vadd.f32 0.0, %v1169
        %v1171 = vpop.f32.mrb[0].mxu0
        %v1172 = vpop.f32.mrb[0].mxu0
        %v1173 = vpop.f32.mrb[0].mxu0
        %1174 = vdwg.mxu0
        %v1175 = vlaneseq
        %v1176 = vshrl.u32 %v1175, 7
        %v1177 = vlaneseq
        %v1178 = vand.u32 %v1177, 127
        %vm1179 = vcmp.ge.s32.totalorder %v1176, %v1178
        %v1180 = vsel %vm1179, 1, 0
        %vm1181 = vcmp.eq.s32.totalorder %v1180, 1
        %v1182 = vsel %vm1181, %v1032, -10000.0
        %v1183 = vsel %vm1181, %v1078, -10000.0
        %v1184 = vsel %vm1181, %v1124, -10000.0
        %v1185 = vsel %vm1181, %v1170, -10000.0
        %v1186 = vsel %vm990, %v1182, -inf
        %1187 = vmax.xlane.f32.xlu0 %v1186
        %v1188 = vpop.xlane.xlu0 %1187
        %v1189 = vsel %vm990, %v1183, -inf
        %1190 = vmax.xlane.f32.xlu0 %v1189
        %v1191 = vpop.xlane.xlu0 %1190
        %v1192 = vsel %vm990, %v1184, -inf
        %1193 = vmax.xlane.f32.xlu0 %v1192
        %v1194 = vpop.xlane.xlu0 %1193
        %v1195 = vsel %vm990, %v1185, -inf
        %1196 = vmax.xlane.f32.xlu0 %v1195
        %v1197 = vpop.xlane.xlu0 %1196
        %v1198 = vsub.f32 %v1182, %v1188
        %v1199 = vsub.f32 %v1183, %v1191
        %v1200 = vsub.f32 %v1184, %v1194
        %v1201 = vsub.f32 %v1185, %v1197
        %v1202 = vmul.f32 %v1198, 1.442695
        %v1203 = vpow.pop %v1202
        %v1204 = vmul.f32 %v1199, 1.442695
        %v1205 = vpow.pop %v1204
        %v1206 = vmul.f32 %v1200, 1.442695
        %v1207 = vpow.pop %v1206
        %v1208 = vmul.f32 %v1201, 1.442695
        %v1209 = vpow.pop %v1208
        %v1210 = vsel %vm990, %v1203, 0.0
        %1211 = vadd.xlane.f32.xlu0 %v1210
        %v1212 = vpop.xlane.xlu0 %1211
        %v1213 = vsel %vm990, %v1205, 0.0
        %1214 = vadd.xlane.f32.xlu0 %v1213
        %v1215 = vpop.xlane.xlu0 %1214
        %v1216 = vsel %vm990, %v1207, 0.0
        %1217 = vadd.xlane.f32.xlu0 %v1216
        %v1218 = vpop.xlane.xlu0 %1217
        %v1219 = vsel %vm990, %v1209, 0.0
        %1220 = vadd.xlane.f32.xlu0 %v1219
        %v1221 = vpop.xlane.xlu0 %1220
        %v1222 = vrcp.pop %v1212
        %v1223 = vrcp.pop %v1215
        %v1224 = vrcp.pop %v1218
        %v1225 = vrcp.pop %v1221
        %v1226 = vmul.f32 %v1203, %v1222
        %v1227 = vmul.f32 %v1205, %v1223
        %v1228 = vmul.f32 %v1207, %v1224
        %v1229 = vmul.f32 %v1209, %v1225
        %v1230 = vpack.c.bf16 %v1226, %v1226
        %v1231 = vpack.c.bf16 %v1227, %v1227
        %v1232 = vpack.c.bf16 %v1228, %v1228
        %v1233 = vpack.c.bf16 %v1229, %v1229
        %v1235 = vsel %vm990, %v1230, 0
        %vm1237 = vcmask 1043456
        %v1239 = vsel %vm1237, %v986, 0
        %1241 = vmatprep.subr.bf16.mxu0 0
        %1242 = vmatpush1.bf16.msra.mxu0 %v1239
        %1243 = vmatprep.subr.bf16.mxu0 0
        %1244 = vmatpush1.bf16.msra.mxu0 0
        %1245 = vmatprep.subr.bf16.mxu0 0
        %1246 = vmatpush1.bf16.msra.mxu0 0
        %1247 = vmatprep.subr.bf16.mxu0 0
        %1248 = vmatpush1.bf16.msra.mxu0 0
        %1249 = vmatprep.subr.bf16.mxu0 0
        %1250 = vmatpush1.bf16.msra.mxu0 0
        %1251 = vmatprep.subr.bf16.mxu0 0
        %1252 = vmatpush1.bf16.msra.mxu0 0
        %1253 = vmatprep.subr.bf16.mxu0 0
        %1254 = vmatpush1.bf16.msra.mxu0 0
        %1255 = vmatprep.subr.bf16.mxu0 0
        %1256 = vmatpush1.bf16.msra.mxu0 0
        %1257 = vmatprep.subr.bf16.mxu0 0
        %1258 = vmatpush1.bf16.msra.mxu0 0
        %1259 = vmatprep.subr.bf16.mxu0 0
        %1260 = vmatpush1.bf16.msra.mxu0 0
        %1261 = vmatprep.subr.bf16.mxu0 0
        %1262 = vmatpush1.bf16.msra.mxu0 0
        %1263 = vmatprep.subr.bf16.mxu0 0
        %1264 = vmatpush1.bf16.msra.mxu0 0
        %1265 = vmatprep.subr.bf16.mxu0 0
        %1266 = vmatpush1.bf16.msra.mxu0 0
        %1267 = vmatprep.subr.bf16.mxu0 0
        %1268 = vmatpush1.bf16.msra.mxu0 0
        %1269 = vmatprep.subr.bf16.mxu0 0
        %1270 = vmatpush1.bf16.msra.mxu0 0
        %1271 = vmatprep.subr.bf16.mxu0 0
        %1272 = vmatpush1.bf16.msra.mxu0 0
        %1273 = vmatprep.mubr.bf16.mxu0 0
        %1274 = vmatmul.mubr.bf16.gmra.mrb[0].mxu0 %v1235
        %v1275 = vpop.f32.mrb[0].mxu0
        %v1276 = vadd.f32 0.0, %v1275
        %v1277 = vpop.f32.mrb[0].mxu0
        %v1278 = vpop.f32.mrb[0].mxu0
        %v1279 = vpop.f32.mrb[0].mxu0
        %1280 = vdwg.mxu0
        %v1282 = vsel %vm990, %v1231, 0
        %v1285 = vsel %vm1237, %v987, 0
        %1287 = vmatprep.subr.bf16.mxu0 0
        %1288 = vmatpush1.bf16.msra.mxu0 %v1285
        %1289 = vmatprep.subr.bf16.mxu0 0
        %1290 = vmatpush1.bf16.msra.mxu0 0
        %1291 = vmatprep.subr.bf16.mxu0 0
        %1292 = vmatpush1.bf16.msra.mxu0 0
        %1293 = vmatprep.subr.bf16.mxu0 0
        %1294 = vmatpush1.bf16.msra.mxu0 0
        %1295 = vmatprep.subr.bf16.mxu0 0
        %1296 = vmatpush1.bf16.msra.mxu0 0
        %1297 = vmatprep.subr.bf16.mxu0 0
        %1298 = vmatpush1.bf16.msra.mxu0 0
        %1299 = vmatprep.subr.bf16.mxu0 0
        %1300 = vmatpush1.bf16.msra.mxu0 0
        %1301 = vmatprep.subr.bf16.mxu0 0
        %1302 = vmatpush1.bf16.msra.mxu0 0
        %1303 = vmatprep.subr.bf16.mxu0 0
        %1304 = vmatpush1.bf16.msra.mxu0 0
        %1305 = vmatprep.subr.bf16.mxu0 0
        %1306 = vmatpush1.bf16.msra.mxu0 0
        %1307 = vmatprep.subr.bf16.mxu0 0
        %1308 = vmatpush1.bf16.msra.mxu0 0
        %1309 = vmatprep.subr.bf16.mxu0 0
        %1310 = vmatpush1.bf16.msra.mxu0 0
        %1311 = vmatprep.subr.bf16.mxu0 0
        %1312 = vmatpush1.bf16.msra.mxu0 0
        %1313 = vmatprep.subr.bf16.mxu0 0
        %1314 = vmatpush1.bf16.msra.mxu0 0
        %1315 = vmatprep.subr.bf16.mxu0 0
        %1316 = vmatpush1.bf16.msra.mxu0 0
        %1317 = vmatprep.subr.bf16.mxu0 0
        %1318 = vmatpush1.bf16.msra.mxu0 0
        %1319 = vmatprep.mubr.bf16.mxu0 0
        %1320 = vmatmul.mubr.bf16.gmra.mrb[0].mxu0 %v1282
        %v1321 = vpop.f32.mrb[0].mxu0
        %v1322 = vadd.f32 0.0, %v1321
        %v1323 = vpop.f32.mrb[0].mxu0
        %v1324 = vpop.f32.mrb[0].mxu0
        %v1325 = vpop.f32.mrb[0].mxu0
        %1326 = vdwg.mxu0
        %v1328 = vsel %vm990, %v1232, 0
        %v1331 = vsel %vm1237, %v988, 0
        %1333 = vmatprep.subr.bf16.mxu0 0
        %1334 = vmatpush1.bf16.msra.mxu0 %v1331
        %1335 = vmatprep.subr.bf16.mxu0 0
        %1336 = vmatpush1.bf16.msra.mxu0 0
        %1337 = vmatprep.subr.bf16.mxu0 0
        %1338 = vmatpush1.bf16.msra.mxu0 0
        %1339 = vmatprep.subr.bf16.mxu0 0
        %1340 = vmatpush1.bf16.msra.mxu0 0
        %1341 = vmatprep.subr.bf16.mxu0 0
        %1342 = vmatpush1.bf16.msra.mxu0 0
        %1343 = vmatprep.subr.bf16.mxu0 0
        %1344 = vmatpush1.bf16.msra.mxu0 0
        %1345 = vmatprep.subr.bf16.mxu0 0
        %1346 = vmatpush1.bf16.msra.mxu0 0
        %1347 = vmatprep.subr.bf16.mxu0 0
        %1348 = vmatpush1.bf16.msra.mxu0 0
        %1349 = vmatprep.subr.bf16.mxu0 0
        %1350 = vmatpush1.bf16.msra.mxu0 0
        %1351 = vmatprep.subr.bf16.mxu0 0
        %1352 = vmatpush1.bf16.msra.mxu0 0
        %1353 = vmatprep.subr.bf16.mxu0 0
        %1354 = vmatpush1.bf16.msra.mxu0 0
        %1355 = vmatprep.subr.bf16.mxu0 0
        %1356 = vmatpush1.bf16.msra.mxu0 0
        %1357 = vmatprep.subr.bf16.mxu0 0
        %1358 = vmatpush1.bf16.msra.mxu0 0
        %1359 = vmatprep.subr.bf16.mxu0 0
        %1360 = vmatpush1.bf16.msra.mxu0 0
        %1361 = vmatprep.subr.bf16.mxu0 0
        %1362 = vmatpush1.bf16.msra.mxu0 0
        %1363 = vmatprep.subr.bf16.mxu0 0
        %1364 = vmatpush1.bf16.msra.mxu0 0
        %1365 = vmatprep.mubr.bf16.mxu0 0
        %1366 = vmatmul.mubr.bf16.gmra.mrb[0].mxu0 %v1328
        %v1367 = vpop.f32.mrb[0].mxu0
        %v1368 = vadd.f32 0.0, %v1367
        %v1369 = vpop.f32.mrb[0].mxu0
        %v1370 = vpop.f32.mrb[0].mxu0
        %v1371 = vpop.f32.mrb[0].mxu0
        %1372 = vdwg.mxu0
        %v1374 = vsel %vm990, %v1233, 0
        %v1377 = vsel %vm1237, %v989, 0
        %1379 = vmatprep.subr.bf16.mxu0 0
        %1380 = vmatpush1.bf16.msra.mxu0 %v1377
        %1381 = vmatprep.subr.bf16.mxu0 0
        %1382 = vmatpush1.bf16.msra.mxu0 0
        %1383 = vmatprep.subr.bf16.mxu0 0
        %1384 = vmatpush1.bf16.msra.mxu0 0
        %1385 = vmatprep.subr.bf16.mxu0 0
        %1386 = vmatpush1.bf16.msra.mxu0 0
        %1387 = vmatprep.subr.bf16.mxu0 0
        %1388 = vmatpush1.bf16.msra.mxu0 0
        %1389 = vmatprep.subr.bf16.mxu0 0
        %1390 = vmatpush1.bf16.msra.mxu0 0
        %1391 = vmatprep.subr.bf16.mxu0 0
        %1392 = vmatpush1.bf16.msra.mxu0 0
        %1393 = vmatprep.subr.bf16.mxu0 0
        %1394 = vmatpush1.bf16.msra.mxu0 0
        %1395 = vmatprep.subr.bf16.mxu0 0
        %1396 = vmatpush1.bf16.msra.mxu0 0
        %1397 = vmatprep.subr.bf16.mxu0 0
        %1398 = vmatpush1.bf16.msra.mxu0 0
        %1399 = vmatprep.subr.bf16.mxu0 0
        %1400 = vmatpush1.bf16.msra.mxu0 0
        %1401 = vmatprep.subr.bf16.mxu0 0
        %1402 = vmatpush1.bf16.msra.mxu0 0
        %1403 = vmatprep.subr.bf16.mxu0 0
        %1404 = vmatpush1.bf16.msra.mxu0 0
        %1405 = vmatprep.subr.bf16.mxu0 0
        %1406 = vmatpush1.bf16.msra.mxu0 0
        %1407 = vmatprep.subr.bf16.mxu0 0
        %1408 = vmatpush1.bf16.msra.mxu0 0
        %1409 = vmatprep.subr.bf16.mxu0 0
        %1410 = vmatpush1.bf16.msra.mxu0 0
        %1411 = vmatprep.mubr.bf16.mxu0 0
        %1412 = vmatmul.mubr.bf16.gmra.mrb[0].mxu0 %v1374
        %v1413 = vpop.f32.mrb[0].mxu0
        %v1414 = vadd.f32 0.0, %v1413
        %v1415 = vpop.f32.mrb[0].mxu0
        %v1416 = vpop.f32.mrb[0].mxu0
        %v1417 = vpop.f32.mrb[0].mxu0
        %1418 = vdwg.mxu0
        %v1419 = vcombine.low %v1276, %v1368
        %v1420 = vcombine.high %v1276, %v1368
        %v1422 = vunpack.c.l.s4 1983009808
        %v1423 = vunpack.c.0.s8 %v1422
        %v1424 = vlaneseq
        %v1425 = vshrl.u32 %v1424, 7
        %v1426 = vsub.s32 %v1423, %v1425
        %v1427 = vrot.slane %v1419, %v1426
        %v1429 = vunpack.c.l.s4 1983009808
        %v1430 = vunpack.c.0.s8 %v1429
        %v1431 = vlaneseq
        %v1432 = vshrl.u32 %v1431, 7
        %v1433 = vsub.s32 %v1430, %v1432
        %v1434 = vrot.slane %v1420, %v1433
        %v1435 = vcombine.low %v1322, %v1414
        %v1436 = vcombine.high %v1322, %v1414
        %v1438 = vunpack.c.l.s4 1983009808
        %v1439 = vunpack.c.0.s8 %v1438
        %v1440 = vlaneseq
        %v1441 = vshrl.u32 %v1440, 7
        %v1442 = vsub.s32 %v1439, %v1441
        %v1443 = vrot.slane %v1435, %v1442
        %v1445 = vunpack.c.l.s4 1983009808
        %v1446 = vunpack.c.0.s8 %v1445
        %v1447 = vlaneseq
        %v1448 = vshrl.u32 %v1447, 7
        %v1449 = vsub.s32 %v1446, %v1448
        %v1450 = vrot.slane %v1436, %v1449
        %v1451 = vcombine.low %v1427, %v1443
        %v1452 = vcombine.high %v1427, %v1443
        %v1454 = vunpack.c.l.s4 1934713408
        %v1455 = vunpack.c.0.s8 %v1454
        %v1456 = vlaneseq
        %v1457 = vshrl.u32 %v1456, 7
        %v1458 = vsub.s32 %v1455, %v1457
        %v1459 = vrot.slane %v1451, %v1458
        %v1461 = vunpack.c.l.s4 1934713408
        %v1462 = vunpack.c.0.s8 %v1461
        %v1463 = vlaneseq
        %v1464 = vshrl.u32 %v1463, 7
        %v1465 = vsub.s32 %v1462, %v1464
        %v1466 = vrot.slane %v1452, %v1465
        %v1467 = vcombine.low %v1434, %v1450
        %v1468 = vcombine.high %v1434, %v1450
        %v1470 = vunpack.c.l.s4 1934713408
        %v1471 = vunpack.c.0.s8 %v1470
        %v1472 = vlaneseq
        %v1473 = vshrl.u32 %v1472, 7
        %v1474 = vsub.s32 %v1471, %v1473
        %v1475 = vrot.slane %v1467, %v1474
        %v1477 = vunpack.c.l.s4 1934713408
        %v1478 = vunpack.c.0.s8 %v1477
        %v1479 = vlaneseq
        %v1480 = vshrl.u32 %v1479, 7
        %v1481 = vsub.s32 %v1478, %v1480
        %v1482 = vrot.slane %v1468, %v1481
        %v1483 = vcombine.high %v1459, 0.0
        %v1484 = vcombine.high %v1466, 0.0
        %v1485 = vcombine.high %v1475, 0.0
        %v1486 = vcombine.high %v1482, 0.0
        %v1487 = vcombine.low %v1459, %v1466
        %v1489 = vunpack.c.l.s4 1983009808
        %v1490 = vunpack.c.0.s8 %v1489
        %v1491 = vlaneseq
        %v1492 = vshrl.u32 %v1491, 7
        %v1493 = vsub.s32 %v1490, %v1492
        %v1494 = vrot.slane %v1487, %v1493
        %v1495 = vcombine.low %v1483, %v1484
        %v1497 = vunpack.c.l.s4 1983009808
        %v1498 = vunpack.c.0.s8 %v1497
        %v1499 = vlaneseq
        %v1500 = vshrl.u32 %v1499, 7
        %v1501 = vsub.s32 %v1498, %v1500
        %v1502 = vrot.slane %v1495, %v1501
        %v1503 = vcombine.low %v1475, %v1482
        %v1505 = vunpack.c.l.s4 1983009808
        %v1506 = vunpack.c.0.s8 %v1505
        %v1507 = vlaneseq
        %v1508 = vshrl.u32 %v1507, 7
        %v1509 = vsub.s32 %v1506, %v1508
        %v1510 = vrot.slane %v1503, %v1509
        %v1511 = vcombine.low %v1485, %v1486
        %v1513 = vunpack.c.l.s4 1983009808
        %v1514 = vunpack.c.0.s8 %v1513
        %v1515 = vlaneseq
        %v1516 = vshrl.u32 %v1515, 7
        %v1517 = vsub.s32 %v1514, %v1516
        %v1518 = vrot.slane %v1511, %v1517
        %v1519 = vcombine.low %v1494, %v1502
        %v1520 = vcombine.high %v1494, %v1502
        %v1522 = vunpack.c.l.s4 1934713408
        %v1523 = vunpack.c.0.s8 %v1522
        %v1524 = vlaneseq
        %v1525 = vshrl.u32 %v1524, 7
        %v1526 = vsub.s32 %v1523, %v1525
        %v1527 = vrot.slane %v1519, %v1526
        %v1529 = vunpack.c.l.s4 1934713408
        %v1530 = vunpack.c.0.s8 %v1529
        %v1531 = vlaneseq
        %v1532 = vshrl.u32 %v1531, 7
        %v1533 = vsub.s32 %v1530, %v1532
        %v1534 = vrot.slane %v1520, %v1533
        %v1535 = vcombine.low %v1510, %v1518
        %v1536 = vcombine.high %v1510, %v1518
        %v1538 = vunpack.c.l.s4 1934713408
        %v1539 = vunpack.c.0.s8 %v1538
        %v1540 = vlaneseq
        %v1541 = vshrl.u32 %v1540, 7
        %v1542 = vsub.s32 %v1539, %v1541
        %v1543 = vrot.slane %v1535, %v1542
        %v1545 = vunpack.c.l.s4 1934713408
        %v1546 = vunpack.c.0.s8 %v1545
        %v1547 = vlaneseq
        %v1548 = vshrl.u32 %v1547, 7
        %v1549 = vsub.s32 %v1546, %v1548
        %v1550 = vrot.slane %v1536, %v1549
        %v1551 = vcombine.low %v1527, %v1543
        %v1552 = vcombine.high %v1527, %v1543
        %v1553 = vcombine.low %v1534, %v1550
        %v1554 = vcombine.high %v1534, %v1550
        %1556 = vrot.lane.b32.xlu0 %v1552, 8
        %v1557 = vpop.permute.xlu0 %1556
        %1560 = vrot.lane.b32.xlu0 %v1553, 16
        %v1561 = vpop.permute.xlu0 %1560
        %1564 = vrot.lane.b32.xlu0 %v1554, 24
        %v1565 = vpop.permute.xlu0 %1564
        %v1567 = vsel %vm990, %v1551, %v1557
        %vm1568 = vcmask 130048
        %v1569 = vsel %vm1568, %v1567, %v1561
        %vm1570 = vcmask 195584
        %v1571 = vsel %vm1570, %v1569, %v1565
        %v1572 = vpack.c.bf16 %v1571, %v1571
        %v1573 = vld [vmem:[%s5] sm:$0xf]
        %v1574 = vld [vmem:[%s5 + $0x4] sm:$0xf]
        %v1575 = vld [vmem:[%s5 + $0x8] sm:$0xf]
        %v1576 = vld [vmem:[%s5 + $0xc] sm:$0xf]
        %v1577 = vld [vmem:[%s6] sm:$0x1]
        %v1579 = vlaneseq
        %v1580 = vshrl.u32 %v1579, 7
        %v1581 = vsub.s32 0, %v1580
        %v1582 = vrot.slane %v1577, %v1581
        %v1588 = vunpack.c.l.b16 %v1573
        %v1589 = vunpack.c.l.b16 %v1574
        %v1590 = vunpack.c.l.b16 %v1575
        %v1591 = vunpack.c.l.b16 %v1576
        %v1592 = vpack.c.b16 %v1589, %v1588
        %v1593 = vpack.c.b16 %v1591, %v1590
        %v1597 = vsel %vm440, %v1572, 0
        %1599 = vmatprep.subr.bf16.mxu0 0
        %1600 = vmatpush1.bf16.msra.mxu0 %v1592
        %1601 = vmatprep.subr.bf16.mxu0 0
        %1602 = vmatpush1.bf16.msra.mxu0 %v1593
        %1603 = vmatprep.subr.bf16.mxu0 0
        %1604 = vmatpush1.bf16.msra.mxu0 0
        %1605 = vmatprep.subr.bf16.mxu0 0
        %1606 = vmatpush1.bf16.msra.mxu0 0
        %1607 = vmatprep.subr.bf16.mxu0 0
        %1608 = vmatpush1.bf16.msra.mxu0 0
        %1609 = vmatprep.subr.bf16.mxu0 0
        %1610 = vmatpush1.bf16.msra.mxu0 0
        %1611 = vmatprep.subr.bf16.mxu0 0
        %1612 = vmatpush1.bf16.msra.mxu0 0
        %1613 = vmatprep.subr.bf16.mxu0 0
        %1614 = vmatpush1.bf16.msra.mxu0 0
        %1615 = vmatprep.subr.bf16.mxu0 0
        %1616 = vmatpush1.bf16.msra.mxu0 0
        %1617 = vmatprep.subr.bf16.mxu0 0
        %1618 = vmatpush1.bf16.msra.mxu0 0
        %1619 = vmatprep.subr.bf16.mxu0 0
        %1620 = vmatpush1.bf16.msra.mxu0 0
        %1621 = vmatprep.subr.bf16.mxu0 0
        %1622 = vmatpush1.bf16.msra.mxu0 0
        %1623 = vmatprep.subr.bf16.mxu0 0
        %1624 = vmatpush1.bf16.msra.mxu0 0
        %1625 = vmatprep.subr.bf16.mxu0 0
        %1626 = vmatpush1.bf16.msra.mxu0 0
        %1627 = vmatprep.subr.bf16.mxu0 0
        %1628 = vmatpush1.bf16.msra.mxu0 0
        %1629 = vmatprep.subr.bf16.mxu0 0
        %1630 = vmatpush1.bf16.msra.mxu0 0
        %1631 = vmatprep.mubr.bf16.mxu0 0
        %1632 = vmatmul.mubr.bf16.gmra.mrb[0].mxu0 %v1597
        %v1633 = vpop.f32.mrb[0].mxu0
        %v1634 = vadd.f32 %v1582, %v1633
        %v1635 = vpop.f32.mrb[0].mxu0
        %v1636 = vpop.f32.mrb[0].mxu0
        %v1637 = vpop.f32.mrb[0].mxu0
        %1638 = vdwg.mxu0
        %v1639 = vadd.f32 %v437, %v1634
        %v1640 = vld [vmem:[%s7] sm:$0x1]
        %v1641 = vld [vmem:[%s8] sm:$0x1]
        %v1642 = vsel %vm440, %v1639, 0.0
        %1643 = vadd.xlane.f32.xlu0 %v1642
        %v1644 = vpop.xlane.xlu0 %1643
        %v1645 = vmul.f32 %v1644, %v444
        %v1646 = vsub.f32 %v1639, %v1645
        %v1647 = vmul.f32 %v1646, %v1646
        %v1648 = vsel %vm440, %v1647, 0.0
        %1649 = vadd.xlane.f32.xlu0 %v1648
        %v1650 = vpop.xlane.xlu0 %1649
        %v1651 = vmul.f32 %v1650, %v444
        %v1652 = vadd.f32 %v1651, 1e-05
        %v1653 = vrsqrt.pop %v1652
        %v1654 = vmul.f32 %v1646, %v1653
        %v1656 = vlaneseq
        %v1657 = vshrl.u32 %v1656, 7
        %v1658 = vsub.s32 0, %v1657
        %v1659 = vrot.slane %v1640, %v1658
        %v1661 = vmul.f32 %v1654, %v1659
        %v1663 = vlaneseq
        %v1664 = vshrl.u32 %v1663, 7
        %v1665 = vsub.s32 0, %v1664
        %v1666 = vrot.slane %v1641, %v1665
        %v1668 = vadd.f32 %v1661, %v1666
        %v1669 = vpack.c.bf16 %v1668, %v1668
        %v1670 = vld [vmem:[%s9] sm:$0xf]
        %v1671 = vld [vmem:[%s9 + $0x4] sm:$0xf]
        %v1672 = vld [vmem:[%s9 + $0x8] sm:$0xf]
        %v1673 = vld [vmem:[%s9 + $0xc] sm:$0xf]
        %v1674 = vld [vmem:[%s10] sm:$0x1]
        %v1676 = vlaneseq
        %v1677 = vshrl.u32 %v1676, 7
        %v1678 = vsub.s32 0, %v1677
        %v1679 = vrot.slane %v1674, %v1678
        %v1685 = vunpack.c.l.b16 %v1670
        %v1686 = vunpack.c.l.b16 %v1671
        %v1687 = vunpack.c.l.b16 %v1672
        %v1688 = vunpack.c.l.b16 %v1673
        %v1689 = vpack.c.b16 %v1686, %v1685
        %v1690 = vpack.c.b16 %v1688, %v1687
        %v1694 = vsel %vm440, %v1669, 0
        %1696 = vmatprep.subr.bf16.mxu0 0
        %1697 = vmatpush1.bf16.msra.mxu0 %v1689
        %1698 = vmatprep.subr.bf16.mxu0 0
        %1699 = vmatpush1.bf16.msra.mxu0 %v1690
        %1700 = vmatprep.subr.bf16.mxu0 0
        %1701 = vmatpush1.bf16.msra.mxu0 0
        %1702 = vmatprep.subr.bf16.mxu0 0
        %1703 = vmatpush1.bf16.msra.mxu0 0
        %1704 = vmatprep.subr.bf16.mxu0 0
        %1705 = vmatpush1.bf16.msra.mxu0 0
        %1706 = vmatprep.subr.bf16.mxu0 0
        %1707 = vmatpush1.bf16.msra.mxu0 0
        %1708 = vmatprep.subr.bf16.mxu0 0
        %1709 = vmatpush1.bf16.msra.mxu0 0
        %1710 = vmatprep.subr.bf16.mxu0 0
        %1711 = vmatpush1.bf16.msra.mxu0 0
        %1712 = vmatprep.subr.bf16.mxu0 0
        %1713 = vmatpush1.bf16.msra.mxu0 0
        %1714 = vmatprep.subr.bf16.mxu0 0
        %1715 = vmatpush1.bf16.msra.mxu0 0
        %1716 = vmatprep.subr.bf16.mxu0 0
        %1717 = vmatpush1.bf16.msra.mxu0 0
        %1718 = vmatprep.subr.bf16.mxu0 0
        %1719 = vmatpush1.bf16.msra.mxu0 0
        %1720 = vmatprep.subr.bf16.mxu0 0
        %1721 = vmatpush1.bf16.msra.mxu0 0
        %1722 = vmatprep.subr.bf16.mxu0 0
        %1723 = vmatpush1.bf16.msra.mxu0 0
        %1724 = vmatprep.subr.bf16.mxu0 0
        %1725 = vmatpush1.bf16.msra.mxu0 0
        %1726 = vmatprep.subr.bf16.mxu0 0
        %1727 = vmatpush1.bf16.msra.mxu0 0
        %1728 = vmatprep.mubr.bf16.mxu0 0
        %1729 = vmatmul.mubr.bf16.gmra.mrb[0].mxu0 %v1694
        %v1730 = vpop.f32.mrb[0].mxu0
        %v1731 = vadd.f32 %v1679, %v1730
        %v1732 = vpop.f32.mrb[0].mxu0
        %v1733 = vpop.f32.mrb[0].mxu0
        %v1734 = vpop.f32.mrb[0].mxu0
        %1735 = vdwg.mxu0
        %v1736 = vmul.f32 %v1731, 0.5
        %v1737 = vmul.f32 %v1731, %v1731
        %v1738 = vmul.f32 %v1731, %v1737
        %v1739 = vmul.f32 %v1738, 0.044715
        %v1740 = vadd.f32 %v1731, %v1739
        %v1741 = vmul.f32 %v1740, 0.7978845
        %v1742 = vtanh.pop %v1741
        %v1743 = vadd.f32 %v1742, 1.0
        %v1744 = vmul.f32 %v1736, %v1743
        %v1745 = vpack.c.bf16 %v1744, %v1744
        %v1746 = vld [vmem:[%s11] sm:$0xf]
        %v1747 = vld [vmem:[%s11 + $0x4] sm:$0xf]
        %v1748 = vld [vmem:[%s11 + $0x8] sm:$0xf]
        %v1749 = vld [vmem:[%s11 + $0xc] sm:$0xf]
        %v1750 = vld [vmem:[%s11 + $0x10] sm:$0xf]
        %v1751 = vld [vmem:[%s11 + $0x14] sm:$0xf]
        %v1752 = vld [vmem:[%s11 + $0x18] sm:$0xf]
        %v1753 = vld [vmem:[%s11 + $0x1c] sm:$0xf]
        %v1754 = vld [vmem:[%s11 + $0x20] sm:$0xf]
        %v1755 = vld [vmem:[%s11 + $0x24] sm:$0xf]
        %v1756 = vld [vmem:[%s11 + $0x28] sm:$0xf]
        %v1757 = vld [vmem:[%s11 + $0x2c] sm:$0xf]
        %v1758 = vld [vmem:[%s11 + $0x30] sm:$0xf]
        %v1759 = vld [vmem:[%s11 + $0x34] sm:$0xf]
        %v1760 = vld [vmem:[%s11 + $0x38] sm:$0xf]
        %v1761 = vld [vmem:[%s11 + $0x3c] sm:$0xf]
        %v1762 = vld [vmem:[%s12] sm:$0x1]
        %v1764 = vlaneseq
        %v1765 = vshrl.u32 %v1764, 7
        %v1766 = vsub.s32 0, %v1765
        %v1767 = vrot.slane %v1762, %v1766
        %v1785 = vunpack.c.l.b16 %v1746
        %v1786 = vunpack.c.l.b16 %v1747
        %v1787 = vunpack.c.l.b16 %v1748
        %v1788 = vunpack.c.l.b16 %v1749
        %v1789 = vunpack.c.l.b16 %v1750
        %v1790 = vunpack.c.l.b16 %v1751
        %v1791 = vunpack.c.l.b16 %v1752
        %v1792 = vunpack.c.l.b16 %v1753
        %v1793 = vunpack.c.l.b16 %v1754
        %v1794 = vunpack.c.l.b16 %v1755
        %v1795 = vunpack.c.l.b16 %v1756
        %v1796 = vunpack.c.l.b16 %v1757
        %v1797 = vunpack.c.l.b16 %v1758
        %v1798 = vunpack.c.l.b16 %v1759
        %v1799 = vunpack.c.l.b16 %v1760
        %v1800 = vunpack.c.l.b16 %v1761
        %v1801 = vpack.c.b16 %v1786, %v1785
        %v1802 = vpack.c.b16 %v1788, %v1787
        %v1803 = vpack.c.b16 %v1790, %v1789
        %v1804 = vpack.c.b16 %v1792, %v1791
        %v1805 = vpack.c.b16 %v1794, %v1793
        %v1806 = vpack.c.b16 %v1796, %v1795
        %v1807 = vpack.c.b16 %v1798, %v1797
        %v1808 = vpack.c.b16 %v1800, %v1799
        %1817 = vmatprep.subr.bf16.mxu0 0
        %1818 = vmatpush1.bf16.msra.mxu0 %v1801
        %1819 = vmatprep.subr.bf16.mxu0 0
        %1820 = vmatpush1.bf16.msra.mxu0 %v1802
        %1821 = vmatprep.subr.bf16.mxu0 0
        %1822 = vmatpush1.bf16.msra.mxu0 %v1803
        %1823 = vmatprep.subr.bf16.mxu0 0
        %1824 = vmatpush1.bf16.msra.mxu0 %v1804
        %1825 = vmatprep.subr.bf16.mxu0 0
        %1826 = vmatpush1.bf16.msra.mxu0 %v1805
        %1827 = vmatprep.subr.bf16.mxu0 0
        %1828 = vmatpush1.bf16.msra.mxu0 %v1806
        %1829 = vmatprep.subr.bf16.mxu0 0
        %1830 = vmatpush1.bf16.msra.mxu0 %v1807
        %1831 = vmatprep.subr.bf16.mxu0 0
        %1832 = vmatpush1.bf16.msra.mxu0 %v1808
        %1833 = vmatprep.subr.bf16.mxu0 0
        %1834 = vmatpush1.bf16.msra.mxu0 0
        %1835 = vmatprep.subr.bf16.mxu0 0
        %1836 = vmatpush1.bf16.msra.mxu0 0
        %1837 = vmatprep.subr.bf16.mxu0 0
        %1838 = vmatpush1.bf16.msra.mxu0 0
        %1839 = vmatprep.subr.bf16.mxu0 0
        %1840 = vmatpush1.bf16.msra.mxu0 0
        %1841 = vmatprep.subr.bf16.mxu0 0
        %1842 = vmatpush1.bf16.msra.mxu0 0
        %1843 = vmatprep.subr.bf16.mxu0 0
        %1844 = vmatpush1.bf16.msra.mxu0 0
        %1845 = vmatprep.subr.bf16.mxu0 0
        %1846 = vmatpush1.bf16.msra.mxu0 0
        %1847 = vmatprep.subr.bf16.mxu0 0
        %1848 = vmatpush1.bf16.msra.mxu0 0
        %1849 = vmatprep.mubr.bf16.mxu0 0
        %1850 = vmatmul.mubr.bf16.gmra.mrb[0].mxu0 %v1745
        %v1851 = vpop.f32.mrb[0].mxu0
        %v1852 = vadd.f32 %v1767, %v1851
        %v1853 = vpop.f32.mrb[0].mxu0
        %v1854 = vpop.f32.mrb[0].mxu0
        %v1855 = vpop.f32.mrb[0].mxu0
        %1856 = vdwg.mxu0
        %v1857 = vadd.f32 %v1639, %v1852
        %1858 = vst.msk [vmem:[%s431] sm:$0xff] %vm440, %v1857
        %s1859 = sand.u32 %s313, 1
        %s1860 = scalar_lea.sflag [#allocation3], %s1859
        %s1861 = sand.u32 %s313, 1
        %s1862 = smul.addr %s1861, 8
        %s1863 = scalar_lea.vmem [#allocation2], %s1862
        // Predicated region
        $region73: #{tpu_custom_call.1} parent=71 // pred_check
          %p1864 = pneg %p323
        $region74: #{tpu_custom_call.1} parent=71 // pred_check_branch
          %1866 = sbr.rel (%p1864) target = $region76
        $region75: #{tpu_custom_call.1} parent=71 // pred_region
          %s1868 = ssub.s32 128, 128
          %1869 = vsyncadd %s1860, %s1868
          %s1870 = smul.addr %s27, 128
          %s1871 = scalar_lea.hbm %s13, %s1870
          %s1873 = sshll.u32 %s1863, 4
          %s1874 = int_to_ptr.vmem [resolvable:$true] %s1873
          %1876 = dma.vmem_to_hbm [thread:$0]  %s1874, 128, %s1871, %s1860
        $region76: #{tpu_custom_call.1} parent=71 // pred_fallthru
          _
      $region72: #{tpu_custom_call.1} parent=5 // pred_fallthru
        _
      %p1877 = scmp.le.s32.totalorder 2, %s22
      // Predicated region
      $region77: #{tpu_custom_call.1} parent=5 // pred_check
        %p1878 = pneg %p1877
      $region78: #{tpu_custom_call.1} parent=5 // pred_check_branch
        %1880 = sbr.rel (%p1878) target = $region80
      $region79: #{tpu_custom_call.1} parent=5 // pred_region
        %s1881 = ssub.s32 %s22, 2
        // Predicated region
        $region81: #{tpu_custom_call.1} parent=79 // pred_check
          %p1882 = pneg %p329
        $region82: #{tpu_custom_call.1} parent=79 // pred_check_branch
          %1884 = sbr.rel (%p1882) target = $region84
        $region83: #{tpu_custom_call.1} parent=79 // pred_region
          %s1885 = sand.u32 %s314, 1
          %s1886 = scalar_lea.sflag [#allocation3], %s1885
          %s1887 = sand.u32 %s314, 1
          %s1888 = smul.addr %s1887, 8
          %s1889 = scalar_lea.vmem [#allocation2], %s1888
          %1890 = dma.done %s1886, 128
        $region84: #{tpu_custom_call.1} parent=79 // pred_fallthru
          _
      $region80: #{tpu_custom_call.1} parent=5 // pred_fallthru
        _
    $region6: #{tpu_custom_call.1} parent=1 // loop_footer
      %s26 = sadd.s32 1, %s22
    $region7: #{tpu_custom_call.1} parent=1 // loop_footer_branch
      %21 = sbr.rel target = $region3
    $region8: #{tpu_custom_call.1} parent=1 // loop_exit
      _
    %1891 = vsyncpa [#allocation3], 1
    %s1892 = scalar_lea.sflag [#allocation3], 1
    %1893 = vsyncpa %s1892, 1

// kernel: tpu_custom_call.1
$region0: #{tpu_custom_call.1}
  #allocation0 [shape = 'u32[]', space=smem, size = 0x4, offset = 0x4, fixed_abs, tag = 'smem constant byte address 0x4 - core index']
  #allocation1 [shape = 'u32[144,128]{1,0:T(1,128)}', space=vmem, size = 0x12000, scoped, tag = 'internal scratch']
  %s0 = inlined_call_operand.vmem [shape: f32[2,8,32], index: 0, kind: input, shape index: {}]
  %s1 = inlined_call_operand.vmem [shape: f32[1,32], index: 1, kind: input, shape index: {}]
  %s2 = inlined_call_operand.vmem [shape: f32[1,32], index: 2, kind: input, shape index: {}]
  %s3 = inlined_call_operand.vmem [shape: bf16[32,96], index: 3, kind: input, shape index: {}]
  %s4 = inlined_call_operand.vmem [shape: f32[1,96], index: 4, kind: input, shape index: {}]
  %s5 = inlined_call_operand.vmem [shape: bf16[32,32], index: 5, kind: input, shape index: {}]
  %s6 = inlined_call_operand.vmem [shape: f32[1,32], index: 6, kind: input, shape index: {}]
  %s7 = inlined_call_operand.vmem [shape: f32[1,32], index: 7, kind: input, shape index: {}]
  %s8 = inlined_call_operand.vmem [shape: f32[1,32], index: 8, kind: input, shape index: {}]
  %s9 = inlined_call_operand.vmem [shape: bf16[32,128], index: 9, kind: input, shape index: {}]
  %s10 = inlined_call_operand.vmem [shape: f32[1,128], index: 10, kind: input, shape index: {}]
  %s11 = inlined_call_operand.vmem [shape: bf16[128,32], index: 11, kind: input, shape index: {}]
  %s12 = inlined_call_operand.vmem [shape: f32[1,32], index: 12, kind: input, shape index: {}]
  %s13 = inlined_call_operand.hbm [shape: f32[2,8,32], index: 13, kind: output, shape index: {}]
  %s14 = sld [smem:[#allocation0]]
  $region85: #{tpu_custom_call.1} parent=0
    _
  %s16 = ssub.s32 1, %s14
  %s17 = scalar_select 0, %s16, %s14
  $region1: #{tpu_custom_call.1} parent=0
    #allocation2 [shape = 'u8[8192]{0}', space=vmem, size = 0x2000, scoped, tag = 'output window, operand 0']
    #allocation3 [shape = 's32[2]{0}', space=sflag, size = 0x8, scoped, tag = 'scoped memory for tpu_custom_call.1']
    %18 = vsyncpa [#allocation3], 0
    %s19 = scalar_lea.sflag [#allocation3], 1
    %20 = vsyncpa %s19, 0
    loop: start=0, step=1, limit=4
    $region2: #{tpu_custom_call.1} parent=1 // loop_pre_header
      _
    $region3: #{tpu_custom_call.1} parent=1 // loop_header
      %s22 = sphi 0, %s26
      %p23 = scmp.ge.s32.totalorder %s22, 4
      %s32 = sphi 0, %s34
      %s35 = sphi 0, %s32
      %s36 = sphi 0, %s35
      %s52 = sphi 0, %s36
      %s56 = sphi 0, %s56
      %s58 = sphi 0, %s56
      %s59 = sphi 0, %s58
      %s73 = sphi 0, %s59
      %s77 = sphi 0, %s77
      %s79 = sphi 0, %s77
      %s80 = sphi 0, %s79
      %s94 = sphi 0, %s80
      %s98 = sphi 0, %s98
      %s100 = sphi 0, %s98
      %s101 = sphi 0, %s100
      %s115 = sphi 0, %s101
      %s119 = sphi 0, %s119
      %s121 = sphi 0, %s119
      %s122 = sphi 0, %s121
      %s136 = sphi 0, %s122
      %s140 = sphi 0, %s140
      %s142 = sphi 0, %s140
      %s143 = sphi 0, %s142
      %s157 = sphi 0, %s143
      %s161 = sphi 0, %s161
      %s163 = sphi 0, %s161
      %s164 = sphi 0, %s163
      %s178 = sphi 0, %s164
      %s182 = sphi 0, %s182
      %s184 = sphi 0, %s182
      %s185 = sphi 0, %s184
      %s199 = sphi 0, %s185
      %s203 = sphi 0, %s203
      %s205 = sphi 0, %s203
      %s206 = sphi 0, %s205
      %s220 = sphi 0, %s206
      %s224 = sphi 0, %s224
      %s226 = sphi 0, %s224
      %s227 = sphi 0, %s226
      %s241 = sphi 0, %s227
      %s245 = sphi 0, %s245
      %s247 = sphi 0, %s245
      %s248 = sphi 0, %s247
      %s262 = sphi 0, %s248
      %s266 = sphi 0, %s266
      %s268 = sphi 0, %s266
      %s269 = sphi 0, %s268
      %s283 = sphi 0, %s269
      %s287 = sphi 0, %s287
      %s289 = sphi 0, %s287
      %s290 = sphi 0, %s289
      %s304 = sphi 0, %s290
      %s310 = sphi 0, %s312
      %s313 = sphi 0, %s310
      %s314 = sphi 0, %s313
      %s330 = sphi 0, %s314
    $region4: #{tpu_custom_call.1} parent=1 // loop_header_branch
      %25 = sbr.rel (%p23) target = $region8
    $region5: #{tpu_custom_call.1} parent=1 // loop_body
      %s27 = ssub.s32 %s22, 1
      %s28 = ssub.s32 %s22, 2
      %s29 = sadd.s32 %s22, 1
      %s30 = ssub.s32 %s22, %s29
      %p31 = scmp.eq.s32.totalorder %s30, 0
      %s33 = sadd.s32 %s32, 1
      %s34 = scalar_select %p31, %s32, %s33
      %p37 = pneg %p31
      %p38 = scmp.eq.s32.totalorder %s22, 1
      %p39 = por %p37, %p38
      %p40 = scmp.ne.s32.totalorder %s32, %s35
      %p41 = scmp.eq.s32.totalorder %s22, 0
      %p42 = por %p40, %p41
      %p43 = scmp.ne.s32.totalorder %s32, %s35
      %p44 = scmp.eq.s32.totalorder %s27, 1
      %p45 = por %p43, %p44
      %p46 = scmp.ne.s32.totalorder %s35, %s36
      %p47 = scmp.eq.s32.totalorder %s27, 0
      %p48 = por %p46, %p47
      %p49 = scmp.ne.s32.totalorder %s35, %s36
      %p50 = scmp.eq.s32.totalorder %s28, 1
      %p51 = por %p49, %p50
      %p53 = scmp.ne.s32.totalorder %s36, %s52
      %p54 = scmp.eq.s32.totalorder %s28, 0
      %p55 = por %p53, %p54
      %s57 = sadd.s32 %s56, 1
      %p60 = scmp.eq.s32.totalorder %s22, 1
      %p61 = scmp.ne.s32.totalorder %s56, %s58
      %p62 = scmp.eq.s32.totalorder %s22, 0
      %p63 = por %p61, %p62
      %p64 = scmp.ne.s32.totalorder %s56, %s58
      %p65 = scmp.eq.s32.totalorder %s27, 1
      %p66 = por %p64, %p65
      %p67 = scmp.ne.s32.totalorder %s58, %s59
      %p68 = scmp.eq.s32.totalorder %s27, 0
      %p69 = por %p67, %p68
      %p70 = scmp.ne.s32.totalorder %s58, %s59
      %p71 = scmp.eq.s32.totalorder %s28, 1
      %p72 = por %p70, %p71
      %p74 = scmp.ne.s32.totalorder %s59, %s73
      %p75 = scmp.eq.s32.totalorder %s28, 0
      %p76 = por %p74, %p75
      %s78 = sadd.s32 %s77, 1
      %p81 = scmp.eq.s32.totalorder %s22, 1
      %p82 = scmp.ne.s32.totalorder %s77, %s79
      %p83 = scmp.eq.s32.totalorder %s22, 0
      %p84 = por %p82, %p83
      %p85 = scmp.ne.s32.totalorder %s77, %s79
      %p86 = scmp.eq.s32.totalorder %s27, 1
      %p87 = por %p85, %p86
      %p88 = scmp.ne.s32.totalorder %s79, %s80
      %p89 = scmp.eq.s32.totalorder %s27, 0
      %p90 = por %p88, %p89
      %p91 = scmp.ne.s32.totalorder %s79, %s80
      %p92 = scmp.eq.s32.totalorder %s28, 1
      %p93 = por %p91, %p92
      %p95 = scmp.ne.s32.totalorder %s80, %s94
      %p96 = scmp.eq.s32.totalorder %s28, 0
      %p97 = por %p95, %p96
      %s99 = sadd.s32 %s98, 1
      %p102 = scmp.eq.s32.totalorder %s22, 1
      %p103 = scmp.ne.s32.totalorder %s98, %s100
      %p104 = scmp.eq.s32.totalorder %s22, 0
      %p105 = por %p103, %p104
      %p106 = scmp.ne.s32.totalorder %s98, %s100
      %p107 = scmp.eq.s32.totalorder %s27, 1
      %p108 = por %p106, %p107
      %p109 = scmp.ne.s32.totalorder %s100, %s101
      %p110 = scmp.eq.s32.totalorder %s27, 0
      %p111 = por %p109, %p110
      %p112 = scmp.ne.s32.totalorder %s100, %s101
      %p113 = scmp.eq.s32.totalorder %s28, 1
      %p114 = por %p112, %p113
      %p116 = scmp.ne.s32.totalorder %s101, %s115
      %p117 = scmp.eq.s32.totalorder %s28, 0
      %p118 = por %p116, %p117
      %s120 = sadd.s32 %s119, 1
      %p123 = scmp.eq.s32.totalorder %s22, 1
      %p124 = scmp.ne.s32.totalorder %s119, %s121
      %p125 = scmp.eq.s32.totalorder %s22, 0
      %p126 = por %p124, %p125
      %p127 = scmp.ne.s32.totalorder %s119, %s121
      %p128 = scmp.eq.s32.totalorder %s27, 1
      %p129 = por %p127, %p128
      %p130 = scmp.ne.s32.totalorder %s121, %s122
      %p131 = scmp.eq.s32.totalorder %s27, 0
      %p132 = por %p130, %p131
      %p133 = scmp.ne.s32.totalorder %s121, %s122
      %p134 = scmp.eq.s32.totalorder %s28, 1
      %p135 = por %p133, %p134
      %p137 = scmp.ne.s32.totalorder %s122, %s136
      %p138 = scmp.eq.s32.totalorder %s28, 0
      %p139 = por %p137, %p138
      %s141 = sadd.s32 %s140, 1
      %p144 = scmp.eq.s32.totalorder %s22, 1
      %p145 = scmp.ne.s32.totalorder %s140, %s142
      %p146 = scmp.eq.s32.totalorder %s22, 0
      %p147 = por %p145, %p146
      %p148 = scmp.ne.s32.totalorder %s140, %s142
      %p149 = scmp.eq.s32.totalorder %s27, 1
      %p150 = por %p148, %p149
      %p151 = scmp.ne.s32.totalorder %s142, %s143
      %p152 = scmp.eq.s32.totalorder %s27, 0
      %p153 = por %p151, %p152
      %p154 = scmp.ne.s32.totalorder %s142, %s143
      %p155 = scmp.eq.s32.totalorder %s28, 1
      %p156 = por %p154, %p155
      %p158 = scmp.ne.s32.totalorder %s143, %s157
      %p159 = scmp.eq.s32.totalorder %s28, 0
      %p160 = por %p158, %p159
      %s162 = sadd.s32 %s161, 1
      %p165 = scmp.eq.s32.totalorder %s22, 1
      %p166 = scmp.ne.s32.totalorder %s161, %s163
      %p167 = scmp.eq.s32.totalorder %s22, 0
      %p168 = por %p166, %p167
      %p169 = scmp.ne.s32.totalorder %s161, %s163
      %p170 = scmp.eq.s32.totalorder %s27, 1
      %p171 = por %p169, %p170
      %p172 = scmp.ne.s32.totalorder %s163, %s164
      %p173 = scmp.eq.s32.totalorder %s27, 0
      %p174 = por %p172, %p173
      %p175 = scmp.ne.s32.totalorder %s163, %s164
      %p176 = scmp.eq.s32.totalorder %s28, 1
      %p177 = por %p175, %p176
      %p179 = scmp.ne.s32.totalorder %s164, %s178
      %p180 = scmp.eq.s32.totalorder %s28, 0
      %p181 = por %p179, %p180
      %s183 = sadd.s32 %s182, 1
      %p186 = scmp.eq.s32.totalorder %s22, 1
      %p187 = scmp.ne.s32.totalorder %s182, %s184
      %p188 = scmp.eq.s32.totalorder %s22, 0
      %p189 = por %p187, %p188
      %p190 = scmp.ne.s32.totalorder %s182, %s184
      %p191 = scmp.eq.s32.totalorder %s27, 1
      %p192 = por %p190, %p191
      %p193 = scmp.ne.s32.totalorder %s184, %s185
      %p194 = scmp.eq.s32.totalorder %s27, 0
      %p195 = por %p193, %p194
      %p196 = scmp.ne.s32.totalorder %s184, %s185
      %p197 = scmp.eq.s32.totalorder %s28, 1
      %p198 = por %p196, %p197
      %p200 = scmp.ne.s32.totalorder %s185, %s199
      %p201 = scmp.eq.s32.totalorder %s28, 0
      %p202 = por %p200, %p201
      %s204 = sadd.s32 %s203, 1
      %p207 = scmp.eq.s32.totalorder %s22, 1
      %p208 = scmp.ne.s32.totalorder %s203, %s205
      %p209 = scmp.eq.s32.totalorder %s22, 0
      %p210 = por %p208, %p209
      %p211 = scmp.ne.s32.totalorder %s203, %s205
      %p212 = scmp.eq.s32.totalorder %s27, 1
      %p213 = por %p211, %p212
      %p214 = scmp.ne.s32.totalorder %s205, %s206
      %p215 = scmp.eq.s32.totalorder %s27, 0
      %p216 = por %p214, %p215
      %p217 = scmp.ne.s32.totalorder %s205, %s206
      %p218 = scmp.eq.s32.totalorder %s28, 1
      %p219 = por %p217, %p218
      %p221 = scmp.ne.s32.totalorder %s206, %s220
      %p222 = scmp.eq.s32.totalorder %s28, 0
      %p223 = por %p221, %p222
      %s225 = sadd.s32 %s224, 1
      %p228 = scmp.eq.s32.totalorder %s22, 1
      %p229 = scmp.ne.s32.totalorder %s224, %s226
      %p230 = scmp.eq.s32.totalorder %s22, 0
      %p231 = por %p229, %p230
      %p232 = scmp.ne.s32.totalorder %s224, %s226
      %p233 = scmp.eq.s32.totalorder %s27, 1
      %p234 = por %p232, %p233
      %p235 = scmp.ne.s32.totalorder %s226, %s227
      %p236 = scmp.eq.s32.totalorder %s27, 0
      %p237 = por %p235, %p236
      %p238 = scmp.ne.s32.totalorder %s226, %s227
      %p239 = scmp.eq.s32.totalorder %s28, 1
      %p240 = por %p238, %p239
      %p242 = scmp.ne.s32.totalorder %s227, %s241
      %p243 = scmp.eq.s32.totalorder %s28, 0
      %p244 = por %p242, %p243
      %s246 = sadd.s32 %s245, 1
      %p249 = scmp.eq.s32.totalorder %s22, 1
      %p250 = scmp.ne.s32.totalorder %s245, %s247
      %p251 = scmp.eq.s32.totalorder %s22, 0
      %p252 = por %p250, %p251
      %p253 = scmp.ne.s32.totalorder %s245, %s247
      %p254 = scmp.eq.s32.totalorder %s27, 1
      %p255 = por %p253, %p254
      %p256 = scmp.ne.s32.totalorder %s247, %s248
      %p257 = scmp.eq.s32.totalorder %s27, 0
      %p258 = por %p256, %p257
      %p259 = scmp.ne.s32.totalorder %s247, %s248
      %p260 = scmp.eq.s32.totalorder %s28, 1
      %p261 = por %p259, %p260
      %p263 = scmp.ne.s32.totalorder %s248, %s262
      %p264 = scmp.eq.s32.totalorder %s28, 0
      %p265 = por %p263, %p264
      %s267 = sadd.s32 %s266, 1
      %p270 = scmp.eq.s32.totalorder %s22, 1
      %p271 = scmp.ne.s32.totalorder %s266, %s268
      %p272 = scmp.eq.s32.totalorder %s22, 0
      %p273 = por %p271, %p272
      %p274 = scmp.ne.s32.totalorder %s266, %s268
      %p275 = scmp.eq.s32.totalorder %s27, 1
      %p276 = por %p274, %p275
      %p277 = scmp.ne.s32.totalorder %s268, %s269
      %p278 = scmp.eq.s32.totalorder %s27, 0
      %p279 = por %p277, %p278
      %p280 = scmp.ne.s32.totalorder %s268, %s269
      %p281 = scmp.eq.s32.totalorder %s28, 1
      %p282 = por %p280, %p281
      %p284 = scmp.ne.s32.totalorder %s269, %s283
      %p285 = scmp.eq.s32.totalorder %s28, 0
      %p286 = por %p284, %p285
      %s288 = sadd.s32 %s287, 1
      %p291 = scmp.eq.s32.totalorder %s22, 1
      %p292 = scmp.ne.s32.totalorder %s287, %s289
      %p293 = scmp.eq.s32.totalorder %s22, 0
      %p294 = por %p292, %p293
      %p295 = scmp.ne.s32.totalorder %s287, %s289
      %p296 = scmp.eq.s32.totalorder %s27, 1
      %p297 = por %p295, %p296
      %p298 = scmp.ne.s32.totalorder %s289, %s290
      %p299 = scmp.eq.s32.totalorder %s27, 0
      %p300 = por %p298, %p299
      %p301 = scmp.ne.s32.totalorder %s289, %s290
      %p302 = scmp.eq.s32.totalorder %s28, 1
      %p303 = por %p301, %p302
      %p305 = scmp.ne.s32.totalorder %s290, %s304
      %p306 = scmp.eq.s32.totalorder %s28, 0
      %p307 = por %p305, %p306
      %s308 = ssub.s32 %s22, %s29
      %p309 = scmp.eq.s32.totalorder %s308, 0
      %s311 = sadd.s32 %s310, 1
      %s312 = scalar_select %p309, %s310, %s311
      %p315 = pneg %p309
      %p316 = scmp.eq.s32.totalorder %s22, 1
      %p317 = por %p315, %p316
      %p318 = scmp.ne.s32.totalorder %s310, %s313
      %p319 = scmp.eq.s32.totalorder %s22, 0
      %p320 = por %p318, %p319
      %p321 = scmp.ne.s32.totalorder %s310, %s313
      %p322 = scmp.eq.s32.totalorder %s27, 1
      %p323 = por %p321, %p322
      %p324 = scmp.ne.s32.totalorder %s313, %s314
      %p325 = scmp.eq.s32.totalorder %s27, 0
      %p326 = por %p324, %p325
      %p327 = scmp.ne.s32.totalorder %s313, %s314
      %p328 = scmp.eq.s32.totalorder %s28, 1
      %p329 = por %p327, %p328
      %p331 = scmp.ne.s32.totalorder %s314, %s330
      %p332 = scmp.eq.s32.totalorder %s28, 0
      %p333 = por %p331, %p332
      %p334 = scmp.le.s32.totalorder 1, %s22
      %p335 = scmp.lt.s32.totalorder %s22, 3
      %p336 = pnand %p334, %p335
      %p337 = pneg %p336
      // Predicated region
      $region9: #{tpu_custom_call.1} parent=5 // pred_check
        _
      $region10: #{tpu_custom_call.1} parent=5 // pred_check_branch
        %339 = sbr.rel (%p336) target = $region12
      $region11: #{tpu_custom_call.1} parent=5 // pred_region
        %s340 = ssub.s32 %s22, 1
        // Predicated region
        $region13: #{tpu_custom_call.1} parent=11 // pred_check
          %p341 = pneg %p69
        $region14: #{tpu_custom_call.1} parent=11 // pred_check_branch
          %343 = sbr.rel (%p341) target = $region16
        $region15: #{tpu_custom_call.1} parent=11 // pred_region
          _
        $region16: #{tpu_custom_call.1} parent=11 // pred_fallthru
          _
        // Predicated region
        $region17: #{tpu_custom_call.1} parent=11 // pred_check
          %p344 = pneg %p90
        $region18: #{tpu_custom_call.1} parent=11 // pred_check_branch
          %346 = sbr.rel (%p344) target = $region20
        $region19: #{tpu_custom_call.1} parent=11 // pred_region
          _
        $region20: #{tpu_custom_call.1} parent=11 // pred_fallthru
          _
        // Predicated region
        $region21: #{tpu_custom_call.1} parent=11 // pred_check
          %p347 = pneg %p111
        $region22: #{tpu_custom_call.1} parent=11 // pred_check_branch
          %349 = sbr.rel (%p347) target = $region24
        $region23: #{tpu_custom_call.1} parent=11 // pred_region
          _
        $region24: #{tpu_custom_call.1} parent=11 // pred_fallthru
          _
        // Predicated region
        $region25: #{tpu_custom_call.1} parent=11 // pred_check
          %p350 = pneg %p132
        $region26: #{tpu_custom_call.1} parent=11 // pred_check_branch
          %352 = sbr.rel (%p350) target = $region28
        $region27: #{tpu_custom_call.1} parent=11 // pred_region
          _
        $region28: #{tpu_custom_call.1} parent=11 // pred_fallthru
          _
        // Predicated region
        $region29: #{tpu_custom_call.1} parent=11 // pred_check
          %p353 = pneg %p153
        $region30: #{tpu_custom_call.1} parent=11 // pred_check_branch
          %355 = sbr.rel (%p353) target = $region32
        $region31: #{tpu_custom_call.1} parent=11 // pred_region
          _
        $region32: #{tpu_custom_call.1} parent=11 // pred_fallthru
          _
        // Predicated region
        $region33: #{tpu_custom_call.1} parent=11 // pred_check
          %p356 = pneg %p174
        $region34: #{tpu_custom_call.1} parent=11 // pred_check_branch
          %358 = sbr.rel (%p356) target = $region36
        $region35: #{tpu_custom_call.1} parent=11 // pred_region
          _
        $region36: #{tpu_custom_call.1} parent=11 // pred_fallthru
          _
        // Predicated region
        $region37: #{tpu_custom_call.1} parent=11 // pred_check
          %p359 = pneg %p195
        $region38: #{tpu_custom_call.1} parent=11 // pred_check_branch
          %361 = sbr.rel (%p359) target = $region40
        $region39: #{tpu_custom_call.1} parent=11 // pred_region
          _
        $region40: #{tpu_custom_call.1} parent=11 // pred_fallthru
          _
        // Predicated region
        $region41: #{tpu_custom_call.1} parent=11 // pred_check
          %p362 = pneg %p216
        $region42: #{tpu_custom_call.1} parent=11 // pred_check_branch
          %364 = sbr.rel (%p362) target = $region44
        $region43: #{tpu_custom_call.1} parent=11 // pred_region
          _
        $region44: #{tpu_custom_call.1} parent=11 // pred_fallthru
          _
        // Predicated region
        $region45: #{tpu_custom_call.1} parent=11 // pred_check
          %p365 = pneg %p237
        $region46: #{tpu_custom_call.1} parent=11 // pred_check_branch
          %367 = sbr.rel (%p365) target = $region48
        $region47: #{tpu_custom_call.1} parent=11 // pred_region
          _
        $region48: #{tpu_custom_call.1} parent=11 // pred_fallthru
          _
        // Predicated region
        $region49: #{tpu_custom_call.1} parent=11 // pred_check
          %p368 = pneg %p258
        $region50: #{tpu_custom_call.1} parent=11 // pred_check_branch
          %370 = sbr.rel (%p368) target = $region52
        $region51: #{tpu_custom_call.1} parent=11 // pred_region
          _
        $region52: #{tpu_custom_call.1} parent=11 // pred_fallthru
          _
        // Predicated region
        $region53: #{tpu_custom_call.1} parent=11 // pred_check
          %p371 = pneg %p279
        $region54: #{tpu_custom_call.1} parent=11 // pred_check_branch
          %373 = sbr.rel (%p371) target = $region56
        $region55: #{tpu_custom_call.1} parent=11 // pred_region
          _
        $region56: #{tpu_custom_call.1} parent=11 // pred_fallthru
          _
        // Predicated region
        $region57: #{tpu_custom_call.1} parent=11 // pred_check
          %p374 = pneg %p300
        $region58: #{tpu_custom_call.1} parent=11 // pred_check_branch
          %376 = sbr.rel (%p374) target = $region60
        $region59: #{tpu_custom_call.1} parent=11 // pred_region
          _
        $region60: #{tpu_custom_call.1} parent=11 // pred_fallthru
          _
      $region12: #{tpu_custom_call.1} parent=5 // pred_fallthru
        _
      %p377 = scmp.lt.s32.totalorder %s22, 2
      // Predicated region
      $region61: #{tpu_custom_call.1} parent=5 // pred_check
        %p378 = pneg %p377
      $region62: #{tpu_custom_call.1} parent=5 // pred_check_branch
        %380 = sbr.rel (%p378) target = $region64
      $region63: #{tpu_custom_call.1} parent=5 // pred_region
        // Predicated region
        $region65: #{tpu_custom_call.1} parent=63 // pred_check
          %p381 = pneg %p42
        $region66: #{tpu_custom_call.1} parent=63 // pred_check_branch
          %383 = sbr.rel (%p381) target = $region68
        $region67: #{tpu_custom_call.1} parent=63 // pred_region
          %p384 = scmp.lt.s32.totalorder %s22, 1
          %s385 = scalar_select %p384, %s22, 1
          %s386 = smul.addr %s385, 8
          %s387 = scalar_lea.vmem %s0, %s386
        $region68: #{tpu_custom_call.1} parent=63 // pred_fallthru
          _
      $region64: #{tpu_custom_call.1} parent=5 // pred_fallthru
        _
      %p388 = scmp.le.s32.totalorder 1, %s22
      %p389 = scmp.lt.s32.totalorder %s22, 3
      %p390 = pnand %p388, %p389
      %p391 = pneg %p390
      // Predicated region
      $region69: #{tpu_custom_call.1} parent=5 // pred_check
        _
      $region70: #{tpu_custom_call.1} parent=5 // pred_check_branch
        %393 = sbr.rel (%p390) target = $region72
      $region71: #{tpu_custom_call.1} parent=5 // pred_region
        %s394 = ssub.s32 %s22, 1
        %p395 = scmp.lt.s32.totalorder %s27, 1
        %s396 = scalar_select %p395, %s27, 1
        %s397 = smul.addr %s396, 8
        %s398 = scalar_lea.vmem %s0, %s397
        %p399 = pneg %p48
        %p400 = pneg %p45
        %p401 = pneg %p69
        %p402 = pneg %p66
        %p403 = pneg %p90
        %p404 = pneg %p87
        %p405 = pneg %p111
        %p406 = pneg %p108
        %p407 = pneg %p132
        %p408 = pneg %p129
        %p409 = pneg %p153
        %p410 = pneg %p150
        %p411 = pneg %p174
        %p412 = pneg %p171
        %p413 = pneg %p195
        %p414 = pneg %p192
        %p415 = pneg %p216
        %p416 = pneg %p213
        %p417 = pneg %p237
        %p418 = pneg %p234
        %p419 = pneg %p258
        %p420 = pneg %p255
        %p421 = pneg %p279
        %p422 = pneg %p276
        %p423 = pneg %p300
        %p424 = pneg %p297
        %p425 = pneg %p326
        %p426 = pneg %p323
        %s427 = sand.u32 %s313, 1
        %s428 = scalar_lea.sflag [#allocation3], %s427
        %s429 = sand.u32 %s313, 1
        %s430 = smul.addr %s429, 8
        %s431 = scalar_lea.vmem [#allocation2], %s430
        %p432 = scmp.lt.s32.totalorder %s27, 1
        %s433 = scalar_select %p432, %s27, 1
        %s434 = smul.addr %s433, 8
        %s435 = scalar_lea.vmem %s0, %s434
        %v437 = vld [vmem:[%s435] sm:$0xff]
        %v438 = vld [vmem:[%s1] sm:$0x1]
        %v439 = vld [vmem:[%s2] sm:$0x1]
        %vm440 = vcmask 261120
        %v441 = vsel %vm440, %v437, 0.0
        %442 = vadd.xlane.f32.xlu0 %v441
        %v443 = vpop.xlane.xlu0 %442
        %v444 = vrcp.pop 32.0
        %v445 = vmul.f32 %v443, %v444
        %v446 = vsub.f32 %v437, %v445
        %v447 = vmul.f32 %v446, %v446
        %v448 = vsel %vm440, %v447, 0.0
        %449 = vadd.xlane.f32.xlu0 %v448
        %v450 = vpop.xlane.xlu0 %449
        %v451 = vmul.f32 %v450, %v444
        %v452 = vadd.f32 %v451, 1e-05
        %v453 = vrsqrt.pop %v452
        %v454 = vmul.f32 %v446, %v453
        %v456 = vlaneseq
        %v457 = vshrl.u32 %v456, 7
        %v458 = vsub.s32 0, %v457
        %v459 = vrot.slane %v438, %v458
        %v461 = vmul.f32 %v454, %v459
        %v463 = vlaneseq
        %v464 = vshrl.u32 %v463, 7
        %v465 = vsub.s32 0, %v464
        %v466 = vrot.slane %v439, %v465
        %v468 = vadd.f32 %v461, %v466
        %v469 = vpack.c.bf16 %v468, %v468
        %v470 = vld [vmem:[%s3] sm:$0xf]
        %v471 = vld [vmem:[%s3 + $0x4] sm:$0xf]
        %v472 = vld [vmem:[%s3 + $0x8] sm:$0xf]
        %v473 = vld [vmem:[%s3 + $0xc] sm:$0xf]
        %v474 = vld [vmem:[%s4] sm:$0x1]
        %v476 = vlaneseq
        %v477 = vshrl.u32 %v476, 7
        %v478 = vsub.s32 0, %v477
        %v479 = vrot.slane %v474, %v478
        %v485 = vunpack.c.l.b16 %v470
        %v486 = vunpack.c.l.b16 %v471
        %v487 = vunpack.c.l.b16 %v472
        %v488 = vunpack.c.l.b16 %v473
        %v489 = vpack.c.b16 %v486, %v485
        %v490 = vpack.c.b16 %v488, %v487
        %v494 = vsel %vm440, %v469, 0
        %496 = vmatprep.subr.bf16.mxu0 0
        %497 = vmatpush1.bf16.msra.mxu0 %v489
        %498 = vmatprep.subr.bf16.mxu0 0
        %499 = vmatpush1.bf16.msra.mxu0 %v490
        %500 = vmatprep.subr.bf16.mxu0 0
        %501 = vmatpush1.bf16.msra.mxu0 0
        %502 = vmatprep.subr.bf16.mxu0 0
        %503 = vmatpush1.bf16.msra.mxu0 0
        %504 = vmatprep.subr.bf16.mxu0 0
        %505 = vmatpush1.bf16.msra.mxu0 0
        %506 = vmatprep.subr.bf16.mxu0 0
        %507 = vmatpush1.bf16.msra.mxu0 0
        %508 = vmatprep.subr.bf16.mxu0 0
        %509 = vmatpush1.bf16.msra.mxu0 0
        %510 = vmatprep.subr.bf16.mxu0 0
        %511 = vmatpush1.bf16.msra.mxu0 0
        %512 = vmatprep.subr.bf16.mxu0 0
        %513 = vmatpush1.bf16.msra.mxu0 0
        %514 = vmatprep.subr.bf16.mxu0 0
        %515 = vmatpush1.bf16.msra.mxu0 0
        %516 = vmatprep.subr.bf16.mxu0 0
        %517 = vmatpush1.bf16.msra.mxu0 0
        %518 = vmatprep.subr.bf16.mxu0 0
        %519 = vmatpush1.bf16.msra.mxu0 0
        %520 = vmatprep.subr.bf16.mxu0 0
        %521 = vmatpush1.bf16.msra.mxu0 0
        %522 = vmatprep.subr.bf16.mxu0 0
        %523 = vmatpush1.bf16.msra.mxu0 0
        %524 = vmatprep.subr.bf16.mxu0 0
        %525 = vmatpush1.bf16.msra.mxu0 0
        %526 = vmatprep.subr.bf16.mxu0 0
        %527 = vmatpush1.bf16.msra.mxu0 0
        %528 = vmatprep.mubr.bf16.mxu0 0
        %529 = vmatmul.mubr.bf16.gmra.mrb[0].mxu0 %v494
        %v530 = vpop.f32.mrb[0].mxu0
        %v531 = vadd.f32 %v479, %v530
        %v532 = vpop.f32.mrb[0].mxu0
        %v533 = vpop.f32.mrb[0].mxu0
        %v534 = vpop.f32.mrb[0].mxu0
        %535 = vdwg.mxu0
        %537 = vrot.lane.b32.xlu0 %v531, 120
        %v538 = vpop.permute.xlu0 %537
        %540 = vrot.lane.b32.xlu0 %v531, 112
        %v541 = vpop.permute.xlu0 %540
        %543 = vrot.lane.b32.xlu0 %v531, 104
        %v544 = vpop.permute.xlu0 %543
        %v546 = vcombine.low %v531, %v541
        %v547 = vcombine.high %v531, %v541
        %v549 = vunpack.c.l.s4 1983009808
        %v550 = vunpack.c.0.s8 %v549
        %v551 = vlaneseq
        %v552 = vshrl.u32 %v551, 7
        %v553 = vsub.s32 %v550, %v552
        %v554 = vrot.slane %v546, %v553
        %v556 = vunpack.c.l.s4 1983009808
        %v557 = vunpack.c.0.s8 %v556
        %v558 = vlaneseq
        %v559 = vshrl.u32 %v558, 7
        %v560 = vsub.s32 %v557, %v559
        %v561 = vrot.slane %v547, %v560
        %v562 = vcombine.low %v538, %v544
        %v563 = vcombine.high %v538, %v544
        %v565 = vunpack.c.l.s4 1983009808
        %v566 = vunpack.c.0.s8 %v565
        %v567 = vlaneseq
        %v568 = vshrl.u32 %v567, 7
        %v569 = vsub.s32 %v566, %v568
        %v570 = vrot.slane %v562, %v569
        %v572 = vunpack.c.l.s4 1983009808
        %v573 = vunpack.c.0.s8 %v572
        %v574 = vlaneseq
        %v575 = vshrl.u32 %v574, 7
        %v576 = vsub.s32 %v573, %v575
        %v577 = vrot.slane %v563, %v576
        %v578 = vcombine.low %v554, %v570
        %v579 = vcombine.high %v554, %v570
        %v581 = vunpack.c.l.s4 1934713408
        %v582 = vunpack.c.0.s8 %v581
        %v583 = vlaneseq
        %v584 = vshrl.u32 %v583, 7
        %v585 = vsub.s32 %v582, %v584
        %v586 = vrot.slane %v578, %v585
        %v588 = vunpack.c.l.s4 1934713408
        %v589 = vunpack.c.0.s8 %v588
        %v590 = vlaneseq
        %v591 = vshrl.u32 %v590, 7
        %v592 = vsub.s32 %v589, %v591
        %v593 = vrot.slane %v579, %v592
        %v594 = vcombine.low %v561, %v577
        %v595 = vcombine.high %v561, %v577
        %v597 = vunpack.c.l.s4 1934713408
        %v598 = vunpack.c.0.s8 %v597
        %v599 = vlaneseq
        %v600 = vshrl.u32 %v599, 7
        %v601 = vsub.s32 %v598, %v600
        %v602 = vrot.slane %v594, %v601
        %v604 = vunpack.c.l.s4 1934713408
        %v605 = vunpack.c.0.s8 %v604
        %v606 = vlaneseq
        %v607 = vshrl.u32 %v606, 7
        %v608 = vsub.s32 %v605, %v607
        %v609 = vrot.slane %v595, %v608
        %v610 = vcombine.high %v586, 0.0
        %v611 = vcombine.high %v593, 0.0
        %v612 = vcombine.high %v602, 0.0
        %v613 = vcombine.high %v609, 0.0
        %v614 = vcombine.low %v586, %v593
        %v616 = vunpack.c.l.s4 1983009808
        %v617 = vunpack.c.0.s8 %v616
        %v618 = vlaneseq
        %v619 = vshrl.u32 %v618, 7
        %v620 = vsub.s32 %v617, %v619
        %v621 = vrot.slane %v614, %v620
        %v622 = vcombine.low %v610, %v611
        %v624 = vunpack.c.l.s4 1983009808
        %v625 = vunpack.c.0.s8 %v624
        %v626 = vlaneseq
        %v627 = vshrl.u32 %v626, 7
        %v628 = vsub.s32 %v625, %v627
        %v629 = vrot.slane %v622, %v628
        %v630 = vcombine.low %v602, %v609
        %v632 = vunpack.c.l.s4 1983009808
        %v633 = vunpack.c.0.s8 %v632
        %v634 = vlaneseq
        %v635 = vshrl.u32 %v634, 7
        %v636 = vsub.s32 %v633, %v635
        %v637 = vrot.slane %v630, %v636
        %v638 = vcombine.low %v612, %v613
        %v640 = vunpack.c.l.s4 1983009808
        %v641 = vunpack.c.0.s8 %v640
        %v642 = vlaneseq
        %v643 = vshrl.u32 %v642, 7
        %v644 = vsub.s32 %v641, %v643
        %v645 = vrot.slane %v638, %v644
        %v646 = vcombine.low %v621, %v629
        %v647 = vcombine.high %v621, %v629
        %v649 = vunpack.c.l.s4 1934713408
        %v650 = vunpack.c.0.s8 %v649
        %v651 = vlaneseq
        %v652 = vshrl.u32 %v651, 7
        %v653 = vsub.s32 %v650, %v652
        %v654 = vrot.slane %v646, %v653
        %v656 = vunpack.c.l.s4 1934713408
        %v657 = vunpack.c.0.s8 %v656
        %v658 = vlaneseq
        %v659 = vshrl.u32 %v658, 7
        %v660 = vsub.s32 %v657, %v659
        %v661 = vrot.slane %v647, %v660
        %v662 = vcombine.low %v637, %v645
        %v663 = vcombine.high %v637, %v645
        %v665 = vunpack.c.l.s4 1934713408
        %v666 = vunpack.c.0.s8 %v665
        %v667 = vlaneseq
        %v668 = vshrl.u32 %v667, 7
        %v669 = vsub.s32 %v666, %v668
        %v670 = vrot.slane %v662, %v669
        %v672 = vunpack.c.l.s4 1934713408
        %v673 = vunpack.c.0.s8 %v672
        %v674 = vlaneseq
        %v675 = vshrl.u32 %v674, 7
        %v676 = vsub.s32 %v673, %v675
        %v677 = vrot.slane %v663, %v676
        %v678 = vcombine.low %v654, %v670
        %v679 = vcombine.high %v654, %v670
        %v680 = vcombine.low %v661, %v677
        %v681 = vcombine.high %v661, %v677
        %v682 = vpack.c.bf16 %v678, %v678
        %v683 = vpack.c.bf16 %v679, %v679
        %v684 = vpack.c.bf16 %v680, %v680
        %v685 = vpack.c.bf16 %v681, %v681
        %686 = vrot.lane.b32.xlu0 %v531, 96
        %v687 = vpop.permute.xlu0 %686
        %688 = vrot.lane.b32.xlu0 %v538, 96
        %v689 = vpop.permute.xlu0 %688
        %690 = vrot.lane.b32.xlu0 %v541, 96
        %v691 = vpop.permute.xlu0 %690
        %692 = vrot.lane.b32.xlu0 %v544, 96
        %v693 = vpop.permute.xlu0 %692
        %v698 = vcombine.low %v687, %v691
        %v699 = vcombine.high %v687, %v691
        %v701 = vunpack.c.l.s4 1983009808
        %v702 = vunpack.c.0.s8 %v701
        %v703 = vlaneseq
        %v704 = vshrl.u32 %v703, 7
        %v705 = vsub.s32 %v702, %v704
        %v706 = vrot.slane %v698, %v705
        %v708 = vunpack.c.l.s4 1983009808
        %v709 = vunpack.c.0.s8 %v708
        %v710 = vlaneseq
        %v711 = vshrl.u32 %v710, 7
        %v712 = vsub.s32 %v709, %v711
        %v713 = vrot.slane %v699, %v712
        %v714 = vcombine.low %v689, %v693
        %v715 = vcombine.high %v689, %v693
        %v717 = vunpack.c.l.s4 1983009808
        %v718 = vunpack.c.0.s8 %v717
        %v719 = vlaneseq
        %v720 = vshrl.u32 %v719, 7
        %v721 = vsub.s32 %v718, %v720
        %v722 = vrot.slane %v714, %v721
        %v724 = vunpack.c.l.s4 1983009808
        %v725 = vunpack.c.0.s8 %v724
        %v726 = vlaneseq
        %v727 = vshrl.u32 %v726, 7
        %v728 = vsub.s32 %v725, %v727
        %v729 = vrot.slane %v715, %v728
        %v730 = vcombine.low %v706, %v722
        %v731 = vcombine.high %v706, %v722
        %v733 = vunpack.c.l.s4 1934713408
        %v734 = vunpack.c.0.s8 %v733
        %v735 = vlaneseq
        %v736 = vshrl.u32 %v735, 7
        %v737 = vsub.s32 %v734, %v736
        %v738 = vrot.slane %v730, %v737
        %v740 = vunpack.c.l.s4 1934713408
        %v741 = vunpack.c.0.s8 %v740
        %v742 = vlaneseq
        %v743 = vshrl.u32 %v742, 7
        %v744 = vsub.s32 %v741, %v743
        %v745 = vrot.slane %v731, %v744
        %v746 = vcombine.low %v713, %v729
        %v747 = vcombine.high %v713, %v729
        %v749 = vunpack.c.l.s4 1934713408
        %v750 = vunpack.c.0.s8 %v749
        %v751 = vlaneseq
        %v752 = vshrl.u32 %v751, 7
        %v753 = vsub.s32 %v750, %v752
        %v754 = vrot.slane %v746, %v753
        %v756 = vunpack.c.l.s4 1934713408
        %v757 = vunpack.c.0.s8 %v756
        %v758 = vlaneseq
        %v759 = vshrl.u32 %v758, 7
        %v760 = vsub.s32 %v757, %v759
        %v761 = vrot.slane %v747, %v760
        %v762 = vcombine.high %v738, 0.0
        %v763 = vcombine.high %v745, 0.0
        %v764 = vcombine.high %v754, 0.0
        %v765 = vcombine.high %v761, 0.0
        %v766 = vcombine.low %v738, %v745
        %v768 = vunpack.c.l.s4 1983009808
        %v769 = vunpack.c.0.s8 %v768
        %v770 = vlaneseq
        %v771 = vshrl.u32 %v770, 7
        %v772 = vsub.s32 %v769, %v771
        %v773 = vrot.slane %v766, %v772
        %v774 = vcombine.low %v762, %v763
        %v776 = vunpack.c.l.s4 1983009808
        %v777 = vunpack.c.0.s8 %v776
        %v778 = vlaneseq
        %v779 = vshrl.u32 %v778, 7
        %v780 = vsub.s32 %v777, %v779
        %v781 = vrot.slane %v774, %v780
        %v782 = vcombine.low %v754, %v761
        %v784 = vunpack.c.l.s4 1983009808
        %v785 = vunpack.c.0.s8 %v784
        %v786 = vlaneseq
        %v787 = vshrl.u32 %v786, 7
        %v788 = vsub.s32 %v785, %v787
        %v789 = vrot.slane %v782, %v788
        %v790 = vcombine.low %v764, %v765
        %v792 = vunpack.c.l.s4 1983009808
        %v793 = vunpack.c.0.s8 %v792
        %v794 = vlaneseq
        %v795 = vshrl.u32 %v794, 7
        %v796 = vsub.s32 %v793, %v795
        %v797 = vrot.slane %v790, %v796
        %v798 = vcombine.low %v773, %v781
        %v799 = vcombine.high %v773, %v781
        %v801 = vunpack.c.l.s4 1934713408
        %v802 = vunpack.c.0.s8 %v801
        %v803 = vlaneseq
        %v804 = vshrl.u32 %v803, 7
        %v805 = vsub.s32 %v802, %v804
        %v806 = vrot.slane %v798, %v805
        %v808 = vunpack.c.l.s4 1934713408
        %v809 = vunpack.c.0.s8 %v808
        %v810 = vlaneseq
        %v811 = vshrl.u32 %v810, 7
        %v812 = vsub.s32 %v809, %v811
        %v813 = vrot.slane %v799, %v812
        %v814 = vcombine.low %v789, %v797
        %v815 = vcombine.high %v789, %v797
        %v817 = vunpack.c.l.s4 1934713408
        %v818 = vunpack.c.0.s8 %v817
        %v819 = vlaneseq
        %v820 = vshrl.u32 %v819, 7
        %v821 = vsub.s32 %v818, %v820
        %v822 = vrot.slane %v814, %v821
        %v824 = vunpack.c.l.s4 1934713408
        %v825 = vunpack.c.0.s8 %v824
        %v826 = vlaneseq
        %v827 = vshrl.u32 %v826, 7
        %v828 = vsub.s32 %v825, %v827
        %v829 = vrot.slane %v815, %v828
        %v830 = vcombine.low %v806, %v822
        %v831 = vcombine.high %v806, %v822
        %v832 = vcombine.low %v813, %v829
        %v833 = vcombine.high %v813, %v829
        %v834 = vpack.c.bf16 %v830, %v830
        %v835 = vpack.c.bf16 %v831, %v831
        %v836 = vpack.c.bf16 %v832, %v832
        %v837 = vpack.c.bf16 %v833, %v833
        %838 = vrot.lane.b32.xlu0 %v531, 64
        %v839 = vpop.permute.xlu0 %838
        %840 = vrot.lane.b32.xlu0 %v538, 64
        %v841 = vpop.permute.xlu0 %840
        %842 = vrot.lane.b32.xlu0 %v541, 64
        %v843 = vpop.permute.xlu0 %842
        %844 = vrot.lane.b32.xlu0 %v544, 64
        %v845 = vpop.permute.xlu0 %844
        %v850 = vcombine.low %v839, %v843
        %v851 = vcombine.high %v839, %v843
        %v853 = vunpack.c.l.s4 1983009808
        %v854 = vunpack.c.0.s8 %v853
        %v855 = vlaneseq
        %v856 = vshrl.u32 %v855, 7
        %v857 = vsub.s32 %v854, %v856
        %v858 = vrot.slane %v850, %v857
        %v860 = vunpack.c.l.s4 1983009808
        %v861 = vunpack.c.0.s8 %v860
        %v862 = vlaneseq
        %v863 = vshrl.u32 %v862, 7
        %v864 = vsub.s32 %v861, %v863
        %v865 = vrot.slane %v851, %v864
        %v866 = vcombine.low %v841, %v845
        %v867 = vcombine.high %v841, %v845
        %v869 = vunpack.c.l.s4 1983009808
        %v870 = vunpack.c.0.s8 %v869
        %v871 = vlaneseq
        %v872 = vshrl.u32 %v871, 7
        %v873 = vsub.s32 %v870, %v872
        %v874 = vrot.slane %v866, %v873
        %v876 = vunpack.c.l.s4 1983009808
        %v877 = vunpack.c.0.s8 %v876
        %v878 = vlaneseq
        %v879 = vshrl.u32 %v878, 7
        %v880 = vsub.s32 %v877, %v879
        %v881 = vrot.slane %v867, %v880
        %v882 = vcombine.low %v858, %v874
        %v883 = vcombine.high %v858, %v874
        %v885 = vunpack.c.l.s4 1934713408
        %v886 = vunpack.c.0.s8 %v885
        %v887 = vlaneseq
        %v888 = vshrl.u32 %v887, 7
        %v889 = vsub.s32 %v886, %v888
        %v890 = vrot.slane %v882, %v889
        %v892 = vunpack.c.l.s4 1934713408
        %v893 = vunpack.c.0.s8 %v892
        %v894 = vlaneseq
        %v895 = vshrl.u32 %v894, 7
        %v896 = vsub.s32 %v893, %v895
        %v897 = vrot.slane %v883, %v896
        %v898 = vcombine.low %v865, %v881
        %v899 = vcombine.high %v865, %v881
        %v901 = vunpack.c.l.s4 1934713408
        %v902 = vunpack.c.0.s8 %v901
        %v903 = vlaneseq
        %v904 = vshrl.u32 %v903, 7
        %v905 = vsub.s32 %v902, %v904
        %v906 = vrot.slane %v898, %v905
        %v908 = vunpack.c.l.s4 1934713408
        %v909 = vunpack.c.0.s8 %v908
        %v910 = vlaneseq
        %v911 = vshrl.u32 %v910, 7
        %v912 = vsub.s32 %v909, %v911
        %v913 = vrot.slane %v899, %v912
        %v914 = vcombine.high %v890, 0.0
        %v915 = vcombine.high %v897, 0.0
        %v916 = vcombine.high %v906, 0.0
        %v917 = vcombine.high %v913, 0.0
        %v918 = vcombine.low %v890, %v897
        %v920 = vunpack.c.l.s4 1983009808
        %v921 = vunpack.c.0.s8 %v920
        %v922 = vlaneseq
        %v923 = vshrl.u32 %v922, 7
        %v924 = vsub.s32 %v921, %v923
        %v925 = vrot.slane %v918, %v924
        %v926 = vcombine.low %v914, %v915
        %v928 = vunpack.c.l.s4 1983009808
        %v929 = vunpack.c.0.s8 %v928
        %v930 = vlaneseq
        %v931 = vshrl.u32 %v930, 7
        %v932 = vsub.s32 %v929, %v931
        %v933 = vrot.slane %v926, %v932
        %v934 = vcombine.low %v906, %v913
        %v936 = vunpack.c.l.s4 1983009808
        %v937 = vunpack.c.0.s8 %v936
        %v938 = vlaneseq
        %v939 = vshrl.u32 %v938, 7
        %v940 = vsub.s32 %v937, %v939
        %v941 = vrot.slane %v934, %v940
        %v942 = vcombine.low %v916, %v917
        %v944 = vunpack.c.l.s4 1983009808
        %v945 = vunpack.c.0.s8 %v944
        %v946 = vlaneseq
        %v947 = vshrl.u32 %v946, 7
        %v948 = vsub.s32 %v945, %v947
        %v949 = vrot.slane %v942, %v948
        %v950 = vcombine.low %v925, %v933
        %v951 = vcombine.high %v925, %v933
        %v953 = vunpack.c.l.s4 1934713408
        %v954 = vunpack.c.0.s8 %v953
        %v955 = vlaneseq
        %v956 = vshrl.u32 %v955, 7
        %v957 = vsub.s32 %v954, %v956
        %v958 = vrot.slane %v950, %v957
        %v960 = vunpack.c.l.s4 1934713408
        %v961 = vunpack.c.0.s8 %v960
        %v962 = vlaneseq
        %v963 = vshrl.u32 %v962, 7
        %v964 = vsub.s32 %v961, %v963
        %v965 = vrot.slane %v951, %v964
        %v966 = vcombine.low %v941, %v949
        %v967 = vcombine.high %v941, %v949
        %v969 = vunpack.c.l.s4 1934713408
        %v970 = vunpack.c.0.s8 %v969
        %v971 = vlaneseq
        %v972 = vshrl.u32 %v971, 7
        %v973 = vsub.s32 %v970, %v972
        %v974 = vrot.slane %v966, %v973
        %v976 = vunpack.c.l.s4 1934713408
        %v977 = vunpack.c.0.s8 %v976
        %v978 = vlaneseq
        %v979 = vshrl.u32 %v978, 7
        %v980 = vsub.s32 %v977, %v979
        %v981 = vrot.slane %v967, %v980
        %v982 = vcombine.low %v958, %v974
        %v983 = vcombine.high %v958, %v974
        %v984 = vcombine.low %v965, %v981
        %v985 = vcombine.high %v965, %v981
        %v986 = vpack.c.bf16 %v982, %v982
        %v987 = vpack.c.bf16 %v983, %v983
        %v988 = vpack.c.bf16 %v984, %v984
        %v989 = vpack.c.bf16 %v985, %v985
        %vm990 = vcmask 64512
        %v992 = vsel %vm990, %v682, 0
        %v995 = vsel %vm990, %v834, 0
        %997 = vmatprep.subr.bf16.mxu0 0
        %998 = vmatpush1.bf16.xpose.msra.mxu0 %v995
        %999 = vmatprep.subr.bf16.mxu0 0
        %1000 = vmatpush1.bf16.xpose.msra.mxu0 0
        %1001 = vmatprep.subr.bf16.mxu0 0
        %1002 = vmatpush1.bf16.xpose.msra.mxu0 0
        %1003 = vmatprep.subr.bf16.mxu0 0
        %1004 = vmatpush1.bf16.xpose.msra.mxu0 0
        %1005 = vmatprep.subr.bf16.mxu0 0
        %1006 = vmatpush1.bf16.xpose.msra.mxu0 0
        %1007 = vmatprep.subr.bf16.mxu0 0
        %1008 = vmatpush1.bf16.xpose.msra.mxu0 0
        %1009 = vmatprep.subr.bf16.mxu0 0
        %1010 = vmatpush1.bf16.xpose.msra.mxu0 0
        %1011 = vmatprep.subr.bf16.mxu0 0
        %1012 = vmatpush1.bf16.xpose.msra.mxu0 0
        %1013 = vmatprep.subr.bf16.mxu0 0
        %1014 = vmatpush1.bf16.xpose.msra.mxu0 0
        %1015 = vmatprep.subr.bf16.mxu0 0
        %1016 = vmatpush1.bf16.xpose.msra.mxu0 0
        %1017 = vmatprep.subr.bf16.mxu0 0
        %1018 = vmatpush1.bf16.xpose.msra.mxu0 0
        %1019 = vmatprep.subr.bf16.mxu0 0
        %1020 = vmatpush1.bf16.xpose.msra.mxu0 0
        %1021 = vmatprep.subr.bf16.mxu0 0
        %1022 = vmatpush1.bf16.xpose.msra.mxu0 0
        %1023 = vmatprep.subr.bf16.mxu0 0
        %1024 = vmatpush1.bf16.xpose.msra.mxu0 0
        %1025 = vmatprep.subr.bf16.mxu0 0
        %1026 = vmatpush1.bf16.xpose.msra.mxu0 0
        %1027 = vmatprep.subr.bf16.mxu0 0
        %1028 = vmatpush1.bf16.xpose.msra.mxu0 0
        %1029 = vmatprep.mubr.bf16.mxu0 0
        %1030 = vmatmul.mubr.bf16.gmra.mrb[0].mxu0 %v992
        %v1031 = vpop.f32.mrb[0].mxu0
        %v1032 = vadd.f32 0.0, %v1031
        %v1033 = vpop.f32.mrb[0].mxu0
        %v1034 = vpop.f32.mrb[0].mxu0
        %v1035 = vpop.f32.mrb[0].mxu0
        %1036 = vdwg.mxu0
        %v1038 = vsel %vm990, %v683, 0
        %v1041 = vsel %vm990, %v835, 0
        %1043 = vmatprep.subr.bf16.mxu0 0
        %1044 = vmatpush1.bf16.xpose.msra.mxu0 %v1041
        %1045 = vmatprep.subr.bf16.mxu0 0
        %1046 = vmatpush1.bf16.xpose.msra.mxu0 0
        %1047 = vmatprep.subr.bf16.mxu0 0
        %1048 = vmatpush1.bf16.xpose.msra.mxu0 0
        %1049 = vmatprep.subr.bf16.mxu0 0
        %1050 = vmatpush1.bf16.xpose.msra.mxu0 0
        %1051 = vmatprep.subr.bf16.mxu0 0
        %1052 = vmatpush1.bf16.xpose.msra.mxu0 0
        %1053 = vmatprep.subr.bf16.mxu0 0
        %1054 = vmatpush1.bf16.xpose.msra.mxu0 0
        %1055 = vmatprep.subr.bf16.mxu0 0
        %1056 = vmatpush1.bf16.xpose.msra.mxu0 0
        %1057 = vmatprep.subr.bf16.mxu0 0
        %1058 = vmatpush1.bf16.xpose.msra.mxu0 0
        %1059 = vmatprep.subr.bf16.mxu0 0
        %1060 = vmatpush1.bf16.xpose.msra.mxu0 0
        %1061 = vmatprep.subr.bf16.mxu0 0
        %1062 = vmatpush1.bf16.xpose.msra.mxu0 0
        %1063 = vmatprep.subr.bf16.mxu0 0
        %1064 = vmatpush1.bf16.xpose.msra.mxu0 0
        %1065 = vmatprep.subr.bf16.mxu0 0
        %1066 = vmatpush1.bf16.xpose.msra.mxu0 0
        %1067 = vmatprep.subr.bf16.mxu0 0
        %1068 = vmatpush1.bf16.xpose.msra.mxu0 0
        %1069 = vmatprep.subr.bf16.mxu0 0
        %1070 = vmatpush1.bf16.xpose.msra.mxu0 0
        %1071 = vmatprep.subr.bf16.mxu0 0
        %1072 = vmatpush1.bf16.xpose.msra.mxu0 0
        %1073 = vmatprep.subr.bf16.mxu0 0
        %1074 = vmatpush1.bf16.xpose.msra.mxu0 0
        %1075 = vmatprep.mubr.bf16.mxu0 0
        %1076 = vmatmul.mubr.bf16.gmra.mrb[0].mxu0 %v1038
        %v1077 = vpop.f32.mrb[0].mxu0
        %v1078 = vadd.f32 0.0, %v1077
        %v1079 = vpop.f32.mrb[0].mxu0
        %v1080 = vpop.f32.mrb[0].mxu0
        %v1081 = vpop.f32.mrb[0].mxu0
        %1082 = vdwg.mxu0
        %v1084 = vsel %vm990, %v684, 0
        %v1087 = vsel %vm990, %v836, 0
        %1089 = vmatprep.subr.bf16.mxu0 0
        %1090 = vmatpush1.bf16.xpose.msra.mxu0 %v1087
        %1091 = vmatprep.subr.bf16.mxu0 0
        %1092 = vmatpush1.bf16.xpose.msra.mxu0 0
        %1093 = vmatprep.subr.bf16.mxu0 0
        %1094 = vmatpush1.bf16.xpose.msra.mxu0 0
        %1095 = vmatprep.subr.bf16.mxu0 0
        %1096 = vmatpush1.bf16.xpose.msra.mxu0 0
        %1097 = vmatprep.subr.bf16.mxu0 0
        %1098 = vmatpush1.bf16.xpose.msra.mxu0 0
        %1099 = vmatprep.subr.bf16.mxu0 0
        %1100 = vmatpush1.bf16.xpose.msra.mxu0 0
        %1101 = vmatprep.subr.bf16.mxu0 0
        %1102 = vmatpush1.bf16.xpose.msra.mxu0 0
        %1103 = vmatprep.subr.bf16.mxu0 0
        %1104 = vmatpush1.bf16.xpose.msra.mxu0 0
        %1105 = vmatprep.subr.bf16.mxu0 0
        %1106 = vmatpush1.bf16.xpose.msra.mxu0 0
        %1107 = vmatprep.subr.bf16.mxu0 0
        %1108 = vmatpush1.bf16.xpose.msra.mxu0 0
        %1109 = vmatprep.subr.bf16.mxu0 0
        %1110 = vmatpush1.bf16.xpose.msra.mxu0 0
        %1111 = vmatprep.subr.bf16.mxu0 0
        %1112 = vmatpush1.bf16.xpose.msra.mxu0 0
        %1113 = vmatprep.subr.bf16.mxu0 0
        %1114 = vmatpush1.bf16.xpose.msra.mxu0 0
        %1115 = vmatprep.subr.bf16.mxu0 0
        %1116 = vmatpush1.bf16.xpose.msra.mxu0 0
        %1117 = vmatprep.subr.bf16.mxu0 0
        %1118 = vmatpush1.bf16.xpose.msra.mxu0 0
        %1119 = vmatprep.subr.bf16.mxu0 0
        %1120 = vmatpush1.bf16.xpose.msra.mxu0 0
        %1121 = vmatprep.mubr.bf16.mxu0 0
        %1122 = vmatmul.mubr.bf16.gmra.mrb[0].mxu0 %v1084
        %v1123 = vpop.f32.mrb[0].mxu0
        %v1124 = vadd.f32 0.0, %v1123
        %v1125 = vpop.f32.mrb[0].mxu0
        %v1126 = vpop.f32.mrb[0].mxu0
        %v1127 = vpop.f32.mrb[0].mxu0
        %1128 = vdwg.mxu0
        %v1130 = vsel %vm990, %v685, 0
        %v1133 = vsel %vm990, %v837, 0
        %1135 = vmatprep.subr.bf16.mxu0 0
        %1136 = vmatpush1.bf16.xpose.msra.mxu0 %v1133
        %1137 = vmatprep.subr.bf16.mxu0 0
        %1138 = vmatpush1.bf16.xpose.msra.mxu0 0
        %1139 = vmatprep.subr.bf16.mxu0 0
        %1140 = vmatpush1.bf16.xpose.msra.mxu0 0
        %1141 = vmatprep.subr.bf16.mxu0 0
        %1142 = vmatpush1.bf16.xpose.msra.mxu0 0
        %1143 = vmatprep.subr.bf16.mxu0 0
        %1144 = vmatpush1.bf16.xpose.msra.mxu0 0
        %1145 = vmatprep.subr.bf16.mxu0 0
        %1146 = vmatpush1.bf16.xpose.msra.mxu0 0
        %1147 = vmatprep.subr.bf16.mxu0 0
        %1148 = vmatpush1.bf16.xpose.msra.mxu0 0
        %1149 = vmatprep.subr.bf16.mxu0 0
        %1150 = vmatpush1.bf16.xpose.msra.mxu0 0
        %1151 = vmatprep.subr.bf16.mxu0 0
        %1152 = vmatpush1.bf16.xpose.msra.mxu0 0
        %1153 = vmatprep.subr.bf16.mxu0 0
        %1154 = vmatpush1.bf16.xpose.msra.mxu0 0
        %1155 = vmatprep.subr.bf16.mxu0 0
        %1156 = vmatpush1.bf16.xpose.msra.mxu0 0
        %1157 = vmatprep.subr.bf16.mxu0 0
        %1158 = vmatpush1.bf16.xpose.msra.mxu0 0
        %1159 = vmatprep.subr.bf16.mxu0 0
        %1160 = vmatpush1.bf16.xpose.msra.mxu0 0
        %1161 = vmatprep.subr.bf16.mxu0 0
        %1162 = vmatpush1.bf16.xpose.msra.mxu0 0
        %1163 = vmatprep.subr.bf16.mxu0 0
        %1164 = vmatpush1.bf16.xpose.msra.mxu0 0
        %1165 = vmatprep.subr.bf16.mxu0 0
        %1166 = vmatpush1.bf16.xpose.msra.mxu0 0
        %1167 = vmatprep.mubr.bf16.mxu0 0
        %1168 = vmatmul.mubr.bf16.gmra.mrb[0].mxu0 %v1130
        %v1169 = vpop.f32.mrb[0].mxu0
        %v1170 = vadd.f32 0.0, %v1169
        %v1171 = vpop.f32.mrb[0].mxu0
        %v1172 = vpop.f32.mrb[0].mxu0
        %v1173 = vpop.f32.mrb[0].mxu0
        %1174 = vdwg.mxu0
        %v1175 = vlaneseq
        %v1176 = vshrl.u32 %v1175, 7
        %v1177 = vlaneseq
        %v1178 = vand.u32 %v1177, 127
        %vm1179 = vcmp.ge.s32.totalorder %v1176, %v1178
        %v1180 = vsel %vm1179, 1, 0
        %vm1181 = vcmp.eq.s32.totalorder %v1180, 1
        %v1182 = vsel %vm1181, %v1032, -10000.0
        %v1183 = vsel %vm1181, %v1078, -10000.0
        %v1184 = vsel %vm1181, %v1124, -10000.0
        %v1185 = vsel %vm1181, %v1170, -10000.0
        %v1186 = vsel %vm990, %v1182, -inf
        %1187 = vmax.xlane.f32.xlu0 %v1186
        %v1188 = vpop.xlane.xlu0 %1187
        %v1189 = vsel %vm990, %v1183, -inf
        %1190 = vmax.xlane.f32.xlu0 %v1189
        %v1191 = vpop.xlane.xlu0 %1190
        %v1192 = vsel %vm990, %v1184, -inf
        %1193 = vmax.xlane.f32.xlu0 %v1192
        %v1194 = vpop.xlane.xlu0 %1193
        %v1195 = vsel %vm990, %v1185, -inf
        %1196 = vmax.xlane.f32.xlu0 %v1195
        %v1197 = vpop.xlane.xlu0 %1196
        %v1198 = vsub.f32 %v1182, %v1188
        %v1199 = vsub.f32 %v1183, %v1191
        %v1200 = vsub.f32 %v1184, %v1194
        %v1201 = vsub.f32 %v1185, %v1197
        %v1202 = vmul.f32 %v1198, 1.442695
        %v1203 = vpow.pop %v1202
        %v1204 = vmul.f32 %v1199, 1.442695
        %v1205 = vpow.pop %v1204
        %v1206 = vmul.f32 %v1200, 1.442695
        %v1207 = vpow.pop %v1206
        %v1208 = vmul.f32 %v1201, 1.442695
        %v1209 = vpow.pop %v1208
        %v1210 = vsel %vm990, %v1203, 0.0
        %1211 = vadd.xlane.f32.xlu0 %v1210
        %v1212 = vpop.xlane.xlu0 %1211
        %v1213 = vsel %vm990, %v1205, 0.0
        %1214 = vadd.xlane.f32.xlu0 %v1213
        %v1215 = vpop.xlane.xlu0 %1214
        %v1216 = vsel %vm990, %v1207, 0.0
        %1217 = vadd.xlane.f32.xlu0 %v1216
        %v1218 = vpop.xlane.xlu0 %1217
        %v1219 = vsel %vm990, %v1209, 0.0
        %1220 = vadd.xlane.f32.xlu0 %v1219
        %v1221 = vpop.xlane.xlu0 %1220
        %v1222 = vrcp.pop %v1212
        %v1223 = vrcp.pop %v1215
        %v1224 = vrcp.pop %v1218
        %v1225 = vrcp.pop %v1221
        %v1226 = vmul.f32 %v1203, %v1222
        %v1227 = vmul.f32 %v1205, %v1223
        %v1228 = vmul.f32 %v1207, %v1224
        %v1229 = vmul.f32 %v1209, %v1225
        %v1230 = vpack.c.bf16 %v1226, %v1226
        %v1231 = vpack.c.bf16 %v1227, %v1227
        %v1232 = vpack.c.bf16 %v1228, %v1228
        %v1233 = vpack.c.bf16 %v1229, %v1229
        %v1235 = vsel %vm990, %v1230, 0
        %vm1237 = vcmask 1043456
        %v1239 = vsel %vm1237, %v986, 0
        %1241 = vmatprep.subr.bf16.mxu0 0
        %1242 = vmatpush1.bf16.msra.mxu0 %v1239
        %1243 = vmatprep.subr.bf16.mxu0 0
        %1244 = vmatpush1.bf16.msra.mxu0 0
        %1245 = vmatprep.subr.bf16.mxu0 0
        %1246 = vmatpush1.bf16.msra.mxu0 0
        %1247 = vmatprep.subr.bf16.mxu0 0
        %1248 = vmatpush1.bf16.msra.mxu0 0
        %1249 = vmatprep.subr.bf16.mxu0 0
        %1250 = vmatpush1.bf16.msra.mxu0 0
        %1251 = vmatprep.subr.bf16.mxu0 0
        %1252 = vmatpush1.bf16.msra.mxu0 0
        %1253 = vmatprep.subr.bf16.mxu0 0
        %1254 = vmatpush1.bf16.msra.mxu0 0
        %1255 = vmatprep.subr.bf16.mxu0 0
        %1256 = vmatpush1.bf16.msra.mxu0 0
        %1257 = vmatprep.subr.bf16.mxu0 0
        %1258 = vmatpush1.bf16.msra.mxu0 0
        %1259 = vmatprep.subr.bf16.mxu0 0
        %1260 = vmatpush1.bf16.msra.mxu0 0
        %1261 = vmatprep.subr.bf16.mxu0 0
        %1262 = vmatpush1.bf16.msra.mxu0 0
        %1263 = vmatprep.subr.bf16.mxu0 0
        %1264 = vmatpush1.bf16.msra.mxu0 0
        %1265 = vmatprep.subr.bf16.mxu0 0
        %1266 = vmatpush1.bf16.msra.mxu0 0
        %1267 = vmatprep.subr.bf16.mxu0 0
        %1268 = vmatpush1.bf16.msra.mxu0 0
        %1269 = vmatprep.subr.bf16.mxu0 0
        %1270 = vmatpush1.bf16.msra.mxu0 0
        %1271 = vmatprep.subr.bf16.mxu0 0
        %1272 = vmatpush1.bf16.msra.mxu0 0
        %1273 = vmatprep.mubr.bf16.mxu0 0
        %1274 = vmatmul.mubr.bf16.gmra.mrb[0].mxu0 %v1235
        %v1275 = vpop.f32.mrb[0].mxu0
        %v1276 = vadd.f32 0.0, %v1275
        %v1277 = vpop.f32.mrb[0].mxu0
        %v1278 = vpop.f32.mrb[0].mxu0
        %v1279 = vpop.f32.mrb[0].mxu0
        %1280 = vdwg.mxu0
        %v1282 = vsel %vm990, %v1231, 0
        %v1285 = vsel %vm1237, %v987, 0
        %1287 = vmatprep.subr.bf16.mxu0 0
        %1288 = vmatpush1.bf16.msra.mxu0 %v1285
        %1289 = vmatprep.subr.bf16.mxu0 0
        %1290 = vmatpush1.bf16.msra.mxu0 0
        %1291 = vmatprep.subr.bf16.mxu0 0
        %1292 = vmatpush1.bf16.msra.mxu0 0
        %1293 = vmatprep.subr.bf16.mxu0 0
        %1294 = vmatpush1.bf16.msra.mxu0 0
        %1295 = vmatprep.subr.bf16.mxu0 0
        %1296 = vmatpush1.bf16.msra.mxu0 0
        %1297 = vmatprep.subr.bf16.mxu0 0
        %1298 = vmatpush1.bf16.msra.mxu0 0
        %1299 = vmatprep.subr.bf16.mxu0 0
        %1300 = vmatpush1.bf16.msra.mxu0 0
        %1301 = vmatprep.subr.bf16.mxu0 0
        %1302 = vmatpush1.bf16.msra.mxu0 0
        %1303 = vmatprep.subr.bf16.mxu0 0
        %1304 = vmatpush1.bf16.msra.mxu0 0
        %1305 = vmatprep.subr.bf16.mxu0 0
        %1306 = vmatpush1.bf16.msra.mxu0 0
        %1307 = vmatprep.subr.bf16.mxu0 0
        %1308 = vmatpush1.bf16.msra.mxu0 0
        %1309 = vmatprep.subr.bf16.mxu0 0
        %1310 = vmatpush1.bf16.msra.mxu0 0
        %1311 = vmatprep.subr.bf16.mxu0 0
        %1312 = vmatpush1.bf16.msra.mxu0 0
        %1313 = vmatprep.subr.bf16.mxu0 0
        %1314 = vmatpush1.bf16.msra.mxu0 0
        %1315 = vmatprep.subr.bf16.mxu0 0
        %1316 = vmatpush1.bf16.msra.mxu0 0
        %1317 = vmatprep.subr.bf16.mxu0 0
        %1318 = vmatpush1.bf16.msra.mxu0 0
        %1319 = vmatprep.mubr.bf16.mxu0 0
        %1320 = vmatmul.mubr.bf16.gmra.mrb[0].mxu0 %v1282
        %v1321 = vpop.f32.mrb[0].mxu0
        %v1322 = vadd.f32 0.0, %v1321
        %v1323 = vpop.f32.mrb[0].mxu0
        %v1324 = vpop.f32.mrb[0].mxu0
        %v1325 = vpop.f32.mrb[0].mxu0
        %1326 = vdwg.mxu0
        %v1328 = vsel %vm990, %v1232, 0
        %v1331 = vsel %vm1237, %v988, 0
        %1333 = vmatprep.subr.bf16.mxu0 0
        %1334 = vmatpush1.bf16.msra.mxu0 %v1331
        %1335 = vmatprep.subr.bf16.mxu0 0
        %1336 = vmatpush1.bf16.msra.mxu0 0
        %1337 = vmatprep.subr.bf16.mxu0 0
        %1338 = vmatpush1.bf16.msra.mxu0 0
        %1339 = vmatprep.subr.bf16.mxu0 0
        %1340 = vmatpush1.bf16.msra.mxu0 0
        %1341 = vmatprep.subr.bf16.mxu0 0
        %1342 = vmatpush1.bf16.msra.mxu0 0
        %1343 = vmatprep.subr.bf16.mxu0 0
        %1344 = vmatpush1.bf16.msra.mxu0 0
        %1345 = vmatprep.subr.bf16.mxu0 0
        %1346 = vmatpush1.bf16.msra.mxu0 0
        %1347 = vmatprep.subr.bf16.mxu0 0
        %1348 = vmatpush1.bf16.msra.mxu0 0
        %1349 = vmatprep.subr.bf16.mxu0 0
        %1350 = vmatpush1.bf16.msra.mxu0 0
        %1351 = vmatprep.subr.bf16.mxu0 0
        %1352 = vmatpush1.bf16.msra.mxu0 0
        %1353 = vmatprep.subr.bf16.mxu0 0
        %1354 = vmatpush1.bf16.msra.mxu0 0
        %1355 = vmatprep.subr.bf16.mxu0 0
        %1356 = vmatpush1.bf16.msra.mxu0 0
        %1357 = vmatprep.subr.bf16.mxu0 0
        %1358 = vmatpush1.bf16.msra.mxu0 0
        %1359 = vmatprep.subr.bf16.mxu0 0
        %1360 = vmatpush1.bf16.msra.mxu0 0
        %1361 = vmatprep.subr.bf16.mxu0 0
        %1362 = vmatpush1.bf16.msra.mxu0 0
        %1363 = vmatprep.subr.bf16.mxu0 0
        %1364 = vmatpush1.bf16.msra.mxu0 0
        %1365 = vmatprep.mubr.bf16.mxu0 0
        %1366 = vmatmul.mubr.bf16.gmra.mrb[0].mxu0 %v1328
        %v1367 = vpop.f32.mrb[0].mxu0
        %v1368 = vadd.f32 0.0, %v1367
        %v1369 = vpop.f32.mrb[0].mxu0
        %v1370 = vpop.f32.mrb[0].mxu0
        %v1371 = vpop.f32.mrb[0].mxu0
        %1372 = vdwg.mxu0
        %v1374 = vsel %vm990, %v1233, 0
        %v1377 = vsel %vm1237, %v989, 0
        %1379 = vmatprep.subr.bf16.mxu0 0
        %1380 = vmatpush1.bf16.msra.mxu0 %v1377
        %1381 = vmatprep.subr.bf16.mxu0 0
        %1382 = vmatpush1.bf16.msra.mxu0 0
        %1383 = vmatprep.subr.bf16.mxu0 0
        %1384 = vmatpush1.bf16.msra.mxu0 0
        %1385 = vmatprep.subr.bf16.mxu0 0
        %1386 = vmatpush1.bf16.msra.mxu0 0
        %1387 = vmatprep.subr.bf16.mxu0 0
        %1388 = vmatpush1.bf16.msra.mxu0 0
        %1389 = vmatprep.subr.bf16.mxu0 0
        %1390 = vmatpush1.bf16.msra.mxu0 0
        %1391 = vmatprep.subr.bf16.mxu0 0
        %1392 = vmatpush1.bf16.msra.mxu0 0
        %1393 = vmatprep.subr.bf16.mxu0 0
        %1394 = vmatpush1.bf16.msra.mxu0 0
        %1395 = vmatprep.subr.bf16.mxu0 0
        %1396 = vmatpush1.bf16.msra.mxu0 0
        %1397 = vmatprep.subr.bf16.mxu0 0
        %1398 = vmatpush1.bf16.msra.mxu0 0
        %1399 = vmatprep.subr.bf16.mxu0 0
        %1400 = vmatpush1.bf16.msra.mxu0 0
        %1401 = vmatprep.subr.bf16.mxu0 0
        %1402 = vmatpush1.bf16.msra.mxu0 0
        %1403 = vmatprep.subr.bf16.mxu0 0
        %1404 = vmatpush1.bf16.msra.mxu0 0
        %1405 = vmatprep.subr.bf16.mxu0 0
        %1406 = vmatpush1.bf16.msra.mxu0 0
        %1407 = vmatprep.subr.bf16.mxu0 0
        %1408 = vmatpush1.bf16.msra.mxu0 0
        %1409 = vmatprep.subr.bf16.mxu0 0
        %1410 = vmatpush1.bf16.msra.mxu0 0
        %1411 = vmatprep.mubr.bf16.mxu0 0
        %1412 = vmatmul.mubr.bf16.gmra.mrb[0].mxu0 %v1374
        %v1413 = vpop.f32.mrb[0].mxu0
        %v1414 = vadd.f32 0.0, %v1413
        %v1415 = vpop.f32.mrb[0].mxu0
        %v1416 = vpop.f32.mrb[0].mxu0
        %v1417 = vpop.f32.mrb[0].mxu0
        %1418 = vdwg.mxu0
        %v1419 = vcombine.low %v1276, %v1368
        %v1420 = vcombine.high %v1276, %v1368
        %v1422 = vunpack.c.l.s4 1983009808
        %v1423 = vunpack.c.0.s8 %v1422
        %v1424 = vlaneseq
        %v1425 = vshrl.u32 %v1424, 7
        %v1426 = vsub.s32 %v1423, %v1425
        %v1427 = vrot.slane %v1419, %v1426
        %v1429 = vunpack.c.l.s4 1983009808
        %v1430 = vunpack.c.0.s8 %v1429
        %v1431 = vlaneseq
        %v1432 = vshrl.u32 %v1431, 7
        %v1433 = vsub.s32 %v1430, %v1432
        %v1434 = vrot.slane %v1420, %v1433
        %v1435 = vcombine.low %v1322, %v1414
        %v1436 = vcombine.high %v1322, %v1414
        %v1438 = vunpack.c.l.s4 1983009808
        %v1439 = vunpack.c.0.s8 %v1438
        %v1440 = vlaneseq
        %v1441 = vshrl.u32 %v1440, 7
        %v1442 = vsub.s32 %v1439, %v1441
        %v1443 = vrot.slane %v1435, %v1442
        %v1445 = vunpack.c.l.s4 1983009808
        %v1446 = vunpack.c.0.s8 %v1445
        %v1447 = vlaneseq
        %v1448 = vshrl.u32 %v1447, 7
        %v1449 = vsub.s32 %v1446, %v1448
        %v1450 = vrot.slane %v1436, %v1449
        %v1451 = vcombine.low %v1427, %v1443
        %v1452 = vcombine.high %v1427, %v1443
        %v1454 = vunpack.c.l.s4 1934713408
        %v1455 = vunpack.c.0.s8 %v1454
        %v1456 = vlaneseq
        %v1457 = vshrl.u32 %v1456, 7
        %v1458 = vsub.s32 %v1455, %v1457
        %v1459 = vrot.slane %v1451, %v1458
        %v1461 = vunpack.c.l.s4 1934713408
        %v1462 = vunpack.c.0.s8 %v1461
        %v1463 = vlaneseq
        %v1464 = vshrl.u32 %v1463, 7
        %v1465 = vsub.s32 %v1462, %v1464
        %v1466 = vrot.slane %v1452, %v1465
        %v1467 = vcombine.low %v1434, %v1450
        %v1468 = vcombine.high %v1434, %v1450
        %v1470 = vunpack.c.l.s4 1934713408
        %v1471 = vunpack.c.0.s8 %v1470
        %v1472 = vlaneseq
        %v1473 = vshrl.u32 %v1472, 7
        %v1474 = vsub.s32 %v1471, %v1473
        %v1475 = vrot.slane %v1467, %v1474
        %v1477 = vunpack.c.l.s4 1934713408
        %v1478 = vunpack.c.0.s8 %v1477
        %v1479 = vlaneseq
        %v1480 = vshrl.u32 %v1479, 7
        %v1481 = vsub.s32 %v1478, %v1480
        %v1482 = vrot.slane %v1468, %v1481
        %v1483 = vcombine.high %v1459, 0.0
        %v1484 = vcombine.high %v1466, 0.0
        %v1485 = vcombine.high %v1475, 0.0
        %v1486 = vcombine.high %v1482, 0.0
        %v1487 = vcombine.low %v1459, %v1466
        %v1489 = vunpack.c.l.s4 1983009808
        %v1490 = vunpack.c.0.s8 %v1489
        %v1491 = vlaneseq
        %v1492 = vshrl.u32 %v1491, 7
        %v1493 = vsub.s32 %v1490, %v1492
        %v1494 = vrot.slane %v1487, %v1493
        %v1495 = vcombine.low %v1483, %v1484
        %v1497 = vunpack.c.l.s4 1983009808
        %v1498 = vunpack.c.0.s8 %v1497
        %v1499 = vlaneseq
        %v1500 = vshrl.u32 %v1499, 7
        %v1501 = vsub.s32 %v1498, %v1500
        %v1502 = vrot.slane %v1495, %v1501
        %v1503 = vcombine.low %v1475, %v1482
        %v1505 = vunpack.c.l.s4 1983009808
        %v1506 = vunpack.c.0.s8 %v1505
        %v1507 = vlaneseq
        %v1508 = vshrl.u32 %v1507, 7
        %v1509 = vsub.s32 %v1506, %v1508
        %v1510 = vrot.slane %v1503, %v1509
        %v1511 = vcombine.low %v1485, %v1486
        %v1513 = vunpack.c.l.s4 1983009808
        %v1514 = vunpack.c.0.s8 %v1513
        %v1515 = vlaneseq
        %v1516 = vshrl.u32 %v1515, 7
        %v1517 = vsub.s32 %v1514, %v1516
        %v1518 = vrot.slane %v1511, %v1517
        %v1519 = vcombine.low %v1494, %v1502
        %v1520 = vcombine.high %v1494, %v1502
        %v1522 = vunpack.c.l.s4 1934713408
        %v1523 = vunpack.c.0.s8 %v1522
        %v1524 = vlaneseq
        %v1525 = vshrl.u32 %v1524, 7
        %v1526 = vsub.s32 %v1523, %v1525
        %v1527 = vrot.slane %v1519, %v1526
        %v1529 = vunpack.c.l.s4 1934713408
        %v1530 = vunpack.c.0.s8 %v1529
        %v1531 = vlaneseq
        %v1532 = vshrl.u32 %v1531, 7
        %v1533 = vsub.s32 %v1530, %v1532
        %v1534 = vrot.slane %v1520, %v1533
        %v1535 = vcombine.low %v1510, %v1518
        %v1536 = vcombine.high %v1510, %v1518
        %v1538 = vunpack.c.l.s4 1934713408
        %v1539 = vunpack.c.0.s8 %v1538
        %v1540 = vlaneseq
        %v1541 = vshrl.u32 %v1540, 7
        %v1542 = vsub.s32 %v1539, %v1541
        %v1543 = vrot.slane %v1535, %v1542
        %v1545 = vunpack.c.l.s4 1934713408
        %v1546 = vunpack.c.0.s8 %v1545
        %v1547 = vlaneseq
        %v1548 = vshrl.u32 %v1547, 7
        %v1549 = vsub.s32 %v1546, %v1548
        %v1550 = vrot.slane %v1536, %v1549
        %v1551 = vcombine.low %v1527, %v1543
        %v1552 = vcombine.high %v1527, %v1543
        %v1553 = vcombine.low %v1534, %v1550
        %v1554 = vcombine.high %v1534, %v1550
        %1556 = vrot.lane.b32.xlu0 %v1552, 8
        %v1557 = vpop.permute.xlu0 %1556
        %1560 = vrot.lane.b32.xlu0 %v1553, 16
        %v1561 = vpop.permute.xlu0 %1560
        %1564 = vrot.lane.b32.xlu0 %v1554, 24
        %v1565 = vpop.permute.xlu0 %1564
        %v1567 = vsel %vm990, %v1551, %v1557
        %vm1568 = vcmask 130048
        %v1569 = vsel %vm1568, %v1567, %v1561
        %vm1570 = vcmask 195584
        %v1571 = vsel %vm1570, %v1569, %v1565
        %v1572 = vpack.c.bf16 %v1571, %v1571
        %v1573 = vld [vmem:[%s5] sm:$0xf]
        %v1574 = vld [vmem:[%s5 + $0x4] sm:$0xf]
        %v1575 = vld [vmem:[%s5 + $0x8] sm:$0xf]
        %v1576 = vld [vmem:[%s5 + $0xc] sm:$0xf]
        %v1577 = vld [vmem:[%s6] sm:$0x1]
        %v1579 = vlaneseq
        %v1580 = vshrl.u32 %v1579, 7
        %v1581 = vsub.s32 0, %v1580
        %v1582 = vrot.slane %v1577, %v1581
        %v1588 = vunpack.c.l.b16 %v1573
        %v1589 = vunpack.c.l.b16 %v1574
        %v1590 = vunpack.c.l.b16 %v1575
        %v1591 = vunpack.c.l.b16 %v1576
        %v1592 = vpack.c.b16 %v1589, %v1588
        %v1593 = vpack.c.b16 %v1591, %v1590
        %v1597 = vsel %vm440, %v1572, 0
        %1599 = vmatprep.subr.bf16.mxu0 0
        %1600 = vmatpush1.bf16.msra.mxu0 %v1592
        %1601 = vmatprep.subr.bf16.mxu0 0
        %1602 = vmatpush1.bf16.msra.mxu0 %v1593
        %1603 = vmatprep.subr.bf16.mxu0 0
        %1604 = vmatpush1.bf16.msra.mxu0 0
        %1605 = vmatprep.subr.bf16.mxu0 0
        %1606 = vmatpush1.bf16.msra.mxu0 0
        %1607 = vmatprep.subr.bf16.mxu0 0
        %1608 = vmatpush1.bf16.msra.mxu0 0
        %1609 = vmatprep.subr.bf16.mxu0 0
        %1610 = vmatpush1.bf16.msra.mxu0 0
        %1611 = vmatprep.subr.bf16.mxu0 0
        %1612 = vmatpush1.bf16.msra.mxu0 0
        %1613 = vmatprep.subr.bf16.mxu0 0
        %1614 = vmatpush1.bf16.msra.mxu0 0
        %1615 = vmatprep.subr.bf16.mxu0 0
        %1616 = vmatpush1.bf16.msra.mxu0 0
        %1617 = vmatprep.subr.bf16.mxu0 0
        %1618 = vmatpush1.bf16.msra.mxu0 0
        %1619 = vmatprep.subr.bf16.mxu0 0
        %1620 = vmatpush1.bf16.msra.mxu0 0
        %1621 = vmatprep.subr.bf16.mxu0 0
        %1622 = vmatpush1.bf16.msra.mxu0 0
        %1623 = vmatprep.subr.bf16.mxu0 0
        %1624 = vmatpush1.bf16.msra.mxu0 0
        %1625 = vmatprep.subr.bf16.mxu0 0
        %1626 = vmatpush1.bf16.msra.mxu0 0
        %1627 = vmatprep.subr.bf16.mxu0 0
        %1628 = vmatpush1.bf16.msra.mxu0 0
        %1629 = vmatprep.subr.bf16.mxu0 0
        %1630 = vmatpush1.bf16.msra.mxu0 0
        %1631 = vmatprep.mubr.bf16.mxu0 0
        %1632 = vmatmul.mubr.bf16.gmra.mrb[0].mxu0 %v1597
        %v1633 = vpop.f32.mrb[0].mxu0
        %v1634 = vadd.f32 %v1582, %v1633
        %v1635 = vpop.f32.mrb[0].mxu0
        %v1636 = vpop.f32.mrb[0].mxu0
        %v1637 = vpop.f32.mrb[0].mxu0
        %1638 = vdwg.mxu0
        %v1639 = vadd.f32 %v437, %v1634
        %v1640 = vld [vmem:[%s7] sm:$0x1]
        %v1641 = vld [vmem:[%s8] sm:$0x1]
        %v1642 = vsel %vm440, %v1639, 0.0
        %1643 = vadd.xlane.f32.xlu0 %v1642
        %v1644 = vpop.xlane.xlu0 %1643
        %v1645 = vmul.f32 %v1644, %v444
        %v1646 = vsub.f32 %v1639, %v1645
        %v1647 = vmul.f32 %v1646, %v1646
        %v1648 = vsel %vm440, %v1647, 0.0
        %1649 = vadd.xlane.f32.xlu0 %v1648
        %v1650 = vpop.xlane.xlu0 %1649
        %v1651 = vmul.f32 %v1650, %v444
        %v1652 = vadd.f32 %v1651, 1e-05
        %v1653 = vrsqrt.pop %v1652
        %v1654 = vmul.f32 %v1646, %v1653
        %v1656 = vlaneseq
        %v1657 = vshrl.u32 %v1656, 7
        %v1658 = vsub.s32 0, %v1657
        %v1659 = vrot.slane %v1640, %v1658
        %v1661 = vmul.f32 %v1654, %v1659
        %v1663 = vlaneseq
        %v1664 = vshrl.u32 %v1663, 7
        %v1665 = vsub.s32 0, %v1664
        %v1666 = vrot.slane %v1641, %v1665
        %v1668 = vadd.f32 %v1661, %v1666
        %v1669 = vpack.c.bf16 %v1668, %v1668
        %v1670 = vld [vmem:[%s9] sm:$0xf]
        %v1671 = vld [vmem:[%s9 + $0x4] sm:$0xf]
        %v1672 = vld [vmem:[%s9 + $0x8] sm:$0xf]
        %v1673 = vld [vmem:[%s9 + $0xc] sm:$0xf]
        %v1674 = vld [vmem:[%s10] sm:$0x1]
        %v1676 = vlaneseq
        %v1677 = vshrl.u32 %v1676, 7
        %v1678 = vsub.s32 0, %v1677
        %v1679 = vrot.slane %v1674, %v1678
        %v1685 = vunpack.c.l.b16 %v1670
        %v1686 = vunpack.c.l.b16 %v1671
        %v1687 = vunpack.c.l.b16 %v1672
        %v1688 = vunpack.c.l.b16 %v1673
        %v1689 = vpack.c.b16 %v1686, %v1685
        %v1690 = vpack.c.b16 %v1688, %v1687
        %v1694 = vsel %vm440, %v1669, 0
        %1696 = vmatprep.subr.bf16.mxu0 0
        %1697 = vmatpush1.bf16.msra.mxu0 %v1689
        %1698 = vmatprep.subr.bf16.mxu0 0
        %1699 = vmatpush1.bf16.msra.mxu0 %v1690
        %1700 = vmatprep.subr.bf16.mxu0 0
        %1701 = vmatpush1.bf16.msra.mxu0 0
        %1702 = vmatprep.subr.bf16.mxu0 0
        %1703 = vmatpush1.bf16.msra.mxu0 0
        %1704 = vmatprep.subr.bf16.mxu0 0
        %1705 = vmatpush1.bf16.msra.mxu0 0
        %1706 = vmatprep.subr.bf16.mxu0 0
        %1707 = vmatpush1.bf16.msra.mxu0 0
        %1708 = vmatprep.subr.bf16.mxu0 0
        %1709 = vmatpush1.bf16.msra.mxu0 0
        %1710 = vmatprep.subr.bf16.mxu0 0
        %1711 = vmatpush1.bf16.msra.mxu0 0
        %1712 = vmatprep.subr.bf16.mxu0 0
        %1713 = vmatpush1.bf16.msra.mxu0 0
        %1714 = vmatprep.subr.bf16.mxu0 0
        %1715 = vmatpush1.bf16.msra.mxu0 0
        %1716 = vmatprep.subr.bf16.mxu0 0
        %1717 = vmatpush1.bf16.msra.mxu0 0
        %1718 = vmatprep.subr.bf16.mxu0 0
        %1719 = vmatpush1.bf16.msra.mxu0 0
        %1720 = vmatprep.subr.bf16.mxu0 0
        %1721 = vmatpush1.bf16.msra.mxu0 0
        %1722 = vmatprep.subr.bf16.mxu0 0
        %1723 = vmatpush1.bf16.msra.mxu0 0
        %1724 = vmatprep.subr.bf16.mxu0 0
        %1725 = vmatpush1.bf16.msra.mxu0 0
        %1726 = vmatprep.subr.bf16.mxu0 0
        %1727 = vmatpush1.bf16.msra.mxu0 0
        %1728 = vmatprep.mubr.bf16.mxu0 0
        %1729 = vmatmul.mubr.bf16.gmra.mrb[0].mxu0 %v1694
        %v1730 = vpop.f32.mrb[0].mxu0
        %v1731 = vadd.f32 %v1679, %v1730
        %v1732 = vpop.f32.mrb[0].mxu0
        %v1733 = vpop.f32.mrb[0].mxu0
        %v1734 = vpop.f32.mrb[0].mxu0
        %1735 = vdwg.mxu0
        %v1736 = vmul.f32 %v1731, 0.5
        %v1737 = vmul.f32 %v1731, %v1731
        %v1738 = vmul.f32 %v1731, %v1737
        %v1739 = vmul.f32 %v1738, 0.044715
        %v1740 = vadd.f32 %v1731, %v1739
        %v1741 = vmul.f32 %v1740, 0.7978845
        %v1742 = vtanh.pop %v1741
        %v1743 = vadd.f32 %v1742, 1.0
        %v1744 = vmul.f32 %v1736, %v1743
        %v1745 = vpack.c.bf16 %v1744, %v1744
        %v1746 = vld [vmem:[%s11] sm:$0xf]
        %v1747 = vld [vmem:[%s11 + $0x4] sm:$0xf]
        %v1748 = vld [vmem:[%s11 + $0x8] sm:$0xf]
        %v1749 = vld [vmem:[%s11 + $0xc] sm:$0xf]
        %v1750 = vld [vmem:[%s11 + $0x10] sm:$0xf]
        %v1751 = vld [vmem:[%s11 + $0x14] sm:$0xf]
        %v1752 = vld [vmem:[%s11 + $0x18] sm:$0xf]
        %v1753 = vld [vmem:[%s11 + $0x1c] sm:$0xf]
        %v1754 = vld [vmem:[%s11 + $0x20] sm:$0xf]
        %v1755 = vld [vmem:[%s11 + $0x24] sm:$0xf]
        %v1756 = vld [vmem:[%s11 + $0x28] sm:$0xf]
        %v1757 = vld [vmem:[%s11 + $0x2c] sm:$0xf]
        %v1758 = vld [vmem:[%s11 + $0x30] sm:$0xf]
        %v1759 = vld [vmem:[%s11 + $0x34] sm:$0xf]
        %v1760 = vld [vmem:[%s11 + $0x38] sm:$0xf]
        %v1761 = vld [vmem:[%s11 + $0x3c] sm:$0xf]
        %v1762 = vld [vmem:[%s12] sm:$0x1]
        %v1764 = vlaneseq
        %v1765 = vshrl.u32 %v1764, 7
        %v1766 = vsub.s32 0, %v1765
        %v1767 = vrot.slane %v1762, %v1766
        %v1785 = vunpack.c.l.b16 %v1746
        %v1786 = vunpack.c.l.b16 %v1747
        %v1787 = vunpack.c.l.b16 %v1748
        %v1788 = vunpack.c.l.b16 %v1749
        %v1789 = vunpack.c.l.b16 %v1750
        %v1790 = vunpack.c.l.b16 %v1751
        %v1791 = vunpack.c.l.b16 %v1752
        %v1792 = vunpack.c.l.b16 %v1753
        %v1793 = vunpack.c.l.b16 %v1754
        %v1794 = vunpack.c.l.b16 %v1755
        %v1795 = vunpack.c.l.b16 %v1756
        %v1796 = vunpack.c.l.b16 %v1757
        %v1797 = vunpack.c.l.b16 %v1758
        %v1798 = vunpack.c.l.b16 %v1759
        %v1799 = vunpack.c.l.b16 %v1760
        %v1800 = vunpack.c.l.b16 %v1761
        %v1801 = vpack.c.b16 %v1786, %v1785
        %v1802 = vpack.c.b16 %v1788, %v1787
        %v1803 = vpack.c.b16 %v1790, %v1789
        %v1804 = vpack.c.b16 %v1792, %v1791
        %v1805 = vpack.c.b16 %v1794, %v1793
        %v1806 = vpack.c.b16 %v1796, %v1795
        %v1807 = vpack.c.b16 %v1798, %v1797
        %v1808 = vpack.c.b16 %v1800, %v1799
        %1817 = vmatprep.subr.bf16.mxu0 0
        %1818 = vmatpush1.bf16.msra.mxu0 %v1801
        %1819 = vmatprep.subr.bf16.mxu0 0
        %1820 = vmatpush1.bf16.msra.mxu0 %v1802
        %1821 = vmatprep.subr.bf16.mxu0 0
        %1822 = vmatpush1.bf16.msra.mxu0 %v1803
        %1823 = vmatprep.subr.bf16.mxu0 0
        %1824 = vmatpush1.bf16.msra.mxu0 %v1804
        %1825 = vmatprep.subr.bf16.mxu0 0
        %1826 = vmatpush1.bf16.msra.mxu0 %v1805
        %1827 = vmatprep.subr.bf16.mxu0 0
        %1828 = vmatpush1.bf16.msra.mxu0 %v1806
        %1829 = vmatprep.subr.bf16.mxu0 0
        %1830 = vmatpush1.bf16.msra.mxu0 %v1807
        %1831 = vmatprep.subr.bf16.mxu0 0
        %1832 = vmatpush1.bf16.msra.mxu0 %v1808
        %1833 = vmatprep.subr.bf16.mxu0 0
        %1834 = vmatpush1.bf16.msra.mxu0 0
        %1835 = vmatprep.subr.bf16.mxu0 0
        %1836 = vmatpush1.bf16.msra.mxu0 0
        %1837 = vmatprep.subr.bf16.mxu0 0
        %1838 = vmatpush1.bf16.msra.mxu0 0
        %1839 = vmatprep.subr.bf16.mxu0 0
        %1840 = vmatpush1.bf16.msra.mxu0 0
        %1841 = vmatprep.subr.bf16.mxu0 0
        %1842 = vmatpush1.bf16.msra.mxu0 0
        %1843 = vmatprep.subr.bf16.mxu0 0
        %1844 = vmatpush1.bf16.msra.mxu0 0
        %1845 = vmatprep.subr.bf16.mxu0 0
        %1846 = vmatpush1.bf16.msra.mxu0 0
        %1847 = vmatprep.subr.bf16.mxu0 0
        %1848 = vmatpush1.bf16.msra.mxu0 0
        %1849 = vmatprep.mubr.bf16.mxu0 0
        %1850 = vmatmul.mubr.bf16.gmra.mrb[0].mxu0 %v1745
        %v1851 = vpop.f32.mrb[0].mxu0
        %v1852 = vadd.f32 %v1767, %v1851
        %v1853 = vpop.f32.mrb[0].mxu0
        %v1854 = vpop.f32.mrb[0].mxu0
        %v1855 = vpop.f32.mrb[0].mxu0
        %1856 = vdwg.mxu0
        %v1857 = vadd.f32 %v1639, %v1852
        %1858 = vst.msk [vmem:[%s431] sm:$0xff] %vm440, %v1857
        %s1859 = sand.u32 %s313, 1
        %s1860 = scalar_lea.sflag [#allocation3], %s1859
        %s1861 = sand.u32 %s313, 1
        %s1862 = smul.addr %s1861, 8
        %s1863 = scalar_lea.vmem [#allocation2], %s1862
        // Predicated region
        $region73: #{tpu_custom_call.1} parent=71 // pred_check
          %p1864 = pneg %p323
        $region74: #{tpu_custom_call.1} parent=71 // pred_check_branch
          %1866 = sbr.rel (%p1864) target = $region76
        $region75: #{tpu_custom_call.1} parent=71 // pred_region
          %s1868 = ssub.s32 128, 128
          %1869 = vsyncadd %s1860, %s1868
          %s1870 = smul.addr %s27, 128
          %s1871 = scalar_lea.hbm %s13, %s1870
          %s1873 = sshll.u32 %s1863, 4
          %s1874 = int_to_ptr.vmem [resolvable:$true] %s1873
          %1876 = dma.vmem_to_hbm [thread:$0]  %s1874, 128, %s1871, %s1860
        $region76: #{tpu_custom_call.1} parent=71 // pred_fallthru
          _
      $region72: #{tpu_custom_call.1} parent=5 // pred_fallthru
        _
      %p1877 = scmp.le.s32.totalorder 2, %s22
      // Predicated region
      $region77: #{tpu_custom_call.1} parent=5 // pred_check
        %p1878 = pneg %p1877
      $region78: #{tpu_custom_call.1} parent=5 // pred_check_branch
        %1880 = sbr.rel (%p1878) target = $region80
      $region79: #{tpu_custom_call.1} parent=5 // pred_region
        %s1881 = ssub.s32 %s22, 2
        // Predicated region
        $region81: #{tpu_custom_call.1} parent=79 // pred_check
          %p1882 = pneg %p329
        $region82: #{tpu_custom_call.1} parent=79 // pred_check_branch
          %1884 = sbr.rel (%p1882) target = $region84
        $region83: #{tpu_custom_call.1} parent=79 // pred_region
          %s1885 = sand.u32 %s314, 1
          %s1886 = scalar_lea.sflag [#allocation3], %s1885
          %s1887 = sand.u32 %s314, 1
          %s1888 = smul.addr %s1887, 8
          %s1889 = scalar_lea.vmem [#allocation2], %s1888
          %1890 = dma.done %s1886, 128
        $region84: #{tpu_custom_call.1} parent=79 // pred_fallthru
          _
      $region80: #{tpu_custom_call.1} parent=5 // pred_fallthru
        _
    $region6: #{tpu_custom_call.1} parent=1 // loop_footer
      %s26 = sadd.s32 1, %s22
    $region7: #{tpu_custom_call.1} parent=1 // loop_footer_branch
      %21 = sbr.rel target = $region3
    $region8: #{tpu_custom_call.1} parent=1 // loop_exit
      _
    %1891 = vsyncpa [#allocation3], 1
    %s1892 = scalar_lea.sflag [#allocation3], 1
    %1893 = vsyncpa %s1892, 1

</llo_original>
